<compile_context>
chip_gen: v7x
topology: tpu7x:2x2x1
jax: 0.10.0
libtpu: 0.0.40
codegen_flags: <defaults>
</compile_context>

<pallas_src>
import jax
import jax.numpy as jnp
from jax.experimental import pallas as pl
from jax.experimental.pallas import tpu as pltpu


def _round_up(x, m):
    return (x + m - 1) // m * m


# ----------------------------------------------------------------------------
# Pallas kernel:  Y^T = [relu]( W_eff @ X^T + shift )
#   w_ref     : (Cout, K)   bf16, VMEM-resident across the whole grid
#   x_ref     : (K, TM)     bf16, one lane-dense tile of the im2col matrix
#   shift_ref : (Cout, 1)   f32  (conv bias + BN fold, or FC bias)
#   o_ref     : (Cout, TM)  lane-dense (TM multiple of 128) -> unmasked stores
# ----------------------------------------------------------------------------
def _make_gemm_t_kernel(apply_relu):
    def kernel(w_ref, x_ref, shift_ref, o_ref):
        acc = jnp.dot(w_ref[...], x_ref[...], preferred_element_type=jnp.float32)
        y = acc + shift_ref[...]
        if apply_relu:
            y = jnp.maximum(y, 0.0)
        o_ref[...] = y.astype(o_ref.dtype)

    return kernel


def fused_gemm_t(w, x_t, shift, *, apply_relu, out_dtype=jnp.float32, tm=512):
    """Y^T = [relu](w @ x_t + shift).

    w: (Cout, K) bf16, x_t: (K, M) bf16, shift: (Cout, 1) f32 -> (Cout, M).
    Tiled over M (the lane axis); M is zero-padded to a multiple of the tile.
    """
    cout, K = w.shape
    K2, M = x_t.shape
    assert K == K2
    TM = min(tm, _round_up(M, 128))
    Mp = _round_up(M, TM)
    if Mp != M:
        x_t = jnp.pad(x_t, ((0, 0), (0, Mp - M)))
    out = pl.pallas_call(
        _make_gemm_t_kernel(apply_relu),
        out_shape=jax.ShapeDtypeStruct((cout, Mp), out_dtype),
        grid=(Mp // TM,),
        in_specs=[
            pl.BlockSpec((cout, K), lambda i: (0, 0)),  # weights: resident
            pl.BlockSpec((K, TM), lambda i: (0, i)),    # activations: tiled over M
            pl.BlockSpec((cout, 1), lambda i: (0, 0)),  # shift: resident
        ],
        out_specs=pl.BlockSpec((cout, TM), lambda i: (0, i)),
        compiler_params=pltpu.CompilerParams(
            dimension_semantics=("parallel",),  # shards M tiles across TCs on v7x
        ),
    )(w, x_t, shift)
    return out[:, :M] if Mp != M else out


# ----------------------------------------------------------------------------
# Conv (3x3, pad=1) + BN + ReLU via transposed im2col + fused Pallas GEMM
# Activation layout: CNHW (channels, batch, H, W).
# ----------------------------------------------------------------------------
def _im2col_t_3x3_p1(x_cnhw, stride):
    """(C, N, H, W) -> (9*C, N*Ho*Wo), tap-major / channel-minor rows."""
    C, N, H, W = x_cnhw.shape
    xp = jnp.pad(x_cnhw, ((0, 0), (0, 0), (1, 1), (1, 1)))
    Ho = (H + 2 - 3) // stride + 1
    Wo = (W + 2 - 3) // stride + 1
    taps = []
    for dh in range(3):
        for dw in range(3):
            taps.append(
                xp[:, :, dh : dh + stride * Ho : stride, dw : dw + stride * Wo : stride]
            )
    cols = jnp.stack(taps, axis=0)  # (9, C, N, Ho, Wo)
    return cols.reshape(9 * C, N * Ho * Wo), (N, Ho, Wo)


def conv_bn_relu_t(x_cnhw, layer_prep, stride):
    w_eff, shift = layer_prep  # (Cout, 9*Cin) bf16 (BN scale folded), (Cout, 1) f32
    cout = w_eff.shape[0]
    cols_t, (N, Ho, Wo) = _im2col_t_3x3_p1(x_cnhw, stride)
    y_t = fused_gemm_t(w_eff, cols_t, shift, apply_relu=True, out_dtype=jnp.bfloat16)
    return y_t.reshape(cout, N, Ho, Wo)


# ----------------------------------------------------------------------------
# One-time parameter preparation (outside the traced forward)
# ----------------------------------------------------------------------------
def prepare_params(params):
    prep = {}
    for name in ("layer1", "layer2", "layer3", "layer4"):
        w, b, gamma, beta, mean, var = params[name]
        cout, cin = w.shape[0], w.shape[1]
        inv_std = gamma / jnp.sqrt(var + 1e-5)
        # (Cout, Cin, 3, 3) -> (Cout, dh, dw, Cin) -> (Cout, 9*Cin): matches the
        # tap-major / channel-minor im2col rows.  Fold the BN scale in.
        w_eff = (
            jnp.transpose(w, (0, 2, 3, 1)).reshape(cout, 9 * cin) * inv_std[:, None]
        ).astype(jnp.bfloat16)
        shift = ((b - mean) * inv_std + beta).astype(jnp.float32).reshape(cout, 1)
        prep[name] = (w_eff, shift)
    w_fc, b_fc = params["fc"]  # torch layout: (10, 32*7*7), (10,)
    prep["fc"] = (w_fc.astype(jnp.bfloat16), b_fc.astype(jnp.float32).reshape(-1, 1))
    return prep


# ----------------------------------------------------------------------------
# Deterministic parameter init (shapes match the torch module __init__)
# ----------------------------------------------------------------------------
def _init_conv_block(key, cin, cout):
    k1, k2, k3, k4 = jax.random.split(key, 4)
    bound = 1.0 / float(jnp.sqrt(jnp.float32(cin * 9)))
    w = jax.random.uniform(k1, (cout, cin, 3, 3), jnp.float32, -bound, bound)
    b = jax.random.uniform(k2, (cout,), jnp.float32, -bound, bound)
    gamma = 1.0 + 0.1 * jax.random.normal(k3, (cout,), jnp.float32)
    beta = 0.1 * jax.random.normal(k4, (cout,), jnp.float32)
    running_mean = jnp.zeros((cout,), jnp.float32)
    running_var = jnp.ones((cout,), jnp.float32)
    return (w, b, gamma, beta, running_mean, running_var)


def init_params(key):
    k1, k2, k3, k4, k5, k6 = jax.random.split(key, 6)
    fc_in = 32 * 7 * 7
    bound = 1.0 / float(jnp.sqrt(jnp.float32(fc_in)))
    return {
        "layer1": _init_conv_block(k1, 1, 16),
        "layer2": _init_conv_block(k2, 16, 32),
        "layer3": _init_conv_block(k3, 32, 64),
        "layer4": _init_conv_block(k4, 64, 32),
        "fc": (
            jax.random.uniform(k5, (10, fc_in), jnp.float32, -bound, bound),
            jax.random.uniform(k6, (10,), jnp.float32, -bound, bound),
        ),
    }


# ----------------------------------------------------------------------------
# Full forward pass (Pallas path)
# ----------------------------------------------------------------------------
def convolution_network(x_nchw, prep):
    # NCHW -> CNHW transposed-activation layout; bf16 activations throughout.
    x = jnp.transpose(x_nchw, (1, 0, 2, 3)).astype(jnp.bfloat16)
    x = conv_bn_relu_t(x, prep["layer1"], stride=1)  # (16, N, 28, 28)
    x = conv_bn_relu_t(x, prep["layer2"], stride=2)  # (32, N, 14, 14)
    x = conv_bn_relu_t(x, prep["layer3"], stride=1)  # (64, N, 14, 14)
    x = conv_bn_relu_t(x, prep["layer4"], stride=2)  # (32, N, 7, 7)
    # FC input^T with torch NCHW-flatten row order (c*49 + h*7 + w).
    C, N, H, W = x.shape
    x_t = jnp.transpose(x, (0, 2, 3, 1)).reshape(C * H * W, N)  # (1568, N)
    w_fc, b_fc = prep["fc"]
    logits_t = fused_gemm_t(w_fc, x_t, b_fc, apply_relu=False, out_dtype=jnp.float32)
    return logits_t.T  # (N, 10)


# ----------------------------------------------------------------------------
# Pure-JAX f32 reference (torch semantics) for a loose sanity check
# ----------------------------------------------------------------------------
def _reference_forward(x_nchw, params):
    def block(x, p, stride):
        w, b, gamma, beta, mean, var = p
        y = jax.lax.conv_general_dilated(
            x, w, window_strides=(stride, stride), padding=((1, 1), (1, 1)),
            dimension_numbers=("NCHW", "OIHW", "NCHW"))
        y = y + b[None, :, None, None]
        y = (y - mean[None, :, None, None]) / jnp.sqrt(var[None, :, None, None] + 1e-5)
        y = gamma[None, :, None, None] * y + beta[None, :, None, None]
        return jnp.maximum(y, 0.0)

    x = block(x_nchw, params["layer1"], 1)
    x = block(x, params["layer2"], 2)
    x = block(x, params["layer3"], 1)
    x = block(x, params["layer4"], 2)
    x = x.reshape(x.shape[0], -1)
    w_fc, b_fc = params["fc"]
    return x @ w_fc.T + b_fc


if __name__ == "__main__":
    key = jax.random.PRNGKey(0)
    k_param, k_x = jax.random.split(key)
    params = init_params(k_param)
    prep = prepare_params(params)  # one-time weight prep, outside the jitted forward
    # MNIST-shaped input (the 32*7*7 FC requires 28x28 spatial); small batch=2.
    x = jax.random.normal(k_x, (2, 1, 28, 28), jnp.float32)

    out = jax.block_until_ready(jax.jit(convolution_network)(x, prep))
    assert out.shape == (2, 10) and out.dtype == jnp.float32
    assert bool(jnp.all(jnp.isfinite(out)))

    # Loose tolerance: bf16 operands vs f32 reference (~1e-2 expected drift).
    ref = jax.block_until_ready(jax.jit(_reference_forward)(x, params))
    max_err = float(jnp.max(jnp.abs(out - ref)))
    assert max_err < 0.25, f"max abs diff vs f32 reference too large: {max_err}"

    print("KERNEL_OK")
</pallas_src>

<mosaic_0001>
module attributes {stable_mosaic.version = 11 : i64} {
  func.func @kernel(%arg0: i32, %arg1: memref<16x9xbf16, #tpu.memory_space<vmem>>, %arg2: memref<9x512xbf16, #tpu.memory_space<vmem>>, %arg3: memref<16x1xf32, #tpu.memory_space<vmem>>, %arg4: memref<16x512xbf16, #tpu.memory_space<vmem>>) attributes {dimension_semantics = [#tpu.dimension_semantics<parallel>], iteration_bounds = array<i64: 4>, scalar_prefetch = 0 : i64, scratch_operands = 0 : i64, tpu.core_type = #tpu.core_type<tc>, window_params = [{pipeline_mode = #tpu.pipeline_mode<synchronous>, transform_indices = @transform_0, window_bounds = array<i64: 16, 9>}, {transform_indices = @transform_1, window_bounds = array<i64: 9, 512>}, {pipeline_mode = #tpu.pipeline_mode<synchronous>, transform_indices = @transform_2, window_bounds = array<i64: 16, 1>}, {transform_indices = @transform_3, window_bounds = array<i64: 16, 512>}]} {
    %c0 = arith.constant 0 : index
    %c0_0 = arith.constant 0 : index
    %0 = vector.load %arg1[%c0, %c0_0] : memref<16x9xbf16, #tpu.memory_space<vmem>>, vector<16x9xbf16>
    %c0_1 = arith.constant 0 : index
    %c0_2 = arith.constant 0 : index
    %1 = vector.load %arg2[%c0_1, %c0_2] : memref<9x512xbf16, #tpu.memory_space<vmem>>, vector<9x512xbf16>
    %cst = arith.constant dense<0.000000e+00> : vector<16x512xf32>
    %2 = tpu.matmul %0, %1, %cst {dimension_numbers = #tpu.dot_dimension_numbers<[1], [0], [0], [1], [0, 0, 1, 1], [], []>} : vector<16x9xbf16>, vector<9x512xbf16>, vector<16x512xf32> -> vector<16x512xf32>
    %c0_3 = arith.constant 0 : index
    %c0_4 = arith.constant 0 : index
    %3 = vector.load %arg3[%c0_3, %c0_4] : memref<16x1xf32, #tpu.memory_space<vmem>>, vector<16x1xf32>
    %4 = vector.broadcast %3 : vector<16x1xf32> to vector<16x512xf32>
    %5 = arith.addf %2, %4 : vector<16x512xf32>
    %cst_5 = arith.constant 0.000000e+00 : f32
    %6 = vector.broadcast %cst_5 : f32 to vector<16x512xf32>
    %7 = arith.maximumf %5, %6 : vector<16x512xf32>
    %8 = arith.truncf %7 : vector<16x512xf32> to vector<16x512xbf16>
    %c0_6 = arith.constant 0 : index
    %c0_7 = arith.constant 0 : index
    %9 = vector.load %arg4[%c0_6, %c0_7] : memref<16x512xbf16, #tpu.memory_space<vmem>>, vector<16x512xbf16>
    tpu.vector_store %arg4[%c0_6, %c0_7], %8 {strides = array<i32>} : memref<16x512xbf16, #tpu.memory_space<vmem>>, vector<16x512xbf16>,
    return
  }
  func.func @transform_0(%arg0: i32) -> (i32, i32) {
    %c0_i32 = arith.constant 0 : i32
    %c0_i32_0 = arith.constant 0 : i32
    %c0_i32_1 = arith.constant 0 : i32
    return %c0_i32, %c0_i32_0 : i32, i32
  }
  func.func @transform_1(%arg0: i32) -> (i32, i32) {
    %c0_i32 = arith.constant 0 : i32
    %c0_i32_0 = arith.constant 0 : i32
    return %c0_i32, %arg0 : i32, i32
  }
  func.func @transform_2(%arg0: i32) -> (i32, i32) {
    %c0_i32 = arith.constant 0 : i32
    %c0_i32_0 = arith.constant 0 : i32
    %c0_i32_1 = arith.constant 0 : i32
    return %c0_i32, %c0_i32_0 : i32, i32
  }
  func.func @transform_3(%arg0: i32) -> (i32, i32) {
    %c0_i32 = arith.constant 0 : i32
    %c0_i32_0 = arith.constant 0 : i32
    return %c0_i32, %arg0 : i32, i32
  }
}

module attributes {stable_mosaic.version = 11 : i64} {
  func.func @kernel(%arg0: i32, %arg1: memref<32x144xbf16, #tpu.memory_space<vmem>>, %arg2: memref<144x512xbf16, #tpu.memory_space<vmem>>, %arg3: memref<32x1xf32, #tpu.memory_space<vmem>>, %arg4: memref<32x512xbf16, #tpu.memory_space<vmem>>) attributes {dimension_semantics = [#tpu.dimension_semantics<parallel>], iteration_bounds = array<i64: 1>, scalar_prefetch = 0 : i64, scratch_operands = 0 : i64, tpu.core_type = #tpu.core_type<tc>, window_params = [{pipeline_mode = #tpu.pipeline_mode<synchronous>, transform_indices = @transform_0, window_bounds = array<i64: 32, 144>}, {transform_indices = @transform_1, window_bounds = array<i64: 144, 512>}, {pipeline_mode = #tpu.pipeline_mode<synchronous>, transform_indices = @transform_2, window_bounds = array<i64: 32, 1>}, {transform_indices = @transform_3, window_bounds = array<i64: 32, 512>}]} {
    %c0 = arith.constant 0 : index
    %c0_0 = arith.constant 0 : index
    %0 = vector.load %arg1[%c0, %c0_0] : memref<32x144xbf16, #tpu.memory_space<vmem>>, vector<32x144xbf16>
    %c0_1 = arith.constant 0 : index
    %c0_2 = arith.constant 0 : index
    %1 = vector.load %arg2[%c0_1, %c0_2] : memref<144x512xbf16, #tpu.memory_space<vmem>>, vector<144x512xbf16>
    %cst = arith.constant dense<0.000000e+00> : vector<32x512xf32>
    %2 = tpu.matmul %0, %1, %cst {dimension_numbers = #tpu.dot_dimension_numbers<[1], [0], [0], [1], [0, 0, 1, 1], [], []>} : vector<32x144xbf16>, vector<144x512xbf16>, vector<32x512xf32> -> vector<32x512xf32>
    %c0_3 = arith.constant 0 : index
    %c0_4 = arith.constant 0 : index
    %3 = vector.load %arg3[%c0_3, %c0_4] : memref<32x1xf32, #tpu.memory_space<vmem>>, vector<32x1xf32>
    %4 = vector.broadcast %3 : vector<32x1xf32> to vector<32x512xf32>
    %5 = arith.addf %2, %4 : vector<32x512xf32>
    %cst_5 = arith.constant 0.000000e+00 : f32
    %6 = vector.broadcast %cst_5 : f32 to vector<32x512xf32>
    %7 = arith.maximumf %5, %6 : vector<32x512xf32>
    %8 = arith.truncf %7 : vector<32x512xf32> to vector<32x512xbf16>
    %c0_6 = arith.constant 0 : index
    %c0_7 = arith.constant 0 : index
    %9 = vector.load %arg4[%c0_6, %c0_7] : memref<32x512xbf16, #tpu.memory_space<vmem>>, vector<32x512xbf16>
    tpu.vector_store %arg4[%c0_6, %c0_7], %8 {strides = array<i32>} : memref<32x512xbf16, #tpu.memory_space<vmem>>, vector<32x512xbf16>,
    return
  }
  func.func @transform_0(%arg0: i32) -> (i32, i32) {
    %c0_i32 = arith.constant 0 : i32
    %c0_i32_0 = arith.constant 0 : i32
    %c0_i32_1 = arith.constant 0 : i32
    return %c0_i32, %c0_i32_0 : i32, i32
  }
  func.func @transform_1(%arg0: i32) -> (i32, i32) {
    %c0_i32 = arith.constant 0 : i32
    %c0_i32_0 = arith.constant 0 : i32
    return %c0_i32, %arg0 : i32, i32
  }
  func.func @transform_2(%arg0: i32) -> (i32, i32) {
    %c0_i32 = arith.constant 0 : i32
    %c0_i32_0 = arith.constant 0 : i32
    %c0_i32_1 = arith.constant 0 : i32
    return %c0_i32, %c0_i32_0 : i32, i32
  }
  func.func @transform_3(%arg0: i32) -> (i32, i32) {
    %c0_i32 = arith.constant 0 : i32
    %c0_i32_0 = arith.constant 0 : i32
    return %c0_i32, %arg0 : i32, i32
  }
}

module attributes {stable_mosaic.version = 11 : i64} {
  func.func @kernel(%arg0: i32, %arg1: memref<64x288xbf16, #tpu.memory_space<vmem>>, %arg2: memref<288x512xbf16, #tpu.memory_space<vmem>>, %arg3: memref<64x1xf32, #tpu.memory_space<vmem>>, %arg4: memref<64x512xbf16, #tpu.memory_space<vmem>>) attributes {dimension_semantics = [#tpu.dimension_semantics<parallel>], iteration_bounds = array<i64: 1>, scalar_prefetch = 0 : i64, scratch_operands = 0 : i64, tpu.core_type = #tpu.core_type<tc>, window_params = [{pipeline_mode = #tpu.pipeline_mode<synchronous>, transform_indices = @transform_0, window_bounds = array<i64: 64, 288>}, {transform_indices = @transform_1, window_bounds = array<i64: 288, 512>}, {pipeline_mode = #tpu.pipeline_mode<synchronous>, transform_indices = @transform_2, window_bounds = array<i64: 64, 1>}, {transform_indices = @transform_3, window_bounds = array<i64: 64, 512>}]} {
    %c0 = arith.constant 0 : index
    %c0_0 = arith.constant 0 : index
    %0 = vector.load %arg1[%c0, %c0_0] : memref<64x288xbf16, #tpu.memory_space<vmem>>, vector<64x288xbf16>
    %c0_1 = arith.constant 0 : index
    %c0_2 = arith.constant 0 : index
    %1 = vector.load %arg2[%c0_1, %c0_2] : memref<288x512xbf16, #tpu.memory_space<vmem>>, vector<288x512xbf16>
    %cst = arith.constant dense<0.000000e+00> : vector<64x512xf32>
    %2 = tpu.matmul %0, %1, %cst {dimension_numbers = #tpu.dot_dimension_numbers<[1], [0], [0], [1], [0, 0, 1, 1], [], []>} : vector<64x288xbf16>, vector<288x512xbf16>, vector<64x512xf32> -> vector<64x512xf32>
    %c0_3 = arith.constant 0 : index
    %c0_4 = arith.constant 0 : index
    %3 = vector.load %arg3[%c0_3, %c0_4] : memref<64x1xf32, #tpu.memory_space<vmem>>, vector<64x1xf32>
    %4 = vector.broadcast %3 : vector<64x1xf32> to vector<64x512xf32>
    %5 = arith.addf %2, %4 : vector<64x512xf32>
    %cst_5 = arith.constant 0.000000e+00 : f32
    %6 = vector.broadcast %cst_5 : f32 to vector<64x512xf32>
    %7 = arith.maximumf %5, %6 : vector<64x512xf32>
    %8 = arith.truncf %7 : vector<64x512xf32> to vector<64x512xbf16>
    %c0_6 = arith.constant 0 : index
    %c0_7 = arith.constant 0 : index
    %9 = vector.load %arg4[%c0_6, %c0_7] : memref<64x512xbf16, #tpu.memory_space<vmem>>, vector<64x512xbf16>
    tpu.vector_store %arg4[%c0_6, %c0_7], %8 {strides = array<i32>} : memref<64x512xbf16, #tpu.memory_space<vmem>>, vector<64x512xbf16>,
    return
  }
  func.func @transform_0(%arg0: i32) -> (i32, i32) {
    %c0_i32 = arith.constant 0 : i32
    %c0_i32_0 = arith.constant 0 : i32
    %c0_i32_1 = arith.constant 0 : i32
    return %c0_i32, %c0_i32_0 : i32, i32
  }
  func.func @transform_1(%arg0: i32) -> (i32, i32) {
    %c0_i32 = arith.constant 0 : i32
    %c0_i32_0 = arith.constant 0 : i32
    return %c0_i32, %arg0 : i32, i32
  }
  func.func @transform_2(%arg0: i32) -> (i32, i32) {
    %c0_i32 = arith.constant 0 : i32
    %c0_i32_0 = arith.constant 0 : i32
    %c0_i32_1 = arith.constant 0 : i32
    return %c0_i32, %c0_i32_0 : i32, i32
  }
  func.func @transform_3(%arg0: i32) -> (i32, i32) {
    %c0_i32 = arith.constant 0 : i32
    %c0_i32_0 = arith.constant 0 : i32
    return %c0_i32, %arg0 : i32, i32
  }
}

module attributes {stable_mosaic.version = 11 : i64} {
  func.func @kernel(%arg0: i32, %arg1: memref<32x576xbf16, #tpu.memory_space<vmem>>, %arg2: memref<576x128xbf16, #tpu.memory_space<vmem>>, %arg3: memref<32x1xf32, #tpu.memory_space<vmem>>, %arg4: memref<32x128xbf16, #tpu.memory_space<vmem>>) attributes {dimension_semantics = [#tpu.dimension_semantics<parallel>], iteration_bounds = array<i64: 1>, scalar_prefetch = 0 : i64, scratch_operands = 0 : i64, tpu.core_type = #tpu.core_type<tc>, window_params = [{pipeline_mode = #tpu.pipeline_mode<synchronous>, transform_indices = @transform_0, window_bounds = array<i64: 32, 576>}, {transform_indices = @transform_1, window_bounds = array<i64: 576, 128>}, {pipeline_mode = #tpu.pipeline_mode<synchronous>, transform_indices = @transform_2, window_bounds = array<i64: 32, 1>}, {transform_indices = @transform_3, window_bounds = array<i64: 32, 128>}]} {
    %c0 = arith.constant 0 : index
    %c0_0 = arith.constant 0 : index
    %0 = vector.load %arg1[%c0, %c0_0] : memref<32x576xbf16, #tpu.memory_space<vmem>>, vector<32x576xbf16>
    %c0_1 = arith.constant 0 : index
    %c0_2 = arith.constant 0 : index
    %1 = vector.load %arg2[%c0_1, %c0_2] : memref<576x128xbf16, #tpu.memory_space<vmem>>, vector<576x128xbf16>
    %cst = arith.constant dense<0.000000e+00> : vector<32x128xf32>
    %2 = tpu.matmul %0, %1, %cst {dimension_numbers = #tpu.dot_dimension_numbers<[1], [0], [0], [1], [0, 0, 1, 1], [], []>} : vector<32x576xbf16>, vector<576x128xbf16>, vector<32x128xf32> -> vector<32x128xf32>
    %c0_3 = arith.constant 0 : index
    %c0_4 = arith.constant 0 : index
    %3 = vector.load %arg3[%c0_3, %c0_4] : memref<32x1xf32, #tpu.memory_space<vmem>>, vector<32x1xf32>
    %4 = vector.broadcast %3 : vector<32x1xf32> to vector<32x128xf32>
    %5 = arith.addf %2, %4 : vector<32x128xf32>
    %cst_5 = arith.constant 0.000000e+00 : f32
    %6 = vector.broadcast %cst_5 : f32 to vector<32x128xf32>
    %7 = arith.maximumf %5, %6 : vector<32x128xf32>
    %8 = arith.truncf %7 : vector<32x128xf32> to vector<32x128xbf16>
    %c0_6 = arith.constant 0 : index
    %c0_7 = arith.constant 0 : index
    %9 = vector.load %arg4[%c0_6, %c0_7] : memref<32x128xbf16, #tpu.memory_space<vmem>>, vector<32x128xbf16>
    tpu.vector_store %arg4[%c0_6, %c0_7], %8 {strides = array<i32>} : memref<32x128xbf16, #tpu.memory_space<vmem>>, vector<32x128xbf16>,
    return
  }
  func.func @transform_0(%arg0: i32) -> (i32, i32) {
    %c0_i32 = arith.constant 0 : i32
    %c0_i32_0 = arith.constant 0 : i32
    %c0_i32_1 = arith.constant 0 : i32
    return %c0_i32, %c0_i32_0 : i32, i32
  }
  func.func @transform_1(%arg0: i32) -> (i32, i32) {
    %c0_i32 = arith.constant 0 : i32
    %c0_i32_0 = arith.constant 0 : i32
    return %c0_i32, %arg0 : i32, i32
  }
  func.func @transform_2(%arg0: i32) -> (i32, i32) {
    %c0_i32 = arith.constant 0 : i32
    %c0_i32_0 = arith.constant 0 : i32
    %c0_i32_1 = arith.constant 0 : i32
    return %c0_i32, %c0_i32_0 : i32, i32
  }
  func.func @transform_3(%arg0: i32) -> (i32, i32) {
    %c0_i32 = arith.constant 0 : i32
    %c0_i32_0 = arith.constant 0 : i32
    return %c0_i32, %arg0 : i32, i32
  }
}

module attributes {stable_mosaic.version = 11 : i64} {
  func.func @kernel(%arg0: i32, %arg1: memref<10x1568xbf16, #tpu.memory_space<vmem>>, %arg2: memref<1568x128xbf16, #tpu.memory_space<vmem>>, %arg3: memref<10x1xf32, #tpu.memory_space<vmem>>, %arg4: memref<10x128xf32, #tpu.memory_space<vmem>>) attributes {dimension_semantics = [#tpu.dimension_semantics<parallel>], iteration_bounds = array<i64: 1>, scalar_prefetch = 0 : i64, scratch_operands = 0 : i64, tpu.core_type = #tpu.core_type<tc>, window_params = [{pipeline_mode = #tpu.pipeline_mode<synchronous>, transform_indices = @transform_0, window_bounds = array<i64: 10, 1568>}, {transform_indices = @transform_1, window_bounds = array<i64: 1568, 128>}, {pipeline_mode = #tpu.pipeline_mode<synchronous>, transform_indices = @transform_2, window_bounds = array<i64: 10, 1>}, {transform_indices = @transform_3, window_bounds = array<i64: 10, 128>}]} {
    %c0 = arith.constant 0 : index
    %c0_0 = arith.constant 0 : index
    %0 = vector.load %arg1[%c0, %c0_0] : memref<10x1568xbf16, #tpu.memory_space<vmem>>, vector<10x1568xbf16>
    %c0_1 = arith.constant 0 : index
    %c0_2 = arith.constant 0 : index
    %1 = vector.load %arg2[%c0_1, %c0_2] : memref<1568x128xbf16, #tpu.memory_space<vmem>>, vector<1568x128xbf16>
    %cst = arith.constant dense<0.000000e+00> : vector<10x128xf32>
    %2 = tpu.matmul %0, %1, %cst {dimension_numbers = #tpu.dot_dimension_numbers<[1], [0], [0], [1], [0, 0, 1, 1], [], []>} : vector<10x1568xbf16>, vector<1568x128xbf16>, vector<10x128xf32> -> vector<10x128xf32>
    %c0_3 = arith.constant 0 : index
    %c0_4 = arith.constant 0 : index
    %3 = vector.load %arg3[%c0_3, %c0_4] : memref<10x1xf32, #tpu.memory_space<vmem>>, vector<10x1xf32>
    %4 = vector.broadcast %3 : vector<10x1xf32> to vector<10x128xf32>
    %5 = arith.addf %2, %4 : vector<10x128xf32>
    %c0_5 = arith.constant 0 : index
    %c0_6 = arith.constant 0 : index
    %6 = vector.load %arg4[%c0_5, %c0_6] : memref<10x128xf32, #tpu.memory_space<vmem>>, vector<10x128xf32>
    tpu.vector_store %arg4[%c0_5, %c0_6], %5 {strides = array<i32>} : memref<10x128xf32, #tpu.memory_space<vmem>>, vector<10x128xf32>,
    return
  }
  func.func @transform_0(%arg0: i32) -> (i32, i32) {
    %c0_i32 = arith.constant 0 : i32
    %c0_i32_0 = arith.constant 0 : i32
    %c0_i32_1 = arith.constant 0 : i32
    return %c0_i32, %c0_i32_0 : i32, i32
  }
  func.func @transform_1(%arg0: i32) -> (i32, i32) {
    %c0_i32 = arith.constant 0 : i32
    %c0_i32_0 = arith.constant 0 : i32
    return %c0_i32, %arg0 : i32, i32
  }
  func.func @transform_2(%arg0: i32) -> (i32, i32) {
    %c0_i32 = arith.constant 0 : i32
    %c0_i32_0 = arith.constant 0 : i32
    %c0_i32_1 = arith.constant 0 : i32
    return %c0_i32, %c0_i32_0 : i32, i32
  }
  func.func @transform_3(%arg0: i32) -> (i32, i32) {
    %c0_i32 = arith.constant 0 : i32
    %c0_i32_0 = arith.constant 0 : i32
    return %c0_i32, %arg0 : i32, i32
  }
}

</mosaic_0001>

<llo_original>
// kernel: convolution_network.5
$region0: #{convolution_network.5}
  #allocation0 [shape = 'u32[]', space=smem, size = 0x4, offset = 0x4, fixed_abs, tag = 'smem constant byte address 0x4 - core index']
  #allocation1 [shape = 'u32[144,128]{1,0:T(1,128)}', space=vmem, size = 0x12000, scoped, tag = 'internal scratch']
  %s0 = inlined_call_operand.hbm [shape: bf16[16,9], index: 0, kind: input, shape index: {}]
  %s1 = inlined_call_operand.vmem [shape: bf16[9,2048], index: 1, kind: input, shape index: {}]
  %s2 = inlined_call_operand.vmem [shape: f32[16,1], index: 2, kind: input, shape index: {}]
  %s3 = inlined_call_operand.vmem [shape: bf16[16,2048], index: 3, kind: output, shape index: {}]
  %s4 = sld [smem:[#allocation0]]
  $region91: #{convolution_network.5} parent=0
    _
  %s6 = ssub.s32 1, %s4
  %s7 = scalar_select 0, %s6, %s4
  $region1: #{convolution_network.5} parent=0
    #allocation2 [shape = 'u8[4096]{0}', space=vmem, size = 0x1000, scoped, tag = 'input window, operand 0, single buffered']
    #allocation3 [shape = 's32[2]{0}', space=sflag, size = 0x8, scoped, tag = 'scoped memory for convolution_network.5']
    #allocation4 [shape = 'u8[32768]{0}', space=vmem, size = 0x8000, scoped, tag = 'input window, operand 1']
    #allocation5 [shape = 'u8[32768]{0}', space=vmem, size = 0x8000, scoped, tag = 'output window, operand 0']
    %8 = vsyncpa [#allocation3], 0
    loop: start=0, step=1, limit=6
    $region2: #{convolution_network.5} parent=1 // loop_pre_header
      _
    $region3: #{convolution_network.5} parent=1 // loop_header
      %s10 = sphi 0, %s14
      %p11 = scmp.ge.s32.totalorder %s10, 6
      %s18 = sphi 0, %s18
      %s20 = sphi 0, %s18
      %s21 = sphi 0, %s20
      %s35 = sphi 0, %s21
      %s41 = sphi 0, %s43
      %s44 = sphi 0, %s41
      %s45 = sphi 0, %s44
      %s61 = sphi 0, %s45
      %s65 = sphi 0, %s65
      %s67 = sphi 0, %s65
      %s68 = sphi 0, %s67
      %s82 = sphi 0, %s68
      %s88 = sphi 0, %s90
      %s91 = sphi 0, %s88
      %s92 = sphi 0, %s91
      %s108 = sphi 0, %s92
    $region4: #{convolution_network.5} parent=1 // loop_header_branch
      %13 = sbr.rel (%p11) target = $region8
    $region5: #{convolution_network.5} parent=1 // loop_body
      %s15 = ssub.s32 %s10, 1
      %s16 = ssub.s32 %s10, 2
      %s17 = sadd.s32 %s10, 1
      %s19 = sadd.s32 %s18, 1
      %p22 = scmp.eq.s32.totalorder %s10, 3
      %p23 = scmp.ne.s32.totalorder %s18, %s20
      %p24 = scmp.eq.s32.totalorder %s10, 0
      %p25 = por %p23, %p24
      %p26 = scmp.ne.s32.totalorder %s18, %s20
      %p27 = scmp.eq.s32.totalorder %s15, 3
      %p28 = por %p26, %p27
      %p29 = scmp.ne.s32.totalorder %s20, %s21
      %p30 = scmp.eq.s32.totalorder %s15, 0
      %p31 = por %p29, %p30
      %p32 = scmp.ne.s32.totalorder %s20, %s21
      %p33 = scmp.eq.s32.totalorder %s16, 3
      %p34 = por %p32, %p33
      %p36 = scmp.ne.s32.totalorder %s21, %s35
      %p37 = scmp.eq.s32.totalorder %s16, 0
      %p38 = por %p36, %p37
      %s39 = ssub.s32 %s10, %s17
      %p40 = scmp.eq.s32.totalorder %s39, 0
      %s42 = sadd.s32 %s41, 1
      %s43 = scalar_select %p40, %s41, %s42
      %p46 = pneg %p40
      %p47 = scmp.eq.s32.totalorder %s10, 3
      %p48 = por %p46, %p47
      %p49 = scmp.ne.s32.totalorder %s41, %s44
      %p50 = scmp.eq.s32.totalorder %s10, 0
      %p51 = por %p49, %p50
      %p52 = scmp.ne.s32.totalorder %s41, %s44
      %p53 = scmp.eq.s32.totalorder %s15, 3
      %p54 = por %p52, %p53
      %p55 = scmp.ne.s32.totalorder %s44, %s45
      %p56 = scmp.eq.s32.totalorder %s15, 0
      %p57 = por %p55, %p56
      %p58 = scmp.ne.s32.totalorder %s44, %s45
      %p59 = scmp.eq.s32.totalorder %s16, 3
      %p60 = por %p58, %p59
      %p62 = scmp.ne.s32.totalorder %s45, %s61
      %p63 = scmp.eq.s32.totalorder %s16, 0
      %p64 = por %p62, %p63
      %s66 = sadd.s32 %s65, 1
      %p69 = scmp.eq.s32.totalorder %s10, 3
      %p70 = scmp.ne.s32.totalorder %s65, %s67
      %p71 = scmp.eq.s32.totalorder %s10, 0
      %p72 = por %p70, %p71
      %p73 = scmp.ne.s32.totalorder %s65, %s67
      %p74 = scmp.eq.s32.totalorder %s15, 3
      %p75 = por %p73, %p74
      %p76 = scmp.ne.s32.totalorder %s67, %s68
      %p77 = scmp.eq.s32.totalorder %s15, 0
      %p78 = por %p76, %p77
      %p79 = scmp.ne.s32.totalorder %s67, %s68
      %p80 = scmp.eq.s32.totalorder %s16, 3
      %p81 = por %p79, %p80
      %p83 = scmp.ne.s32.totalorder %s68, %s82
      %p84 = scmp.eq.s32.totalorder %s16, 0
      %p85 = por %p83, %p84
      %s86 = ssub.s32 %s10, %s17
      %p87 = scmp.eq.s32.totalorder %s86, 0
      %s89 = sadd.s32 %s88, 1
      %s90 = scalar_select %p87, %s88, %s89
      %p93 = pneg %p87
      %p94 = scmp.eq.s32.totalorder %s10, 3
      %p95 = por %p93, %p94
      %p96 = scmp.ne.s32.totalorder %s88, %s91
      %p97 = scmp.eq.s32.totalorder %s10, 0
      %p98 = por %p96, %p97
      %p99 = scmp.ne.s32.totalorder %s88, %s91
      %p100 = scmp.eq.s32.totalorder %s15, 3
      %p101 = por %p99, %p100
      %p102 = scmp.ne.s32.totalorder %s91, %s92
      %p103 = scmp.eq.s32.totalorder %s15, 0
      %p104 = por %p102, %p103
      %p105 = scmp.ne.s32.totalorder %s91, %s92
      %p106 = scmp.eq.s32.totalorder %s16, 3
      %p107 = por %p105, %p106
      %p109 = scmp.ne.s32.totalorder %s92, %s108
      %p110 = scmp.eq.s32.totalorder %s16, 0
      %p111 = por %p109, %p110
      %p112 = scmp.le.s32.totalorder 1, %s10
      %p113 = scmp.lt.s32.totalorder %s10, 5
      %p114 = pnand %p112, %p113
      %p115 = pneg %p114
      // Predicated region
      $region9: #{convolution_network.5} parent=5 // pred_check
        _
      $region10: #{convolution_network.5} parent=5 // pred_check_branch
        %117 = sbr.rel (%p114) target = $region12
      $region11: #{convolution_network.5} parent=5 // pred_region
        %s118 = ssub.s32 %s10, 1
        // Predicated region
        $region13: #{convolution_network.5} parent=11 // pred_check
          %p119 = pneg %p31
        $region14: #{convolution_network.5} parent=11 // pred_check_branch
          %121 = sbr.rel (%p119) target = $region16
        $region15: #{convolution_network.5} parent=11 // pred_region
          %s123 = ssub.s32 128, 128
          %124 = vsyncadd [#allocation3], %s123
          %s125 = sshll.u32 [#allocation2], 4
          %s126 = int_to_ptr.vmem [resolvable:$true] %s125
          %131 = dma.hbm_to_vmem [thread:$0]  %s0, 128, %s126, [#allocation3], 64, 64, 4
        $region16: #{convolution_network.5} parent=11 // pred_fallthru
          _
        // Predicated region
        $region17: #{convolution_network.5} parent=11 // pred_check
          %p132 = pneg %p78
        $region18: #{convolution_network.5} parent=11 // pred_check_branch
          %134 = sbr.rel (%p132) target = $region20
        $region19: #{convolution_network.5} parent=11 // pred_region
          _
        $region20: #{convolution_network.5} parent=11 // pred_fallthru
          _
      $region12: #{convolution_network.5} parent=5 // pred_fallthru
        _
      %p135 = scmp.lt.s32.totalorder %s10, 4
      // Predicated region
      $region21: #{convolution_network.5} parent=5 // pred_check
        %p136 = pneg %p135
      $region22: #{convolution_network.5} parent=5 // pred_check_branch
        %138 = sbr.rel (%p136) target = $region24
      $region23: #{convolution_network.5} parent=5 // pred_region
        // Predicated region
        $region25: #{convolution_network.5} parent=23 // pred_check
          %p139 = pneg %p51
        $region26: #{convolution_network.5} parent=23 // pred_check_branch
          %141 = sbr.rel (%p139) target = $region28
        $region27: #{convolution_network.5} parent=23 // pred_region
          %s142 = sand.u32 %s41, 1
          %s143 = sand.u32 %s41, 1
          %s144 = smul.addr %s143, 32
          %s145 = scalar_lea.vmem [#allocation4], %s144
          %s146 = smul.u32 4, %s10
          %s147 = smul.addr %s146, 4
          %s148 = scalar_lea.vmem %s1, %s147
          // Predicated region
          $region29: #{convolution_network.5} parent=27 // pred_check
            _
          $region30: #{convolution_network.5} parent=27 // pred_check_branch
            %150 = sbr.rel (0) target = $region32
          $region31: #{convolution_network.5} parent=27 // pred_region
            // Predicated region
            $region33: #{convolution_network.5} parent=31 // pred_check
              _
            $region34: #{convolution_network.5} parent=31 // pred_check_branch
              %152 = sbr.rel (0) target = $region36
            $region35: #{convolution_network.5} parent=31 // pred_region
              loop: start=0, step=1, limit=1
              $region37: #{convolution_network.5} parent=35 // loop_pre_header
                _
              $region38: #{convolution_network.5} parent=35 // loop_header
                %s154 = sphi 0, %s158
                %p155 = scmp.ge.s32.totalorder %s154, 1
                %s159 = sphi %s148, %s148
                %s160 = sphi %s145, %s145
              $region39: #{convolution_network.5} parent=35 // loop_header_branch
                %157 = sbr.rel (%p155) target = $region43
              $region40: #{convolution_network.5} parent=35 // loop_body
                %v161 = vld [vmem:[%s159] sm:$0xff]
                %162 = vst [vmem:[%s160] sm:$0xff] %v161
                %v163 = vld [vmem:[%s159 + $0x8] sm:$0xff]
                %164 = vst [vmem:[%s160 + $0x8] sm:$0xff] %v163
                %v165 = vld [vmem:[%s159 + $0x40] sm:$0xff]
                %166 = vst [vmem:[%s160 + $0x10] sm:$0xff] %v165
                %v167 = vld [vmem:[%s159 + $0x48] sm:$0xff]
                %168 = vst [vmem:[%s160 + $0x18] sm:$0xff] %v167
              $region41: #{convolution_network.5} parent=35 // loop_footer
                %s158 = sadd.s32 1, %s154
              $region42: #{convolution_network.5} parent=35 // loop_footer_branch
                %153 = sbr.rel target = $region38
              $region43: #{convolution_network.5} parent=35 // loop_exit
                _
            $region36: #{convolution_network.5} parent=31 // pred_fallthru
              _
            // Predicated region
            $region44: #{convolution_network.5} parent=31 // pred_check
              _
            $region45: #{convolution_network.5} parent=31 // pred_check_branch
              %170 = sbr.rel target = $region47
            $region46: #{convolution_network.5} parent=31 // pred_region
              _
            $region47: #{convolution_network.5} parent=31 // pred_fallthru
              _
          $region32: #{convolution_network.5} parent=27 // pred_fallthru
            _
          %171 = vnop
        $region28: #{convolution_network.5} parent=23 // pred_fallthru
          _
      $region24: #{convolution_network.5} parent=5 // pred_fallthru
        _
      %p172 = scmp.le.s32.totalorder 1, %s10
      %p173 = scmp.lt.s32.totalorder %s10, 5
      %p174 = pnand %p172, %p173
      %p175 = pneg %p174
      // Predicated region
      $region48: #{convolution_network.5} parent=5 // pred_check
        _
      $region49: #{convolution_network.5} parent=5 // pred_check_branch
        %177 = sbr.rel (%p174) target = $region51
      $region50: #{convolution_network.5} parent=5 // pred_region
        %s178 = ssub.s32 %s10, 1
        // Predicated region
        $region52: #{convolution_network.5} parent=50 // pred_check
          %p179 = pneg %p31
        $region53: #{convolution_network.5} parent=50 // pred_check_branch
          %181 = sbr.rel (%p179) target = $region55
        $region54: #{convolution_network.5} parent=50 // pred_region
          %182 = dma.done [#allocation3], 128
        $region55: #{convolution_network.5} parent=50 // pred_fallthru
          _
        %s183 = sand.u32 %s44, 1
        %s184 = sand.u32 %s44, 1
        %s185 = smul.addr %s184, 32
        %s186 = scalar_lea.vmem [#allocation4], %s185
        // Predicated region
        $region56: #{convolution_network.5} parent=50 // pred_check
          %p187 = pneg %p57
        $region57: #{convolution_network.5} parent=50 // pred_check_branch
          %189 = sbr.rel (%p187) target = $region59
        $region58: #{convolution_network.5} parent=50 // pred_region
          _
        $region59: #{convolution_network.5} parent=50 // pred_fallthru
          _
        %p190 = pneg %p31
        %p191 = pneg %p28
        %s192 = sand.u32 %s44, 1
        %s193 = sand.u32 %s44, 1
        %s194 = smul.addr %s193, 32
        %s195 = scalar_lea.vmem [#allocation4], %s194
        %p196 = pneg %p57
        %p197 = pneg %p54
        %p198 = pneg %p78
        %p199 = pneg %p75
        %p200 = pneg %p104
        %p201 = pneg %p101
        %s202 = sand.u32 %s91, 1
        %s203 = sand.u32 %s91, 1
        %s204 = smul.addr %s203, 32
        %s205 = scalar_lea.vmem [#allocation5], %s204
        %s206 = smul.u32 4, %s15
        %s207 = smul.u32 4, %s15
        %v209 = vld [vmem:[#allocation2] sm:$0xf]
        %v210 = vld [vmem:[#allocation2 + $0x4] sm:$0xf]
        %v211 = vld [vmem:[%s186] sm:$0xff]
        %v212 = vld [vmem:[%s186 + $0x8] sm:$0xff]
        %v213 = vld [vmem:[%s186 + $0x10] sm:$0x11]
        %v214 = vld [vmem:[%s186 + $0x18] sm:$0x11]
        %v215 = vld [vmem:[%s2] sm:$0xff]
        %v216 = vld [vmem:[%s2 + $0x8] sm:$0xff]
        %218 = vset.pattern.permute.xlu0 0
        %219 = vperm.xlu0 %218, %v215
        %v220 = vpop.permute.xlu0 %219
        %223 = vset.pattern.permute.xlu0 0
        %224 = vperm.xlu0 %223, %v216
        %v225 = vpop.permute.xlu0 %224
        %v229 = vunpack.c.l.b16 %v209
        %v230 = vunpack.c.l.b16 %v210
        %v231 = vpack.c.b16 %v230, %v229
        %v236 = vunpack.c.l.b16 %v211
        %v237 = vunpack.c.h.b16 %v211
        %v238 = vunpack.c.l.b16 %v212
        %v239 = vunpack.c.h.b16 %v212
        %v240 = vunpack.c.l.b16 %v213
        %v241 = vunpack.c.h.b16 %v213
        %v242 = vunpack.c.l.b16 %v214
        %v243 = vunpack.c.h.b16 %v214
        %v244 = vpack.c.b16 %v240, %v236
        %v245 = vpack.c.b16 %v241, %v237
        %v246 = vpack.c.b16 %v242, %v238
        %v247 = vpack.c.b16 %v243, %v239
        %vm248 = vcmask 72704
        %v250 = vsel %vm248, %v231, 0
        %vm252 = vcmask 1043456
        %vm253 = vcmask 1044480
        %v254 = vsel %vm252, 4294967295, 65535
        %v255 = vsel %vm253, %v254, 0
        %v257 = vand.u32 %v244, %v255
        %v260 = vand.u32 %v245, %v255
        %v263 = vand.u32 %v246, %v255
        %v266 = vand.u32 %v247, %v255
        %268 = vmatprep.subr.bf16.mxu0 %v260
        %269 = vmatpush1.bf16.msra.mxu0 %v257
        %270 = vmatprep.subr.bf16.mxu0 0
        %271 = vmatpush1.bf16.msra.mxu0 0
        %272 = vmatprep.subr.bf16.mxu0 0
        %273 = vmatpush1.bf16.msra.mxu0 0
        %274 = vmatprep.subr.bf16.mxu0 0
        %275 = vmatpush1.bf16.msra.mxu0 0
        %276 = vmatprep.subr.bf16.mxu0 0
        %277 = vmatpush1.bf16.msra.mxu0 0
        %278 = vmatprep.subr.bf16.mxu0 0
        %279 = vmatpush1.bf16.msra.mxu0 0
        %280 = vmatprep.subr.bf16.mxu0 0
        %281 = vmatpush1.bf16.msra.mxu0 0
        %282 = vmatprep.subr.bf16.mxu0 0
        %283 = vmatpush1.bf16.msra.mxu0 0
        %284 = vmatprep.subr.bf16.mxu0 0
        %285 = vmatpush1.bf16.msra.mxu0 0
        %286 = vmatprep.subr.bf16.mxu0 0
        %287 = vmatpush1.bf16.msra.mxu0 0
        %288 = vmatprep.subr.bf16.mxu0 0
        %289 = vmatpush1.bf16.msra.mxu0 0
        %290 = vmatprep.subr.bf16.mxu0 0
        %291 = vmatpush1.bf16.msra.mxu0 0
        %292 = vmatprep.subr.bf16.mxu0 0
        %293 = vmatpush1.bf16.msra.mxu0 0
        %294 = vmatprep.subr.bf16.mxu0 0
        %295 = vmatpush1.bf16.msra.mxu0 0
        %296 = vmatprep.subr.bf16.mxu0 0
        %297 = vmatpush1.bf16.msra.mxu0 0
        %298 = vmatprep.subr.bf16.mxu0 0
        %299 = vmatpush1.bf16.msra.mxu0 0
        %300 = vmatprep.mubr.bf16.mxu0 0
        %301 = vmatmul.mubr.bf16.gmra.mrb[0].mxu0 %v250
        %v302 = vpop.f32.mrb[0].mxu0
        %v303 = vadd.f32 %v220, %v302
        %v304 = vpop.f32.mrb[0].mxu0
        %v305 = vadd.f32 %v220, %v304
        %v306 = vpop.f32.mrb[0].mxu0
        %v307 = vadd.f32 %v225, %v306
        %v308 = vpop.f32.mrb[0].mxu0
        %v309 = vadd.f32 %v225, %v308
        %310 = vdwg.mxu0
        %311 = vmatprep.subr.bf16.mxu0 %v266
        %312 = vmatpush1.bf16.msra.mxu0 %v263
        %313 = vmatprep.subr.bf16.mxu0 0
        %314 = vmatpush1.bf16.msra.mxu0 0
        %315 = vmatprep.subr.bf16.mxu0 0
        %316 = vmatpush1.bf16.msra.mxu0 0
        %317 = vmatprep.subr.bf16.mxu0 0
        %318 = vmatpush1.bf16.msra.mxu0 0
        %319 = vmatprep.subr.bf16.mxu0 0
        %320 = vmatpush1.bf16.msra.mxu0 0
        %321 = vmatprep.subr.bf16.mxu0 0
        %322 = vmatpush1.bf16.msra.mxu0 0
        %323 = vmatprep.subr.bf16.mxu0 0
        %324 = vmatpush1.bf16.msra.mxu0 0
        %325 = vmatprep.subr.bf16.mxu0 0
        %326 = vmatpush1.bf16.msra.mxu0 0
        %327 = vmatprep.subr.bf16.mxu0 0
        %328 = vmatpush1.bf16.msra.mxu0 0
        %329 = vmatprep.subr.bf16.mxu0 0
        %330 = vmatpush1.bf16.msra.mxu0 0
        %331 = vmatprep.subr.bf16.mxu0 0
        %332 = vmatpush1.bf16.msra.mxu0 0
        %333 = vmatprep.subr.bf16.mxu0 0
        %334 = vmatpush1.bf16.msra.mxu0 0
        %335 = vmatprep.subr.bf16.mxu0 0
        %336 = vmatpush1.bf16.msra.mxu0 0
        %337 = vmatprep.subr.bf16.mxu0 0
        %338 = vmatpush1.bf16.msra.mxu0 0
        %339 = vmatprep.subr.bf16.mxu0 0
        %340 = vmatpush1.bf16.msra.mxu0 0
        %341 = vmatprep.subr.bf16.mxu0 0
        %342 = vmatpush1.bf16.msra.mxu0 0
        %343 = vmatprep.mubr.bf16.mxu0 0
        %344 = vmatmul.mubr.bf16.gmra.mrb[0].mxu0 %v250
        %v345 = vpop.f32.mrb[0].mxu0
        %v346 = vadd.f32 %v220, %v345
        %v347 = vpop.f32.mrb[0].mxu0
        %v348 = vadd.f32 %v220, %v347
        %v349 = vpop.f32.mrb[0].mxu0
        %v350 = vadd.f32 %v225, %v349
        %v351 = vpop.f32.mrb[0].mxu0
        %v352 = vadd.f32 %v225, %v351
        %353 = vdwg.mxu0
        %v354 = vmax.f32 %v303, 0.0
        %v355 = vmax.f32 %v305, 0.0
        %v356 = vmax.f32 %v346, 0.0
        %v357 = vmax.f32 %v348, 0.0
        %v358 = vmax.f32 %v307, 0.0
        %v359 = vmax.f32 %v309, 0.0
        %v360 = vmax.f32 %v350, 0.0
        %v361 = vmax.f32 %v352, 0.0
        %v362 = vpack.c.bf16 %v358, %v354
        %v363 = vpack.c.bf16 %v359, %v355
        %v364 = vpack.c.bf16 %v360, %v356
        %v365 = vpack.c.bf16 %v361, %v357
        %v370 = vunpack.c.l.b16 %v362
        %v371 = vunpack.c.l.b16 %v363
        %v372 = vunpack.c.l.b16 %v364
        %v373 = vunpack.c.l.b16 %v365
        %v374 = vunpack.c.h.b16 %v362
        %v375 = vunpack.c.h.b16 %v363
        %v376 = vunpack.c.h.b16 %v364
        %v377 = vunpack.c.h.b16 %v365
        %v378 = vpack.c.b16 %v371, %v370
        %v379 = vpack.c.b16 %v373, %v372
        %v380 = vpack.c.b16 %v375, %v374
        %v381 = vpack.c.b16 %v377, %v376
        %386 = vst [vmem:[%s205] sm:$0xff] %v378
        %387 = vst [vmem:[%s205 + $0x8] sm:$0xff] %v379
        %388 = vst [vmem:[%s205 + $0x10] sm:$0xff] %v380
        %389 = vst [vmem:[%s205 + $0x18] sm:$0xff] %v381
        %s390 = sand.u32 %s91, 1
        %s391 = sand.u32 %s91, 1
        %s392 = smul.addr %s391, 32
        %s393 = scalar_lea.vmem [#allocation5], %s392
        // Predicated region
        $region60: #{convolution_network.5} parent=50 // pred_check
          %p394 = pneg %p101
        $region61: #{convolution_network.5} parent=50 // pred_check_branch
          %396 = sbr.rel (%p394) target = $region63
        $region62: #{convolution_network.5} parent=50 // pred_region
          %s397 = smul.u32 4, %s15
          %s398 = smul.addr %s397, 4
          %s399 = scalar_lea.vmem %s3, %s398
          // Predicated region
          $region64: #{convolution_network.5} parent=62 // pred_check
            _
          $region65: #{convolution_network.5} parent=62 // pred_check_branch
            %401 = sbr.rel (0) target = $region67
          $region66: #{convolution_network.5} parent=62 // pred_region
            // Predicated region
            $region68: #{convolution_network.5} parent=66 // pred_check
              _
            $region69: #{convolution_network.5} parent=66 // pred_check_branch
              %403 = sbr.rel (0) target = $region71
            $region70: #{convolution_network.5} parent=66 // pred_region
              loop: start=0, step=1, limit=1
              $region72: #{convolution_network.5} parent=70 // loop_pre_header
                _
              $region73: #{convolution_network.5} parent=70 // loop_header
                %s405 = sphi 0, %s409
                %p406 = scmp.ge.s32.totalorder %s405, 1
                %s410 = sphi %s393, %s393
                %s411 = sphi %s399, %s399
              $region74: #{convolution_network.5} parent=70 // loop_header_branch
                %408 = sbr.rel (%p406) target = $region78
              $region75: #{convolution_network.5} parent=70 // loop_body
                %v412 = vld [vmem:[%s410] sm:$0xff]
                %413 = vst [vmem:[%s411] sm:$0xff] %v412
                %v414 = vld [vmem:[%s410 + $0x8] sm:$0xff]
                %415 = vst [vmem:[%s411 + $0x8] sm:$0xff] %v414
                %v416 = vld [vmem:[%s410 + $0x10] sm:$0xff]
                %417 = vst [vmem:[%s411 + $0x40] sm:$0xff] %v416
                %v418 = vld [vmem:[%s410 + $0x18] sm:$0xff]
                %419 = vst [vmem:[%s411 + $0x48] sm:$0xff] %v418
              $region76: #{convolution_network.5} parent=70 // loop_footer
                %s409 = sadd.s32 1, %s405
              $region77: #{convolution_network.5} parent=70 // loop_footer_branch
                %404 = sbr.rel target = $region73
              $region78: #{convolution_network.5} parent=70 // loop_exit
                _
            $region71: #{convolution_network.5} parent=66 // pred_fallthru
              _
            // Predicated region
            $region79: #{convolution_network.5} parent=66 // pred_check
              _
            $region80: #{convolution_network.5} parent=66 // pred_check_branch
              %421 = sbr.rel target = $region82
            $region81: #{convolution_network.5} parent=66 // pred_region
              _
            $region82: #{convolution_network.5} parent=66 // pred_fallthru
              _
          $region67: #{convolution_network.5} parent=62 // pred_fallthru
            _
          %422 = vnop
        $region63: #{convolution_network.5} parent=50 // pred_fallthru
          _
      $region51: #{convolution_network.5} parent=5 // pred_fallthru
        _
      %p423 = scmp.le.s32.totalorder 2, %s10
      // Predicated region
      $region83: #{convolution_network.5} parent=5 // pred_check
        %p424 = pneg %p423
      $region84: #{convolution_network.5} parent=5 // pred_check_branch
        %426 = sbr.rel (%p424) target = $region86
      $region85: #{convolution_network.5} parent=5 // pred_region
        %s427 = ssub.s32 %s10, 2
        // Predicated region
        $region87: #{convolution_network.5} parent=85 // pred_check
          %p428 = pneg %p107
        $region88: #{convolution_network.5} parent=85 // pred_check_branch
          %430 = sbr.rel (%p428) target = $region90
        $region89: #{convolution_network.5} parent=85 // pred_region
          %s431 = sand.u32 %s92, 1
          %s432 = sand.u32 %s92, 1
          %s433 = smul.addr %s432, 32
          %s434 = scalar_lea.vmem [#allocation5], %s433
        $region90: #{convolution_network.5} parent=85 // pred_fallthru
          _
      $region86: #{convolution_network.5} parent=5 // pred_fallthru
        _
    $region6: #{convolution_network.5} parent=1 // loop_footer
      %s14 = sadd.s32 1, %s10
    $region7: #{convolution_network.5} parent=1 // loop_footer_branch
      %9 = sbr.rel target = $region3
    $region8: #{convolution_network.5} parent=1 // loop_exit
      _
    %435 = vsyncpa [#allocation3], 1
    %s436 = scalar_lea.sflag [#allocation3], 1
    %437 = vsyncpa %s436, 1

// kernel: convolution_network.6
$region0: #{convolution_network.6}
  #allocation0 [shape = 'u32[]', space=smem, size = 0x4, offset = 0x4, fixed_abs, tag = 'smem constant byte address 0x4 - core index']
  #allocation1 [shape = 'u32[144,128]{1,0:T(1,128)}', space=vmem, size = 0x12000, scoped, tag = 'internal scratch']
  %s0 = inlined_call_operand.vmem [shape: bf16[32,144], index: 0, kind: input, shape index: {}]
  %s1 = inlined_call_operand.vmem [shape: bf16[144,512], index: 1, kind: input, shape index: {}]
  %s2 = inlined_call_operand.vmem [shape: f32[32,1], index: 2, kind: input, shape index: {}]
  %s3 = inlined_call_operand.vmem [shape: bf16[32,512], index: 3, kind: output, shape index: {}]
  %s4 = sld [smem:[#allocation0]]
  $region22: #{convolution_network.6} parent=0
    _
  %s6 = ssub.s32 1, %s4
  %s7 = scalar_select 0, %s6, %s4
  // Predicated region
  $region2: #{convolution_network.6} parent=0 // pred_check
    _
  $region3: #{convolution_network.6} parent=0 // pred_check_branch
    %9 = sbr.rel (0) target = $region5
  $region4: #{convolution_network.6} parent=0 // pred_region
    _
  $region5: #{convolution_network.6} parent=0 // pred_fallthru
    _
  // Predicated region
  $region6: #{convolution_network.6} parent=0 // pred_check
    _
  $region7: #{convolution_network.6} parent=0 // pred_check_branch
    %11 = sbr.rel (0) target = $region9
  $region8: #{convolution_network.6} parent=0 // pred_region
    _
  $region9: #{convolution_network.6} parent=0 // pred_fallthru
    _
  // Predicated region
  $region10: #{convolution_network.6} parent=0 // pred_check
    _
  $region11: #{convolution_network.6} parent=0 // pred_check_branch
    %13 = sbr.rel (0) target = $region13
  $region12: #{convolution_network.6} parent=0 // pred_region
    _
  $region13: #{convolution_network.6} parent=0 // pred_fallthru
    _
  %v15 = vld [vmem:[%s0] sm:$0xff]
  %v16 = vld [vmem:[%s0 + $0x8] sm:$0xff]
  %v17 = vld [vmem:[%s0 + $0x10] sm:$0xff]
  %v18 = vld [vmem:[%s0 + $0x18] sm:$0xff]
  %v19 = vld [vmem:[%s1] sm:$0xff]
  %v20 = vld [vmem:[%s1 + $0x8] sm:$0xff]
  %v21 = vld [vmem:[%s1 + $0x10] sm:$0xff]
  %v22 = vld [vmem:[%s1 + $0x18] sm:$0xff]
  %v23 = vld [vmem:[%s1 + $0x20] sm:$0xff]
  %v24 = vld [vmem:[%s1 + $0x28] sm:$0xff]
  %v25 = vld [vmem:[%s1 + $0x30] sm:$0xff]
  %v26 = vld [vmem:[%s1 + $0x38] sm:$0xff]
  %v27 = vld [vmem:[%s1 + $0x40] sm:$0xff]
  %v28 = vld [vmem:[%s1 + $0x48] sm:$0xff]
  %v29 = vld [vmem:[%s1 + $0x50] sm:$0xff]
  %v30 = vld [vmem:[%s1 + $0x58] sm:$0xff]
  %v31 = vld [vmem:[%s1 + $0x60] sm:$0xff]
  %v32 = vld [vmem:[%s1 + $0x68] sm:$0xff]
  %v33 = vld [vmem:[%s1 + $0x70] sm:$0xff]
  %v34 = vld [vmem:[%s1 + $0x78] sm:$0xff]
  %v35 = vld [vmem:[%s1 + $0x80] sm:$0xff]
  %v36 = vld [vmem:[%s1 + $0x88] sm:$0xff]
  %v37 = vld [vmem:[%s1 + $0x90] sm:$0xff]
  %v38 = vld [vmem:[%s1 + $0x98] sm:$0xff]
  %v39 = vld [vmem:[%s1 + $0xa0] sm:$0xff]
  %v40 = vld [vmem:[%s1 + $0xa8] sm:$0xff]
  %v41 = vld [vmem:[%s1 + $0xb0] sm:$0xff]
  %v42 = vld [vmem:[%s1 + $0xb8] sm:$0xff]
  %v43 = vld [vmem:[%s1 + $0xc0] sm:$0xff]
  %v44 = vld [vmem:[%s1 + $0xc8] sm:$0xff]
  %v45 = vld [vmem:[%s1 + $0xd0] sm:$0xff]
  %v46 = vld [vmem:[%s1 + $0xd8] sm:$0xff]
  %v47 = vld [vmem:[%s1 + $0xe0] sm:$0xff]
  %v48 = vld [vmem:[%s1 + $0xe8] sm:$0xff]
  %v49 = vld [vmem:[%s1 + $0xf0] sm:$0xff]
  %v50 = vld [vmem:[%s1 + $0xf8] sm:$0xff]
  %v51 = vld [vmem:[%s1 + $0x100] sm:$0xff]
  %v52 = vld [vmem:[%s1 + $0x108] sm:$0xff]
  %v53 = vld [vmem:[%s1 + $0x110] sm:$0xff]
  %v54 = vld [vmem:[%s1 + $0x118] sm:$0xff]
  %v55 = vld [vmem:[%s2] sm:$0xff]
  %v56 = vld [vmem:[%s2 + $0x8] sm:$0xff]
  %v57 = vld [vmem:[%s2 + $0x10] sm:$0xff]
  %v58 = vld [vmem:[%s2 + $0x18] sm:$0xff]
  %60 = vset.pattern.permute.xlu0 0
  %61 = vperm.xlu0 %60, %v55
  %v62 = vpop.permute.xlu0 %61
  %65 = vset.pattern.permute.xlu0 0
  %66 = vperm.xlu0 %65, %v56
  %v67 = vpop.permute.xlu0 %66
  %70 = vset.pattern.permute.xlu0 0
  %71 = vperm.xlu0 %70, %v57
  %v72 = vpop.permute.xlu0 %71
  %75 = vset.pattern.permute.xlu0 0
  %76 = vperm.xlu0 %75, %v58
  %v77 = vpop.permute.xlu0 %76
  %v83 = vunpack.c.l.b16 %v15
  %v84 = vunpack.c.h.b16 %v15
  %v85 = vunpack.c.l.b16 %v16
  %v86 = vunpack.c.h.b16 %v16
  %v87 = vunpack.c.l.b16 %v17
  %v88 = vunpack.c.h.b16 %v17
  %v89 = vunpack.c.l.b16 %v18
  %v90 = vunpack.c.h.b16 %v18
  %v91 = vpack.c.b16 %v85, %v83
  %v92 = vpack.c.b16 %v86, %v84
  %v93 = vpack.c.b16 %v89, %v87
  %v94 = vpack.c.b16 %v90, %v88
  %v133 = vunpack.c.l.b16 %v19
  %v134 = vunpack.c.h.b16 %v19
  %v135 = vunpack.c.l.b16 %v20
  %v136 = vunpack.c.h.b16 %v20
  %v137 = vunpack.c.l.b16 %v21
  %v138 = vunpack.c.h.b16 %v21
  %v139 = vunpack.c.l.b16 %v22
  %v140 = vunpack.c.h.b16 %v22
  %v141 = vunpack.c.l.b16 %v23
  %v142 = vunpack.c.h.b16 %v23
  %v143 = vunpack.c.l.b16 %v24
  %v144 = vunpack.c.h.b16 %v24
  %v145 = vunpack.c.l.b16 %v25
  %v146 = vunpack.c.h.b16 %v25
  %v147 = vunpack.c.l.b16 %v26
  %v148 = vunpack.c.h.b16 %v26
  %v149 = vunpack.c.l.b16 %v27
  %v150 = vunpack.c.h.b16 %v27
  %v151 = vunpack.c.l.b16 %v28
  %v152 = vunpack.c.h.b16 %v28
  %v153 = vunpack.c.l.b16 %v29
  %v154 = vunpack.c.h.b16 %v29
  %v155 = vunpack.c.l.b16 %v30
  %v156 = vunpack.c.h.b16 %v30
  %v157 = vunpack.c.l.b16 %v31
  %v158 = vunpack.c.h.b16 %v31
  %v159 = vunpack.c.l.b16 %v32
  %v160 = vunpack.c.h.b16 %v32
  %v161 = vunpack.c.l.b16 %v33
  %v162 = vunpack.c.h.b16 %v33
  %v163 = vunpack.c.l.b16 %v34
  %v164 = vunpack.c.h.b16 %v34
  %v165 = vunpack.c.l.b16 %v35
  %v166 = vunpack.c.h.b16 %v35
  %v167 = vunpack.c.l.b16 %v36
  %v168 = vunpack.c.h.b16 %v36
  %v169 = vunpack.c.l.b16 %v37
  %v170 = vunpack.c.h.b16 %v37
  %v171 = vunpack.c.l.b16 %v38
  %v172 = vunpack.c.h.b16 %v38
  %v173 = vunpack.c.l.b16 %v39
  %v174 = vunpack.c.h.b16 %v39
  %v175 = vunpack.c.l.b16 %v40
  %v176 = vunpack.c.h.b16 %v40
  %v177 = vunpack.c.l.b16 %v41
  %v178 = vunpack.c.h.b16 %v41
  %v179 = vunpack.c.l.b16 %v42
  %v180 = vunpack.c.h.b16 %v42
  %v181 = vunpack.c.l.b16 %v43
  %v182 = vunpack.c.h.b16 %v43
  %v183 = vunpack.c.l.b16 %v44
  %v184 = vunpack.c.h.b16 %v44
  %v185 = vunpack.c.l.b16 %v45
  %v186 = vunpack.c.h.b16 %v45
  %v187 = vunpack.c.l.b16 %v46
  %v188 = vunpack.c.h.b16 %v46
  %v189 = vunpack.c.l.b16 %v47
  %v190 = vunpack.c.h.b16 %v47
  %v191 = vunpack.c.l.b16 %v48
  %v192 = vunpack.c.h.b16 %v48
  %v193 = vunpack.c.l.b16 %v49
  %v194 = vunpack.c.h.b16 %v49
  %v195 = vunpack.c.l.b16 %v50
  %v196 = vunpack.c.h.b16 %v50
  %v197 = vunpack.c.l.b16 %v51
  %v198 = vunpack.c.h.b16 %v51
  %v199 = vunpack.c.l.b16 %v52
  %v200 = vunpack.c.h.b16 %v52
  %v201 = vunpack.c.l.b16 %v53
  %v202 = vunpack.c.h.b16 %v53
  %v203 = vunpack.c.l.b16 %v54
  %v204 = vunpack.c.h.b16 %v54
  %v205 = vpack.c.b16 %v137, %v133
  %v206 = vpack.c.b16 %v138, %v134
  %v207 = vpack.c.b16 %v139, %v135
  %v208 = vpack.c.b16 %v140, %v136
  %v209 = vpack.c.b16 %v145, %v141
  %v210 = vpack.c.b16 %v146, %v142
  %v211 = vpack.c.b16 %v147, %v143
  %v212 = vpack.c.b16 %v148, %v144
  %v213 = vpack.c.b16 %v153, %v149
  %v214 = vpack.c.b16 %v154, %v150
  %v215 = vpack.c.b16 %v155, %v151
  %v216 = vpack.c.b16 %v156, %v152
  %v217 = vpack.c.b16 %v161, %v157
  %v218 = vpack.c.b16 %v162, %v158
  %v219 = vpack.c.b16 %v163, %v159
  %v220 = vpack.c.b16 %v164, %v160
  %v221 = vpack.c.b16 %v169, %v165
  %v222 = vpack.c.b16 %v170, %v166
  %v223 = vpack.c.b16 %v171, %v167
  %v224 = vpack.c.b16 %v172, %v168
  %v225 = vpack.c.b16 %v177, %v173
  %v226 = vpack.c.b16 %v178, %v174
  %v227 = vpack.c.b16 %v179, %v175
  %v228 = vpack.c.b16 %v180, %v176
  %v229 = vpack.c.b16 %v185, %v181
  %v230 = vpack.c.b16 %v186, %v182
  %v231 = vpack.c.b16 %v187, %v183
  %v232 = vpack.c.b16 %v188, %v184
  %v233 = vpack.c.b16 %v193, %v189
  %v234 = vpack.c.b16 %v194, %v190
  %v235 = vpack.c.b16 %v195, %v191
  %v236 = vpack.c.b16 %v196, %v192
  %v237 = vpack.c.b16 %v201, %v197
  %v238 = vpack.c.b16 %v202, %v198
  %v239 = vpack.c.b16 %v203, %v199
  %v240 = vpack.c.b16 %v204, %v200
  %vm277 = vcmask 130048
  %v279 = vsel %vm277, %v92, 0
  %v282 = vsel %vm277, %v94, 0
  %284 = vmatprep.subr.bf16.mxu0 %v206
  %285 = vmatpush1.bf16.msra.mxu0 %v205
  %286 = vmatprep.subr.bf16.mxu0 %v210
  %287 = vmatpush1.bf16.msra.mxu0 %v209
  %288 = vmatprep.subr.bf16.mxu0 %v214
  %289 = vmatpush1.bf16.msra.mxu0 %v213
  %290 = vmatprep.subr.bf16.mxu0 %v218
  %291 = vmatpush1.bf16.msra.mxu0 %v217
  %292 = vmatprep.subr.bf16.mxu0 %v222
  %293 = vmatpush1.bf16.msra.mxu0 %v221
  %294 = vmatprep.subr.bf16.mxu0 %v226
  %295 = vmatpush1.bf16.msra.mxu0 %v225
  %296 = vmatprep.subr.bf16.mxu0 %v230
  %297 = vmatpush1.bf16.msra.mxu0 %v229
  %298 = vmatprep.subr.bf16.mxu0 %v234
  %299 = vmatpush1.bf16.msra.mxu0 %v233
  %300 = vmatprep.subr.bf16.mxu0 %v238
  %301 = vmatpush1.bf16.msra.mxu0 %v237
  %302 = vmatprep.subr.bf16.mxu0 0
  %303 = vmatpush1.bf16.msra.mxu0 0
  %304 = vmatprep.subr.bf16.mxu0 0
  %305 = vmatpush1.bf16.msra.mxu0 0
  %306 = vmatprep.subr.bf16.mxu0 0
  %307 = vmatpush1.bf16.msra.mxu0 0
  %308 = vmatprep.subr.bf16.mxu0 0
  %309 = vmatpush1.bf16.msra.mxu0 0
  %310 = vmatprep.subr.bf16.mxu0 0
  %311 = vmatpush1.bf16.msra.mxu0 0
  %312 = vmatprep.subr.bf16.mxu0 0
  %313 = vmatpush1.bf16.msra.mxu0 0
  %314 = vmatprep.subr.bf16.mxu0 0
  %315 = vmatpush1.bf16.msra.mxu0 0
  %316 = vmatprep.mubr.bf16.mxu0 %v279
  %317 = vmatmul.mubr.bf16.gmra.mrb[0].mxu0 %v91
  %v318 = vpop.f32.mrb[0].mxu0
  %v319 = vadd.f32 %v62, %v318
  %v320 = vpop.f32.mrb[0].mxu0
  %v321 = vadd.f32 %v62, %v320
  %v322 = vpop.f32.mrb[0].mxu0
  %v323 = vadd.f32 %v67, %v322
  %v324 = vpop.f32.mrb[0].mxu0
  %v325 = vadd.f32 %v67, %v324
  %326 = vmatprep.mubr.bf16.mxu0 %v282
  %327 = vmatmul.mubr.bf16.gmra.mrb[0].mxu0 %v93
  %v328 = vpop.f32.mrb[0].mxu0
  %v329 = vadd.f32 %v72, %v328
  %v330 = vpop.f32.mrb[0].mxu0
  %v331 = vadd.f32 %v72, %v330
  %v332 = vpop.f32.mrb[0].mxu0
  %v333 = vadd.f32 %v77, %v332
  %v334 = vpop.f32.mrb[0].mxu0
  %v335 = vadd.f32 %v77, %v334
  %336 = vdwg.mxu0
  %337 = vmatprep.subr.bf16.mxu0 %v208
  %338 = vmatpush1.bf16.msra.mxu0 %v207
  %339 = vmatprep.subr.bf16.mxu0 %v212
  %340 = vmatpush1.bf16.msra.mxu0 %v211
  %341 = vmatprep.subr.bf16.mxu0 %v216
  %342 = vmatpush1.bf16.msra.mxu0 %v215
  %343 = vmatprep.subr.bf16.mxu0 %v220
  %344 = vmatpush1.bf16.msra.mxu0 %v219
  %345 = vmatprep.subr.bf16.mxu0 %v224
  %346 = vmatpush1.bf16.msra.mxu0 %v223
  %347 = vmatprep.subr.bf16.mxu0 %v228
  %348 = vmatpush1.bf16.msra.mxu0 %v227
  %349 = vmatprep.subr.bf16.mxu0 %v232
  %350 = vmatpush1.bf16.msra.mxu0 %v231
  %351 = vmatprep.subr.bf16.mxu0 %v236
  %352 = vmatpush1.bf16.msra.mxu0 %v235
  %353 = vmatprep.subr.bf16.mxu0 %v240
  %354 = vmatpush1.bf16.msra.mxu0 %v239
  %355 = vmatprep.subr.bf16.mxu0 0
  %356 = vmatpush1.bf16.msra.mxu0 0
  %357 = vmatprep.subr.bf16.mxu0 0
  %358 = vmatpush1.bf16.msra.mxu0 0
  %359 = vmatprep.subr.bf16.mxu0 0
  %360 = vmatpush1.bf16.msra.mxu0 0
  %361 = vmatprep.subr.bf16.mxu0 0
  %362 = vmatpush1.bf16.msra.mxu0 0
  %363 = vmatprep.subr.bf16.mxu0 0
  %364 = vmatpush1.bf16.msra.mxu0 0
  %365 = vmatprep.subr.bf16.mxu0 0
  %366 = vmatpush1.bf16.msra.mxu0 0
  %367 = vmatprep.subr.bf16.mxu0 0
  %368 = vmatpush1.bf16.msra.mxu0 0
  %369 = vmatprep.mubr.bf16.mxu0 %v279
  %370 = vmatmul.mubr.bf16.gmra.mrb[0].mxu0 %v91
  %v371 = vpop.f32.mrb[0].mxu0
  %v372 = vadd.f32 %v62, %v371
  %v373 = vpop.f32.mrb[0].mxu0
  %v374 = vadd.f32 %v62, %v373
  %v375 = vpop.f32.mrb[0].mxu0
  %v376 = vadd.f32 %v67, %v375
  %v377 = vpop.f32.mrb[0].mxu0
  %v378 = vadd.f32 %v67, %v377
  %379 = vmatprep.mubr.bf16.mxu0 %v282
  %380 = vmatmul.mubr.bf16.gmra.mrb[0].mxu0 %v93
  %v381 = vpop.f32.mrb[0].mxu0
  %v382 = vadd.f32 %v72, %v381
  %v383 = vpop.f32.mrb[0].mxu0
  %v384 = vadd.f32 %v72, %v383
  %v385 = vpop.f32.mrb[0].mxu0
  %v386 = vadd.f32 %v77, %v385
  %v387 = vpop.f32.mrb[0].mxu0
  %v388 = vadd.f32 %v77, %v387
  %389 = vdwg.mxu0
  %v390 = vmax.f32 %v319, 0.0
  %v391 = vmax.f32 %v321, 0.0
  %v392 = vmax.f32 %v372, 0.0
  %v393 = vmax.f32 %v374, 0.0
  %v394 = vmax.f32 %v323, 0.0
  %v395 = vmax.f32 %v325, 0.0
  %v396 = vmax.f32 %v376, 0.0
  %v397 = vmax.f32 %v378, 0.0
  %v398 = vmax.f32 %v329, 0.0
  %v399 = vmax.f32 %v331, 0.0
  %v400 = vmax.f32 %v382, 0.0
  %v401 = vmax.f32 %v384, 0.0
  %v402 = vmax.f32 %v333, 0.0
  %v403 = vmax.f32 %v335, 0.0
  %v404 = vmax.f32 %v386, 0.0
  %v405 = vmax.f32 %v388, 0.0
  %v406 = vpack.c.bf16 %v394, %v390
  %v407 = vpack.c.bf16 %v395, %v391
  %v408 = vpack.c.bf16 %v396, %v392
  %v409 = vpack.c.bf16 %v397, %v393
  %v410 = vpack.c.bf16 %v402, %v398
  %v411 = vpack.c.bf16 %v403, %v399
  %v412 = vpack.c.bf16 %v404, %v400
  %v413 = vpack.c.bf16 %v405, %v401
  %v422 = vunpack.c.l.b16 %v406
  %v423 = vunpack.c.l.b16 %v407
  %v424 = vunpack.c.l.b16 %v408
  %v425 = vunpack.c.l.b16 %v409
  %v426 = vunpack.c.h.b16 %v406
  %v427 = vunpack.c.h.b16 %v407
  %v428 = vunpack.c.h.b16 %v408
  %v429 = vunpack.c.h.b16 %v409
  %v430 = vunpack.c.l.b16 %v410
  %v431 = vunpack.c.l.b16 %v411
  %v432 = vunpack.c.l.b16 %v412
  %v433 = vunpack.c.l.b16 %v413
  %v434 = vunpack.c.h.b16 %v410
  %v435 = vunpack.c.h.b16 %v411
  %v436 = vunpack.c.h.b16 %v412
  %v437 = vunpack.c.h.b16 %v413
  %v438 = vpack.c.b16 %v423, %v422
  %v439 = vpack.c.b16 %v425, %v424
  %v440 = vpack.c.b16 %v427, %v426
  %v441 = vpack.c.b16 %v429, %v428
  %v442 = vpack.c.b16 %v431, %v430
  %v443 = vpack.c.b16 %v433, %v432
  %v444 = vpack.c.b16 %v435, %v434
  %v445 = vpack.c.b16 %v437, %v436
  %454 = vst [vmem:[%s3] sm:$0xff] %v438
  %455 = vst [vmem:[%s3 + $0x8] sm:$0xff] %v439
  %456 = vst [vmem:[%s3 + $0x10] sm:$0xff] %v440
  %457 = vst [vmem:[%s3 + $0x18] sm:$0xff] %v441
  %458 = vst [vmem:[%s3 + $0x20] sm:$0xff] %v442
  %459 = vst [vmem:[%s3 + $0x28] sm:$0xff] %v443
  %460 = vst [vmem:[%s3 + $0x30] sm:$0xff] %v444
  %461 = vst [vmem:[%s3 + $0x38] sm:$0xff] %v445
  // Predicated region
  $region14: #{convolution_network.6} parent=0 // pred_check
    _
  $region15: #{convolution_network.6} parent=0 // pred_check_branch
    %463 = sbr.rel (0) target = $region17
  $region16: #{convolution_network.6} parent=0 // pred_region
    _
  $region17: #{convolution_network.6} parent=0 // pred_fallthru
    _
  // Predicated region
  $region18: #{convolution_network.6} parent=0 // pred_check
    _
  $region19: #{convolution_network.6} parent=0 // pred_check_branch
    %465 = sbr.rel (0) target = $region21
  $region20: #{convolution_network.6} parent=0 // pred_region
    _
  $region21: #{convolution_network.6} parent=0 // pred_fallthru
    _

// kernel: convolution_network.7
$region0: #{convolution_network.7}
  #allocation0 [shape = 'u32[]', space=smem, size = 0x4, offset = 0x4, fixed_abs, tag = 'smem constant byte address 0x4 - core index']
  #allocation1 [shape = 'u32[144,128]{1,0:T(1,128)}', space=vmem, size = 0x12000, scoped, tag = 'internal scratch']
  %s0 = inlined_call_operand.vmem [shape: bf16[64,288], index: 0, kind: input, shape index: {}]
  %s1 = inlined_call_operand.vmem [shape: bf16[288,512], index: 1, kind: input, shape index: {}]
  %s2 = inlined_call_operand.vmem [shape: f32[64,1], index: 2, kind: input, shape index: {}]
  %s3 = inlined_call_operand.vmem [shape: bf16[64,512], index: 3, kind: output, shape index: {}]
  %s4 = sld [smem:[#allocation0]]
  $region22: #{convolution_network.7} parent=0
    _
  %s6 = ssub.s32 1, %s4
  %s7 = scalar_select 0, %s6, %s4
  // Predicated region
  $region2: #{convolution_network.7} parent=0 // pred_check
    _
  $region3: #{convolution_network.7} parent=0 // pred_check_branch
    %9 = sbr.rel (0) target = $region5
  $region4: #{convolution_network.7} parent=0 // pred_region
    _
  $region5: #{convolution_network.7} parent=0 // pred_fallthru
    _
  // Predicated region
  $region6: #{convolution_network.7} parent=0 // pred_check
    _
  $region7: #{convolution_network.7} parent=0 // pred_check_branch
    %11 = sbr.rel (0) target = $region9
  $region8: #{convolution_network.7} parent=0 // pred_region
    _
  $region9: #{convolution_network.7} parent=0 // pred_fallthru
    _
  // Predicated region
  $region10: #{convolution_network.7} parent=0 // pred_check
    _
  $region11: #{convolution_network.7} parent=0 // pred_check_branch
    %13 = sbr.rel (0) target = $region13
  $region12: #{convolution_network.7} parent=0 // pred_region
    _
  $region13: #{convolution_network.7} parent=0 // pred_fallthru
    _
  %v15 = vld [vmem:[%s0] sm:$0xff]
  %v16 = vld [vmem:[%s0 + $0x8] sm:$0xf]
  %v17 = vld [vmem:[%s0 + $0xc] sm:$0xff]
  %v18 = vld [vmem:[%s0 + $0x14] sm:$0xf]
  %v19 = vld [vmem:[%s0 + $0x18] sm:$0xff]
  %v20 = vld [vmem:[%s0 + $0x20] sm:$0xf]
  %v21 = vld [vmem:[%s0 + $0x24] sm:$0xff]
  %v22 = vld [vmem:[%s0 + $0x2c] sm:$0xf]
  %v23 = vld [vmem:[%s0 + $0x30] sm:$0xff]
  %v24 = vld [vmem:[%s0 + $0x38] sm:$0xf]
  %v25 = vld [vmem:[%s0 + $0x3c] sm:$0xff]
  %v26 = vld [vmem:[%s0 + $0x44] sm:$0xf]
  %v27 = vld [vmem:[%s0 + $0x48] sm:$0xff]
  %v28 = vld [vmem:[%s0 + $0x50] sm:$0xf]
  %v29 = vld [vmem:[%s0 + $0x54] sm:$0xff]
  %v30 = vld [vmem:[%s0 + $0x5c] sm:$0xf]
  %v31 = vld [vmem:[%s1] sm:$0xff]
  %v32 = vld [vmem:[%s1 + $0x8] sm:$0xff]
  %v33 = vld [vmem:[%s1 + $0x10] sm:$0xff]
  %v34 = vld [vmem:[%s1 + $0x18] sm:$0xff]
  %v35 = vld [vmem:[%s1 + $0x20] sm:$0xff]
  %v36 = vld [vmem:[%s1 + $0x28] sm:$0xff]
  %v37 = vld [vmem:[%s1 + $0x30] sm:$0xff]
  %v38 = vld [vmem:[%s1 + $0x38] sm:$0xff]
  %v39 = vld [vmem:[%s1 + $0x40] sm:$0xff]
  %v40 = vld [vmem:[%s1 + $0x48] sm:$0xff]
  %v41 = vld [vmem:[%s1 + $0x50] sm:$0xff]
  %v42 = vld [vmem:[%s1 + $0x58] sm:$0xff]
  %v43 = vld [vmem:[%s1 + $0x60] sm:$0xff]
  %v44 = vld [vmem:[%s1 + $0x68] sm:$0xff]
  %v45 = vld [vmem:[%s1 + $0x70] sm:$0xff]
  %v46 = vld [vmem:[%s1 + $0x78] sm:$0xff]
  %v47 = vld [vmem:[%s1 + $0x80] sm:$0xff]
  %v48 = vld [vmem:[%s1 + $0x88] sm:$0xff]
  %v49 = vld [vmem:[%s1 + $0x90] sm:$0xff]
  %v50 = vld [vmem:[%s1 + $0x98] sm:$0xff]
  %v51 = vld [vmem:[%s1 + $0xa0] sm:$0xff]
  %v52 = vld [vmem:[%s1 + $0xa8] sm:$0xff]
  %v53 = vld [vmem:[%s1 + $0xb0] sm:$0xff]
  %v54 = vld [vmem:[%s1 + $0xb8] sm:$0xff]
  %v55 = vld [vmem:[%s1 + $0xc0] sm:$0xff]
  %v56 = vld [vmem:[%s1 + $0xc8] sm:$0xff]
  %v57 = vld [vmem:[%s1 + $0xd0] sm:$0xff]
  %v58 = vld [vmem:[%s1 + $0xd8] sm:$0xff]
  %v59 = vld [vmem:[%s1 + $0xe0] sm:$0xff]
  %v60 = vld [vmem:[%s1 + $0xe8] sm:$0xff]
  %v61 = vld [vmem:[%s1 + $0xf0] sm:$0xff]
  %v62 = vld [vmem:[%s1 + $0xf8] sm:$0xff]
  %v63 = vld [vmem:[%s1 + $0x100] sm:$0xff]
  %v64 = vld [vmem:[%s1 + $0x108] sm:$0xff]
  %v65 = vld [vmem:[%s1 + $0x110] sm:$0xff]
  %v66 = vld [vmem:[%s1 + $0x118] sm:$0xff]
  %v67 = vld [vmem:[%s1 + $0x120] sm:$0xff]
  %v68 = vld [vmem:[%s1 + $0x128] sm:$0xff]
  %v69 = vld [vmem:[%s1 + $0x130] sm:$0xff]
  %v70 = vld [vmem:[%s1 + $0x138] sm:$0xff]
  %v71 = vld [vmem:[%s1 + $0x140] sm:$0xff]
  %v72 = vld [vmem:[%s1 + $0x148] sm:$0xff]
  %v73 = vld [vmem:[%s1 + $0x150] sm:$0xff]
  %v74 = vld [vmem:[%s1 + $0x158] sm:$0xff]
  %v75 = vld [vmem:[%s1 + $0x160] sm:$0xff]
  %v76 = vld [vmem:[%s1 + $0x168] sm:$0xff]
  %v77 = vld [vmem:[%s1 + $0x170] sm:$0xff]
  %v78 = vld [vmem:[%s1 + $0x178] sm:$0xff]
  %v79 = vld [vmem:[%s1 + $0x180] sm:$0xff]
  %v80 = vld [vmem:[%s1 + $0x188] sm:$0xff]
  %v81 = vld [vmem:[%s1 + $0x190] sm:$0xff]
  %v82 = vld [vmem:[%s1 + $0x198] sm:$0xff]
  %v83 = vld [vmem:[%s1 + $0x1a0] sm:$0xff]
  %v84 = vld [vmem:[%s1 + $0x1a8] sm:$0xff]
  %v85 = vld [vmem:[%s1 + $0x1b0] sm:$0xff]
  %v86 = vld [vmem:[%s1 + $0x1b8] sm:$0xff]
  %v87 = vld [vmem:[%s1 + $0x1c0] sm:$0xff]
  %v88 = vld [vmem:[%s1 + $0x1c8] sm:$0xff]
  %v89 = vld [vmem:[%s1 + $0x1d0] sm:$0xff]
  %v90 = vld [vmem:[%s1 + $0x1d8] sm:$0xff]
  %v91 = vld [vmem:[%s1 + $0x1e0] sm:$0xff]
  %v92 = vld [vmem:[%s1 + $0x1e8] sm:$0xff]
  %v93 = vld [vmem:[%s1 + $0x1f0] sm:$0xff]
  %v94 = vld [vmem:[%s1 + $0x1f8] sm:$0xff]
  %v95 = vld [vmem:[%s1 + $0x200] sm:$0xff]
  %v96 = vld [vmem:[%s1 + $0x208] sm:$0xff]
  %v97 = vld [vmem:[%s1 + $0x210] sm:$0xff]
  %v98 = vld [vmem:[%s1 + $0x218] sm:$0xff]
  %v99 = vld [vmem:[%s1 + $0x220] sm:$0xff]
  %v100 = vld [vmem:[%s1 + $0x228] sm:$0xff]
  %v101 = vld [vmem:[%s1 + $0x230] sm:$0xff]
  %v102 = vld [vmem:[%s1 + $0x238] sm:$0xff]
  %v103 = vld [vmem:[%s2] sm:$0xff]
  %v104 = vld [vmem:[%s2 + $0x8] sm:$0xff]
  %v105 = vld [vmem:[%s2 + $0x10] sm:$0xff]
  %v106 = vld [vmem:[%s2 + $0x18] sm:$0xff]
  %v107 = vld [vmem:[%s2 + $0x20] sm:$0xff]
  %v108 = vld [vmem:[%s2 + $0x28] sm:$0xff]
  %v109 = vld [vmem:[%s2 + $0x30] sm:$0xff]
  %v110 = vld [vmem:[%s2 + $0x38] sm:$0xff]
  %112 = vset.pattern.permute.xlu0 0
  %113 = vperm.xlu0 %112, %v103
  %v114 = vpop.permute.xlu0 %113
  %117 = vset.pattern.permute.xlu0 0
  %118 = vperm.xlu0 %117, %v104
  %v119 = vpop.permute.xlu0 %118
  %122 = vset.pattern.permute.xlu0 0
  %123 = vperm.xlu0 %122, %v105
  %v124 = vpop.permute.xlu0 %123
  %127 = vset.pattern.permute.xlu0 0
  %128 = vperm.xlu0 %127, %v106
  %v129 = vpop.permute.xlu0 %128
  %132 = vset.pattern.permute.xlu0 0
  %133 = vperm.xlu0 %132, %v107
  %v134 = vpop.permute.xlu0 %133
  %137 = vset.pattern.permute.xlu0 0
  %138 = vperm.xlu0 %137, %v108
  %v139 = vpop.permute.xlu0 %138
  %142 = vset.pattern.permute.xlu0 0
  %143 = vperm.xlu0 %142, %v109
  %v144 = vpop.permute.xlu0 %143
  %147 = vset.pattern.permute.xlu0 0
  %148 = vperm.xlu0 %147, %v110
  %v149 = vpop.permute.xlu0 %148
  %v167 = vunpack.c.l.b16 %v15
  %v168 = vunpack.c.h.b16 %v15
  %v169 = vunpack.c.l.b16 %v16
  %v170 = vunpack.c.l.b16 %v17
  %v171 = vunpack.c.h.b16 %v17
  %v172 = vunpack.c.l.b16 %v18
  %v173 = vunpack.c.l.b16 %v19
  %v174 = vunpack.c.h.b16 %v19
  %v175 = vunpack.c.l.b16 %v20
  %v176 = vunpack.c.l.b16 %v21
  %v177 = vunpack.c.h.b16 %v21
  %v178 = vunpack.c.l.b16 %v22
  %v179 = vunpack.c.l.b16 %v23
  %v180 = vunpack.c.h.b16 %v23
  %v181 = vunpack.c.l.b16 %v24
  %v182 = vunpack.c.l.b16 %v25
  %v183 = vunpack.c.h.b16 %v25
  %v184 = vunpack.c.l.b16 %v26
  %v185 = vunpack.c.l.b16 %v27
  %v186 = vunpack.c.h.b16 %v27
  %v187 = vunpack.c.l.b16 %v28
  %v188 = vunpack.c.l.b16 %v29
  %v189 = vunpack.c.h.b16 %v29
  %v190 = vunpack.c.l.b16 %v30
  %v191 = vpack.c.b16 %v170, %v167
  %v192 = vpack.c.b16 %v171, %v168
  %v193 = vpack.c.b16 %v172, %v169
  %v194 = vpack.c.b16 %v176, %v173
  %v195 = vpack.c.b16 %v177, %v174
  %v196 = vpack.c.b16 %v178, %v175
  %v197 = vpack.c.b16 %v182, %v179
  %v198 = vpack.c.b16 %v183, %v180
  %v199 = vpack.c.b16 %v184, %v181
  %v200 = vpack.c.b16 %v188, %v185
  %v201 = vpack.c.b16 %v189, %v186
  %v202 = vpack.c.b16 %v190, %v187
  %v283 = vunpack.c.l.b16 %v31
  %v284 = vunpack.c.h.b16 %v31
  %v285 = vunpack.c.l.b16 %v32
  %v286 = vunpack.c.h.b16 %v32
  %v287 = vunpack.c.l.b16 %v33
  %v288 = vunpack.c.h.b16 %v33
  %v289 = vunpack.c.l.b16 %v34
  %v290 = vunpack.c.h.b16 %v34
  %v291 = vunpack.c.l.b16 %v35
  %v292 = vunpack.c.h.b16 %v35
  %v293 = vunpack.c.l.b16 %v36
  %v294 = vunpack.c.h.b16 %v36
  %v295 = vunpack.c.l.b16 %v37
  %v296 = vunpack.c.h.b16 %v37
  %v297 = vunpack.c.l.b16 %v38
  %v298 = vunpack.c.h.b16 %v38
  %v299 = vunpack.c.l.b16 %v39
  %v300 = vunpack.c.h.b16 %v39
  %v301 = vunpack.c.l.b16 %v40
  %v302 = vunpack.c.h.b16 %v40
  %v303 = vunpack.c.l.b16 %v41
  %v304 = vunpack.c.h.b16 %v41
  %v305 = vunpack.c.l.b16 %v42
  %v306 = vunpack.c.h.b16 %v42
  %v307 = vunpack.c.l.b16 %v43
  %v308 = vunpack.c.h.b16 %v43
  %v309 = vunpack.c.l.b16 %v44
  %v310 = vunpack.c.h.b16 %v44
  %v311 = vunpack.c.l.b16 %v45
  %v312 = vunpack.c.h.b16 %v45
  %v313 = vunpack.c.l.b16 %v46
  %v314 = vunpack.c.h.b16 %v46
  %v315 = vunpack.c.l.b16 %v47
  %v316 = vunpack.c.h.b16 %v47
  %v317 = vunpack.c.l.b16 %v48
  %v318 = vunpack.c.h.b16 %v48
  %v319 = vunpack.c.l.b16 %v49
  %v320 = vunpack.c.h.b16 %v49
  %v321 = vunpack.c.l.b16 %v50
  %v322 = vunpack.c.h.b16 %v50
  %v323 = vunpack.c.l.b16 %v51
  %v324 = vunpack.c.h.b16 %v51
  %v325 = vunpack.c.l.b16 %v52
  %v326 = vunpack.c.h.b16 %v52
  %v327 = vunpack.c.l.b16 %v53
  %v328 = vunpack.c.h.b16 %v53
  %v329 = vunpack.c.l.b16 %v54
  %v330 = vunpack.c.h.b16 %v54
  %v331 = vunpack.c.l.b16 %v55
  %v332 = vunpack.c.h.b16 %v55
  %v333 = vunpack.c.l.b16 %v56
  %v334 = vunpack.c.h.b16 %v56
  %v335 = vunpack.c.l.b16 %v57
  %v336 = vunpack.c.h.b16 %v57
  %v337 = vunpack.c.l.b16 %v58
  %v338 = vunpack.c.h.b16 %v58
  %v339 = vunpack.c.l.b16 %v59
  %v340 = vunpack.c.h.b16 %v59
  %v341 = vunpack.c.l.b16 %v60
  %v342 = vunpack.c.h.b16 %v60
  %v343 = vunpack.c.l.b16 %v61
  %v344 = vunpack.c.h.b16 %v61
  %v345 = vunpack.c.l.b16 %v62
  %v346 = vunpack.c.h.b16 %v62
  %v347 = vunpack.c.l.b16 %v63
  %v348 = vunpack.c.h.b16 %v63
  %v349 = vunpack.c.l.b16 %v64
  %v350 = vunpack.c.h.b16 %v64
  %v351 = vunpack.c.l.b16 %v65
  %v352 = vunpack.c.h.b16 %v65
  %v353 = vunpack.c.l.b16 %v66
  %v354 = vunpack.c.h.b16 %v66
  %v355 = vunpack.c.l.b16 %v67
  %v356 = vunpack.c.h.b16 %v67
  %v357 = vunpack.c.l.b16 %v68
  %v358 = vunpack.c.h.b16 %v68
  %v359 = vunpack.c.l.b16 %v69
  %v360 = vunpack.c.h.b16 %v69
  %v361 = vunpack.c.l.b16 %v70
  %v362 = vunpack.c.h.b16 %v70
  %v363 = vunpack.c.l.b16 %v71
  %v364 = vunpack.c.h.b16 %v71
  %v365 = vunpack.c.l.b16 %v72
  %v366 = vunpack.c.h.b16 %v72
  %v367 = vunpack.c.l.b16 %v73
  %v368 = vunpack.c.h.b16 %v73
  %v369 = vunpack.c.l.b16 %v74
  %v370 = vunpack.c.h.b16 %v74
  %v371 = vunpack.c.l.b16 %v75
  %v372 = vunpack.c.h.b16 %v75
  %v373 = vunpack.c.l.b16 %v76
  %v374 = vunpack.c.h.b16 %v76
  %v375 = vunpack.c.l.b16 %v77
  %v376 = vunpack.c.h.b16 %v77
  %v377 = vunpack.c.l.b16 %v78
  %v378 = vunpack.c.h.b16 %v78
  %v379 = vunpack.c.l.b16 %v79
  %v380 = vunpack.c.h.b16 %v79
  %v381 = vunpack.c.l.b16 %v80
  %v382 = vunpack.c.h.b16 %v80
  %v383 = vunpack.c.l.b16 %v81
  %v384 = vunpack.c.h.b16 %v81
  %v385 = vunpack.c.l.b16 %v82
  %v386 = vunpack.c.h.b16 %v82
  %v387 = vunpack.c.l.b16 %v83
  %v388 = vunpack.c.h.b16 %v83
  %v389 = vunpack.c.l.b16 %v84
  %v390 = vunpack.c.h.b16 %v84
  %v391 = vunpack.c.l.b16 %v85
  %v392 = vunpack.c.h.b16 %v85
  %v393 = vunpack.c.l.b16 %v86
  %v394 = vunpack.c.h.b16 %v86
  %v395 = vunpack.c.l.b16 %v87
  %v396 = vunpack.c.h.b16 %v87
  %v397 = vunpack.c.l.b16 %v88
  %v398 = vunpack.c.h.b16 %v88
  %v399 = vunpack.c.l.b16 %v89
  %v400 = vunpack.c.h.b16 %v89
  %v401 = vunpack.c.l.b16 %v90
  %v402 = vunpack.c.h.b16 %v90
  %v403 = vunpack.c.l.b16 %v91
  %v404 = vunpack.c.h.b16 %v91
  %v405 = vunpack.c.l.b16 %v92
  %v406 = vunpack.c.h.b16 %v92
  %v407 = vunpack.c.l.b16 %v93
  %v408 = vunpack.c.h.b16 %v93
  %v409 = vunpack.c.l.b16 %v94
  %v410 = vunpack.c.h.b16 %v94
  %v411 = vunpack.c.l.b16 %v95
  %v412 = vunpack.c.h.b16 %v95
  %v413 = vunpack.c.l.b16 %v96
  %v414 = vunpack.c.h.b16 %v96
  %v415 = vunpack.c.l.b16 %v97
  %v416 = vunpack.c.h.b16 %v97
  %v417 = vunpack.c.l.b16 %v98
  %v418 = vunpack.c.h.b16 %v98
  %v419 = vunpack.c.l.b16 %v99
  %v420 = vunpack.c.h.b16 %v99
  %v421 = vunpack.c.l.b16 %v100
  %v422 = vunpack.c.h.b16 %v100
  %v423 = vunpack.c.l.b16 %v101
  %v424 = vunpack.c.h.b16 %v101
  %v425 = vunpack.c.l.b16 %v102
  %v426 = vunpack.c.h.b16 %v102
  %v427 = vpack.c.b16 %v287, %v283
  %v428 = vpack.c.b16 %v288, %v284
  %v429 = vpack.c.b16 %v289, %v285
  %v430 = vpack.c.b16 %v290, %v286
  %v431 = vpack.c.b16 %v295, %v291
  %v432 = vpack.c.b16 %v296, %v292
  %v433 = vpack.c.b16 %v297, %v293
  %v434 = vpack.c.b16 %v298, %v294
  %v435 = vpack.c.b16 %v303, %v299
  %v436 = vpack.c.b16 %v304, %v300
  %v437 = vpack.c.b16 %v305, %v301
  %v438 = vpack.c.b16 %v306, %v302
  %v439 = vpack.c.b16 %v311, %v307
  %v440 = vpack.c.b16 %v312, %v308
  %v441 = vpack.c.b16 %v313, %v309
  %v442 = vpack.c.b16 %v314, %v310
  %v443 = vpack.c.b16 %v319, %v315
  %v444 = vpack.c.b16 %v320, %v316
  %v445 = vpack.c.b16 %v321, %v317
  %v446 = vpack.c.b16 %v322, %v318
  %v447 = vpack.c.b16 %v327, %v323
  %v448 = vpack.c.b16 %v328, %v324
  %v449 = vpack.c.b16 %v329, %v325
  %v450 = vpack.c.b16 %v330, %v326
  %v451 = vpack.c.b16 %v335, %v331
  %v452 = vpack.c.b16 %v336, %v332
  %v453 = vpack.c.b16 %v337, %v333
  %v454 = vpack.c.b16 %v338, %v334
  %v455 = vpack.c.b16 %v343, %v339
  %v456 = vpack.c.b16 %v344, %v340
  %v457 = vpack.c.b16 %v345, %v341
  %v458 = vpack.c.b16 %v346, %v342
  %v459 = vpack.c.b16 %v351, %v347
  %v460 = vpack.c.b16 %v352, %v348
  %v461 = vpack.c.b16 %v353, %v349
  %v462 = vpack.c.b16 %v354, %v350
  %v463 = vpack.c.b16 %v359, %v355
  %v464 = vpack.c.b16 %v360, %v356
  %v465 = vpack.c.b16 %v361, %v357
  %v466 = vpack.c.b16 %v362, %v358
  %v467 = vpack.c.b16 %v367, %v363
  %v468 = vpack.c.b16 %v368, %v364
  %v469 = vpack.c.b16 %v369, %v365
  %v470 = vpack.c.b16 %v370, %v366
  %v471 = vpack.c.b16 %v375, %v371
  %v472 = vpack.c.b16 %v376, %v372
  %v473 = vpack.c.b16 %v377, %v373
  %v474 = vpack.c.b16 %v378, %v374
  %v475 = vpack.c.b16 %v383, %v379
  %v476 = vpack.c.b16 %v384, %v380
  %v477 = vpack.c.b16 %v385, %v381
  %v478 = vpack.c.b16 %v386, %v382
  %v479 = vpack.c.b16 %v391, %v387
  %v480 = vpack.c.b16 %v392, %v388
  %v481 = vpack.c.b16 %v393, %v389
  %v482 = vpack.c.b16 %v394, %v390
  %v483 = vpack.c.b16 %v399, %v395
  %v484 = vpack.c.b16 %v400, %v396
  %v485 = vpack.c.b16 %v401, %v397
  %v486 = vpack.c.b16 %v402, %v398
  %v487 = vpack.c.b16 %v407, %v403
  %v488 = vpack.c.b16 %v408, %v404
  %v489 = vpack.c.b16 %v409, %v405
  %v490 = vpack.c.b16 %v410, %v406
  %v491 = vpack.c.b16 %v415, %v411
  %v492 = vpack.c.b16 %v416, %v412
  %v493 = vpack.c.b16 %v417, %v413
  %v494 = vpack.c.b16 %v418, %v414
  %v495 = vpack.c.b16 %v423, %v419
  %v496 = vpack.c.b16 %v424, %v420
  %v497 = vpack.c.b16 %v425, %v421
  %v498 = vpack.c.b16 %v426, %v422
  %vm571 = vcmask 261120
  %v573 = vsel %vm571, %v193, 0
  %v576 = vsel %vm571, %v196, 0
  %v579 = vsel %vm571, %v199, 0
  %v582 = vsel %vm571, %v202, 0
  %584 = vmatprep.subr.bf16.mxu0 %v428
  %585 = vmatpush1.bf16.msra.mxu0 %v427
  %586 = vmatprep.subr.bf16.mxu0 %v432
  %587 = vmatpush1.bf16.msra.mxu0 %v431
  %588 = vmatprep.subr.bf16.mxu0 %v436
  %589 = vmatpush1.bf16.msra.mxu0 %v435
  %590 = vmatprep.subr.bf16.mxu0 %v440
  %591 = vmatpush1.bf16.msra.mxu0 %v439
  %592 = vmatprep.subr.bf16.mxu0 %v444
  %593 = vmatpush1.bf16.msra.mxu0 %v443
  %594 = vmatprep.subr.bf16.mxu0 %v448
  %595 = vmatpush1.bf16.msra.mxu0 %v447
  %596 = vmatprep.subr.bf16.mxu0 %v452
  %597 = vmatpush1.bf16.msra.mxu0 %v451
  %598 = vmatprep.subr.bf16.mxu0 %v456
  %599 = vmatpush1.bf16.msra.mxu0 %v455
  %600 = vmatprep.subr.bf16.mxu0 %v460
  %601 = vmatpush1.bf16.msra.mxu0 %v459
  %602 = vmatprep.subr.bf16.mxu0 %v464
  %603 = vmatpush1.bf16.msra.mxu0 %v463
  %604 = vmatprep.subr.bf16.mxu0 %v468
  %605 = vmatpush1.bf16.msra.mxu0 %v467
  %606 = vmatprep.subr.bf16.mxu0 %v472
  %607 = vmatpush1.bf16.msra.mxu0 %v471
  %608 = vmatprep.subr.bf16.mxu0 %v476
  %609 = vmatpush1.bf16.msra.mxu0 %v475
  %610 = vmatprep.subr.bf16.mxu0 %v480
  %611 = vmatpush1.bf16.msra.mxu0 %v479
  %612 = vmatprep.subr.bf16.mxu0 %v484
  %613 = vmatpush1.bf16.msra.mxu0 %v483
  %614 = vmatprep.subr.bf16.mxu0 %v488
  %615 = vmatpush1.bf16.msra.mxu0 %v487
  %616 = vmatprep.mubr.bf16.mxu0 %v192
  %617 = vmatmul.mubr.bf16.gmra.mrb[0].mxu0 %v191
  %v618 = vpop.f32.mrb[0].mxu0
  %v619 = vadd.f32 %v114, %v618
  %v620 = vpop.f32.mrb[0].mxu0
  %v621 = vadd.f32 %v114, %v620
  %v622 = vpop.f32.mrb[0].mxu0
  %v623 = vadd.f32 %v119, %v622
  %v624 = vpop.f32.mrb[0].mxu0
  %v625 = vadd.f32 %v119, %v624
  %626 = vmatprep.mubr.bf16.mxu0 %v195
  %627 = vmatmul.mubr.bf16.gmra.mrb[0].mxu0 %v194
  %v628 = vpop.f32.mrb[0].mxu0
  %v629 = vadd.f32 %v124, %v628
  %v630 = vpop.f32.mrb[0].mxu0
  %v631 = vadd.f32 %v124, %v630
  %v632 = vpop.f32.mrb[0].mxu0
  %v633 = vadd.f32 %v129, %v632
  %v634 = vpop.f32.mrb[0].mxu0
  %v635 = vadd.f32 %v129, %v634
  %636 = vmatprep.mubr.bf16.mxu0 %v198
  %637 = vmatmul.mubr.bf16.gmra.mrb[0].mxu0 %v197
  %v638 = vpop.f32.mrb[0].mxu0
  %v639 = vadd.f32 %v134, %v638
  %v640 = vpop.f32.mrb[0].mxu0
  %v641 = vadd.f32 %v134, %v640
  %v642 = vpop.f32.mrb[0].mxu0
  %v643 = vadd.f32 %v139, %v642
  %v644 = vpop.f32.mrb[0].mxu0
  %v645 = vadd.f32 %v139, %v644
  %646 = vmatprep.mubr.bf16.mxu0 %v201
  %647 = vmatmul.mubr.bf16.gmra.mrb[0].mxu0 %v200
  %v648 = vpop.f32.mrb[0].mxu0
  %v649 = vadd.f32 %v144, %v648
  %v650 = vpop.f32.mrb[0].mxu0
  %v651 = vadd.f32 %v144, %v650
  %v652 = vpop.f32.mrb[0].mxu0
  %v653 = vadd.f32 %v149, %v652
  %v654 = vpop.f32.mrb[0].mxu0
  %v655 = vadd.f32 %v149, %v654
  %656 = vdwg.mxu0
  %657 = vmatprep.subr.bf16.mxu0 %v492
  %658 = vmatpush1.bf16.msra.mxu0 %v491
  %659 = vmatprep.subr.bf16.mxu0 %v496
  %660 = vmatpush1.bf16.msra.mxu0 %v495
  %661 = vmatprep.subr.bf16.mxu0 0
  %662 = vmatpush1.bf16.msra.mxu0 0
  %663 = vmatprep.subr.bf16.mxu0 0
  %664 = vmatpush1.bf16.msra.mxu0 0
  %665 = vmatprep.subr.bf16.mxu0 0
  %666 = vmatpush1.bf16.msra.mxu0 0
  %667 = vmatprep.subr.bf16.mxu0 0
  %668 = vmatpush1.bf16.msra.mxu0 0
  %669 = vmatprep.subr.bf16.mxu0 0
  %670 = vmatpush1.bf16.msra.mxu0 0
  %671 = vmatprep.subr.bf16.mxu0 0
  %672 = vmatpush1.bf16.msra.mxu0 0
  %673 = vmatprep.subr.bf16.mxu0 0
  %674 = vmatpush1.bf16.msra.mxu0 0
  %675 = vmatprep.subr.bf16.mxu0 0
  %676 = vmatpush1.bf16.msra.mxu0 0
  %677 = vmatprep.subr.bf16.mxu0 0
  %678 = vmatpush1.bf16.msra.mxu0 0
  %679 = vmatprep.subr.bf16.mxu0 0
  %680 = vmatpush1.bf16.msra.mxu0 0
  %681 = vmatprep.subr.bf16.mxu0 0
  %682 = vmatpush1.bf16.msra.mxu0 0
  %683 = vmatprep.subr.bf16.mxu0 0
  %684 = vmatpush1.bf16.msra.mxu0 0
  %685 = vmatprep.subr.bf16.mxu0 0
  %686 = vmatpush1.bf16.msra.mxu0 0
  %687 = vmatprep.subr.bf16.mxu0 0
  %688 = vmatpush1.bf16.msra.mxu0 0
  %689 = vmatprep.mubr.bf16.mxu0 0
  %690 = vmatmul.mubr.bf16.gmra.mrb[0].mxu0 %v573
  %v691 = vpop.f32.mrb[0].mxu0
  %v692 = vadd.f32 %v619, %v691
  %v693 = vpop.f32.mrb[0].mxu0
  %v694 = vadd.f32 %v621, %v693
  %v695 = vpop.f32.mrb[0].mxu0
  %v696 = vadd.f32 %v623, %v695
  %v697 = vpop.f32.mrb[0].mxu0
  %v698 = vadd.f32 %v625, %v697
  %699 = vmatprep.mubr.bf16.mxu0 0
  %700 = vmatmul.mubr.bf16.gmra.mrb[0].mxu0 %v576
  %v701 = vpop.f32.mrb[0].mxu0
  %v702 = vadd.f32 %v629, %v701
  %v703 = vpop.f32.mrb[0].mxu0
  %v704 = vadd.f32 %v631, %v703
  %v705 = vpop.f32.mrb[0].mxu0
  %v706 = vadd.f32 %v633, %v705
  %v707 = vpop.f32.mrb[0].mxu0
  %v708 = vadd.f32 %v635, %v707
  %709 = vmatprep.mubr.bf16.mxu0 0
  %710 = vmatmul.mubr.bf16.gmra.mrb[0].mxu0 %v579
  %v711 = vpop.f32.mrb[0].mxu0
  %v712 = vadd.f32 %v639, %v711
  %v713 = vpop.f32.mrb[0].mxu0
  %v714 = vadd.f32 %v641, %v713
  %v715 = vpop.f32.mrb[0].mxu0
  %v716 = vadd.f32 %v643, %v715
  %v717 = vpop.f32.mrb[0].mxu0
  %v718 = vadd.f32 %v645, %v717
  %719 = vmatprep.mubr.bf16.mxu0 0
  %720 = vmatmul.mubr.bf16.gmra.mrb[0].mxu0 %v582
  %v721 = vpop.f32.mrb[0].mxu0
  %v722 = vadd.f32 %v649, %v721
  %v723 = vpop.f32.mrb[0].mxu0
  %v724 = vadd.f32 %v651, %v723
  %v725 = vpop.f32.mrb[0].mxu0
  %v726 = vadd.f32 %v653, %v725
  %v727 = vpop.f32.mrb[0].mxu0
  %v728 = vadd.f32 %v655, %v727
  %729 = vdwg.mxu0
  %730 = vmatprep.subr.bf16.mxu0 %v430
  %731 = vmatpush1.bf16.msra.mxu0 %v429
  %732 = vmatprep.subr.bf16.mxu0 %v434
  %733 = vmatpush1.bf16.msra.mxu0 %v433
  %734 = vmatprep.subr.bf16.mxu0 %v438
  %735 = vmatpush1.bf16.msra.mxu0 %v437
  %736 = vmatprep.subr.bf16.mxu0 %v442
  %737 = vmatpush1.bf16.msra.mxu0 %v441
  %738 = vmatprep.subr.bf16.mxu0 %v446
  %739 = vmatpush1.bf16.msra.mxu0 %v445
  %740 = vmatprep.subr.bf16.mxu0 %v450
  %741 = vmatpush1.bf16.msra.mxu0 %v449
  %742 = vmatprep.subr.bf16.mxu0 %v454
  %743 = vmatpush1.bf16.msra.mxu0 %v453
  %744 = vmatprep.subr.bf16.mxu0 %v458
  %745 = vmatpush1.bf16.msra.mxu0 %v457
  %746 = vmatprep.subr.bf16.mxu0 %v462
  %747 = vmatpush1.bf16.msra.mxu0 %v461
  %748 = vmatprep.subr.bf16.mxu0 %v466
  %749 = vmatpush1.bf16.msra.mxu0 %v465
  %750 = vmatprep.subr.bf16.mxu0 %v470
  %751 = vmatpush1.bf16.msra.mxu0 %v469
  %752 = vmatprep.subr.bf16.mxu0 %v474
  %753 = vmatpush1.bf16.msra.mxu0 %v473
  %754 = vmatprep.subr.bf16.mxu0 %v478
  %755 = vmatpush1.bf16.msra.mxu0 %v477
  %756 = vmatprep.subr.bf16.mxu0 %v482
  %757 = vmatpush1.bf16.msra.mxu0 %v481
  %758 = vmatprep.subr.bf16.mxu0 %v486
  %759 = vmatpush1.bf16.msra.mxu0 %v485
  %760 = vmatprep.subr.bf16.mxu0 %v490
  %761 = vmatpush1.bf16.msra.mxu0 %v489
  %762 = vmatprep.mubr.bf16.mxu0 %v192
  %763 = vmatmul.mubr.bf16.gmra.mrb[0].mxu0 %v191
  %v764 = vpop.f32.mrb[0].mxu0
  %v765 = vadd.f32 %v114, %v764
  %v766 = vpop.f32.mrb[0].mxu0
  %v767 = vadd.f32 %v114, %v766
  %v768 = vpop.f32.mrb[0].mxu0
  %v769 = vadd.f32 %v119, %v768
  %v770 = vpop.f32.mrb[0].mxu0
  %v771 = vadd.f32 %v119, %v770
  %772 = vmatprep.mubr.bf16.mxu0 %v195
  %773 = vmatmul.mubr.bf16.gmra.mrb[0].mxu0 %v194
  %v774 = vpop.f32.mrb[0].mxu0
  %v775 = vadd.f32 %v124, %v774
  %v776 = vpop.f32.mrb[0].mxu0
  %v777 = vadd.f32 %v124, %v776
  %v778 = vpop.f32.mrb[0].mxu0
  %v779 = vadd.f32 %v129, %v778
  %v780 = vpop.f32.mrb[0].mxu0
  %v781 = vadd.f32 %v129, %v780
  %782 = vmatprep.mubr.bf16.mxu0 %v198
  %783 = vmatmul.mubr.bf16.gmra.mrb[0].mxu0 %v197
  %v784 = vpop.f32.mrb[0].mxu0
  %v785 = vadd.f32 %v134, %v784
  %v786 = vpop.f32.mrb[0].mxu0
  %v787 = vadd.f32 %v134, %v786
  %v788 = vpop.f32.mrb[0].mxu0
  %v789 = vadd.f32 %v139, %v788
  %v790 = vpop.f32.mrb[0].mxu0
  %v791 = vadd.f32 %v139, %v790
  %792 = vmatprep.mubr.bf16.mxu0 %v201
  %793 = vmatmul.mubr.bf16.gmra.mrb[0].mxu0 %v200
  %v794 = vpop.f32.mrb[0].mxu0
  %v795 = vadd.f32 %v144, %v794
  %v796 = vpop.f32.mrb[0].mxu0
  %v797 = vadd.f32 %v144, %v796
  %v798 = vpop.f32.mrb[0].mxu0
  %v799 = vadd.f32 %v149, %v798
  %v800 = vpop.f32.mrb[0].mxu0
  %v801 = vadd.f32 %v149, %v800
  %802 = vdwg.mxu0
  %803 = vmatprep.subr.bf16.mxu0 %v494
  %804 = vmatpush1.bf16.msra.mxu0 %v493
  %805 = vmatprep.subr.bf16.mxu0 %v498
  %806 = vmatpush1.bf16.msra.mxu0 %v497
  %807 = vmatprep.subr.bf16.mxu0 0
  %808 = vmatpush1.bf16.msra.mxu0 0
  %809 = vmatprep.subr.bf16.mxu0 0
  %810 = vmatpush1.bf16.msra.mxu0 0
  %811 = vmatprep.subr.bf16.mxu0 0
  %812 = vmatpush1.bf16.msra.mxu0 0
  %813 = vmatprep.subr.bf16.mxu0 0
  %814 = vmatpush1.bf16.msra.mxu0 0
  %815 = vmatprep.subr.bf16.mxu0 0
  %816 = vmatpush1.bf16.msra.mxu0 0
  %817 = vmatprep.subr.bf16.mxu0 0
  %818 = vmatpush1.bf16.msra.mxu0 0
  %819 = vmatprep.subr.bf16.mxu0 0
  %820 = vmatpush1.bf16.msra.mxu0 0
  %821 = vmatprep.subr.bf16.mxu0 0
  %822 = vmatpush1.bf16.msra.mxu0 0
  %823 = vmatprep.subr.bf16.mxu0 0
  %824 = vmatpush1.bf16.msra.mxu0 0
  %825 = vmatprep.subr.bf16.mxu0 0
  %826 = vmatpush1.bf16.msra.mxu0 0
  %827 = vmatprep.subr.bf16.mxu0 0
  %828 = vmatpush1.bf16.msra.mxu0 0
  %829 = vmatprep.subr.bf16.mxu0 0
  %830 = vmatpush1.bf16.msra.mxu0 0
  %831 = vmatprep.subr.bf16.mxu0 0
  %832 = vmatpush1.bf16.msra.mxu0 0
  %833 = vmatprep.subr.bf16.mxu0 0
  %834 = vmatpush1.bf16.msra.mxu0 0
  %835 = vmatprep.mubr.bf16.mxu0 0
  %836 = vmatmul.mubr.bf16.gmra.mrb[0].mxu0 %v573
  %v837 = vpop.f32.mrb[0].mxu0
  %v838 = vadd.f32 %v765, %v837
  %v839 = vpop.f32.mrb[0].mxu0
  %v840 = vadd.f32 %v767, %v839
  %v841 = vpop.f32.mrb[0].mxu0
  %v842 = vadd.f32 %v769, %v841
  %v843 = vpop.f32.mrb[0].mxu0
  %v844 = vadd.f32 %v771, %v843
  %845 = vmatprep.mubr.bf16.mxu0 0
  %846 = vmatmul.mubr.bf16.gmra.mrb[0].mxu0 %v576
  %v847 = vpop.f32.mrb[0].mxu0
  %v848 = vadd.f32 %v775, %v847
  %v849 = vpop.f32.mrb[0].mxu0
  %v850 = vadd.f32 %v777, %v849
  %v851 = vpop.f32.mrb[0].mxu0
  %v852 = vadd.f32 %v779, %v851
  %v853 = vpop.f32.mrb[0].mxu0
  %v854 = vadd.f32 %v781, %v853
  %855 = vmatprep.mubr.bf16.mxu0 0
  %856 = vmatmul.mubr.bf16.gmra.mrb[0].mxu0 %v579
  %v857 = vpop.f32.mrb[0].mxu0
  %v858 = vadd.f32 %v785, %v857
  %v859 = vpop.f32.mrb[0].mxu0
  %v860 = vadd.f32 %v787, %v859
  %v861 = vpop.f32.mrb[0].mxu0
  %v862 = vadd.f32 %v789, %v861
  %v863 = vpop.f32.mrb[0].mxu0
  %v864 = vadd.f32 %v791, %v863
  %865 = vmatprep.mubr.bf16.mxu0 0
  %866 = vmatmul.mubr.bf16.gmra.mrb[0].mxu0 %v582
  %v867 = vpop.f32.mrb[0].mxu0
  %v868 = vadd.f32 %v795, %v867
  %v869 = vpop.f32.mrb[0].mxu0
  %v870 = vadd.f32 %v797, %v869
  %v871 = vpop.f32.mrb[0].mxu0
  %v872 = vadd.f32 %v799, %v871
  %v873 = vpop.f32.mrb[0].mxu0
  %v874 = vadd.f32 %v801, %v873
  %875 = vdwg.mxu0
  %v876 = vmax.f32 %v692, 0.0
  %v877 = vmax.f32 %v694, 0.0
  %v878 = vmax.f32 %v838, 0.0
  %v879 = vmax.f32 %v840, 0.0
  %v880 = vmax.f32 %v696, 0.0
  %v881 = vmax.f32 %v698, 0.0
  %v882 = vmax.f32 %v842, 0.0
  %v883 = vmax.f32 %v844, 0.0
  %v884 = vmax.f32 %v702, 0.0
  %v885 = vmax.f32 %v704, 0.0
  %v886 = vmax.f32 %v848, 0.0
  %v887 = vmax.f32 %v850, 0.0
  %v888 = vmax.f32 %v706, 0.0
  %v889 = vmax.f32 %v708, 0.0
  %v890 = vmax.f32 %v852, 0.0
  %v891 = vmax.f32 %v854, 0.0
  %v892 = vmax.f32 %v712, 0.0
  %v893 = vmax.f32 %v714, 0.0
  %v894 = vmax.f32 %v858, 0.0
  %v895 = vmax.f32 %v860, 0.0
  %v896 = vmax.f32 %v716, 0.0
  %v897 = vmax.f32 %v718, 0.0
  %v898 = vmax.f32 %v862, 0.0
  %v899 = vmax.f32 %v864, 0.0
  %v900 = vmax.f32 %v722, 0.0
  %v901 = vmax.f32 %v724, 0.0
  %v902 = vmax.f32 %v868, 0.0
  %v903 = vmax.f32 %v870, 0.0
  %v904 = vmax.f32 %v726, 0.0
  %v905 = vmax.f32 %v728, 0.0
  %v906 = vmax.f32 %v872, 0.0
  %v907 = vmax.f32 %v874, 0.0
  %v908 = vpack.c.bf16 %v880, %v876
  %v909 = vpack.c.bf16 %v881, %v877
  %v910 = vpack.c.bf16 %v882, %v878
  %v911 = vpack.c.bf16 %v883, %v879
  %v912 = vpack.c.bf16 %v888, %v884
  %v913 = vpack.c.bf16 %v889, %v885
  %v914 = vpack.c.bf16 %v890, %v886
  %v915 = vpack.c.bf16 %v891, %v887
  %v916 = vpack.c.bf16 %v896, %v892
  %v917 = vpack.c.bf16 %v897, %v893
  %v918 = vpack.c.bf16 %v898, %v894
  %v919 = vpack.c.bf16 %v899, %v895
  %v920 = vpack.c.bf16 %v904, %v900
  %v921 = vpack.c.bf16 %v905, %v901
  %v922 = vpack.c.bf16 %v906, %v902
  %v923 = vpack.c.bf16 %v907, %v903
  %v940 = vunpack.c.l.b16 %v908
  %v941 = vunpack.c.l.b16 %v909
  %v942 = vunpack.c.l.b16 %v910
  %v943 = vunpack.c.l.b16 %v911
  %v944 = vunpack.c.h.b16 %v908
  %v945 = vunpack.c.h.b16 %v909
  %v946 = vunpack.c.h.b16 %v910
  %v947 = vunpack.c.h.b16 %v911
  %v948 = vunpack.c.l.b16 %v912
  %v949 = vunpack.c.l.b16 %v913
  %v950 = vunpack.c.l.b16 %v914
  %v951 = vunpack.c.l.b16 %v915
  %v952 = vunpack.c.h.b16 %v912
  %v953 = vunpack.c.h.b16 %v913
  %v954 = vunpack.c.h.b16 %v914
  %v955 = vunpack.c.h.b16 %v915
  %v956 = vunpack.c.l.b16 %v916
  %v957 = vunpack.c.l.b16 %v917
  %v958 = vunpack.c.l.b16 %v918
  %v959 = vunpack.c.l.b16 %v919
  %v960 = vunpack.c.h.b16 %v916
  %v961 = vunpack.c.h.b16 %v917
  %v962 = vunpack.c.h.b16 %v918
  %v963 = vunpack.c.h.b16 %v919
  %v964 = vunpack.c.l.b16 %v920
  %v965 = vunpack.c.l.b16 %v921
  %v966 = vunpack.c.l.b16 %v922
  %v967 = vunpack.c.l.b16 %v923
  %v968 = vunpack.c.h.b16 %v920
  %v969 = vunpack.c.h.b16 %v921
  %v970 = vunpack.c.h.b16 %v922
  %v971 = vunpack.c.h.b16 %v923
  %v972 = vpack.c.b16 %v941, %v940
  %v973 = vpack.c.b16 %v943, %v942
  %v974 = vpack.c.b16 %v945, %v944
  %v975 = vpack.c.b16 %v947, %v946
  %v976 = vpack.c.b16 %v949, %v948
  %v977 = vpack.c.b16 %v951, %v950
  %v978 = vpack.c.b16 %v953, %v952
  %v979 = vpack.c.b16 %v955, %v954
  %v980 = vpack.c.b16 %v957, %v956
  %v981 = vpack.c.b16 %v959, %v958
  %v982 = vpack.c.b16 %v961, %v960
  %v983 = vpack.c.b16 %v963, %v962
  %v984 = vpack.c.b16 %v965, %v964
  %v985 = vpack.c.b16 %v967, %v966
  %v986 = vpack.c.b16 %v969, %v968
  %v987 = vpack.c.b16 %v971, %v970
  %1004 = vst [vmem:[%s3] sm:$0xff] %v972
  %1005 = vst [vmem:[%s3 + $0x8] sm:$0xff] %v973
  %1006 = vst [vmem:[%s3 + $0x10] sm:$0xff] %v974
  %1007 = vst [vmem:[%s3 + $0x18] sm:$0xff] %v975
  %1008 = vst [vmem:[%s3 + $0x20] sm:$0xff] %v976
  %1009 = vst [vmem:[%s3 + $0x28] sm:$0xff] %v977
  %1010 = vst [vmem:[%s3 + $0x30] sm:$0xff] %v978
  %1011 = vst [vmem:[%s3 + $0x38] sm:$0xff] %v979
  %1012 = vst [vmem:[%s3 + $0x40] sm:$0xff] %v980
  %1013 = vst [vmem:[%s3 + $0x48] sm:$0xff] %v981
  %1014 = vst [vmem:[%s3 + $0x50] sm:$0xff] %v982
  %1015 = vst [vmem:[%s3 + $0x58] sm:$0xff] %v983
  %1016 = vst [vmem:[%s3 + $0x60] sm:$0xff] %v984
  %1017 = vst [vmem:[%s3 + $0x68] sm:$0xff] %v985
  %1018 = vst [vmem:[%s3 + $0x70] sm:$0xff] %v986
  %1019 = vst [vmem:[%s3 + $0x78] sm:$0xff] %v987
  // Predicated region
  $region14: #{convolution_network.7} parent=0 // pred_check
    _
  $region15: #{convolution_network.7} parent=0 // pred_check_branch
    %1021 = sbr.rel (0) target = $region17
  $region16: #{convolution_network.7} parent=0 // pred_region
    _
  $region17: #{convolution_network.7} parent=0 // pred_fallthru
    _
  // Predicated region
  $region18: #{convolution_network.7} parent=0 // pred_check
    _
  $region19: #{convolution_network.7} parent=0 // pred_check_branch
    %1023 = sbr.rel (0) target = $region21
  $region20: #{convolution_network.7} parent=0 // pred_region
    _
  $region21: #{convolution_network.7} parent=0 // pred_fallthru
    _

// kernel: convolution_network.8
$region0: #{convolution_network.8}
  #allocation0 [shape = 'u32[]', space=smem, size = 0x4, offset = 0x4, fixed_abs, tag = 'smem constant byte address 0x4 - core index']
  #allocation1 [shape = 'u32[144,128]{1,0:T(1,128)}', space=vmem, size = 0x12000, scoped, tag = 'internal scratch']
  %s0 = inlined_call_operand.vmem [shape: bf16[32,576], index: 0, kind: input, shape index: {}]
  %s1 = inlined_call_operand.vmem [shape: bf16[576,128], index: 1, kind: input, shape index: {}]
  %s2 = inlined_call_operand.vmem [shape: f32[32,1], index: 2, kind: input, shape index: {}]
  %s3 = inlined_call_operand.vmem [shape: bf16[32,128], index: 3, kind: output, shape index: {}]
  %s4 = sld [smem:[#allocation0]]
  $region22: #{convolution_network.8} parent=0
    _
  %s6 = ssub.s32 1, %s4
  %s7 = scalar_select 0, %s6, %s4
  // Predicated region
  $region2: #{convolution_network.8} parent=0 // pred_check
    _
  $region3: #{convolution_network.8} parent=0 // pred_check_branch
    %9 = sbr.rel (0) target = $region5
  $region4: #{convolution_network.8} parent=0 // pred_region
    _
  $region5: #{convolution_network.8} parent=0 // pred_fallthru
    _
  // Predicated region
  $region6: #{convolution_network.8} parent=0 // pred_check
    _
  $region7: #{convolution_network.8} parent=0 // pred_check_branch
    %11 = sbr.rel (0) target = $region9
  $region8: #{convolution_network.8} parent=0 // pred_region
    _
  $region9: #{convolution_network.8} parent=0 // pred_fallthru
    _
  // Predicated region
  $region10: #{convolution_network.8} parent=0 // pred_check
    _
  $region11: #{convolution_network.8} parent=0 // pred_check_branch
    %13 = sbr.rel (0) target = $region13
  $region12: #{convolution_network.8} parent=0 // pred_region
    _
  $region13: #{convolution_network.8} parent=0 // pred_fallthru
    _
  %v15 = vld [vmem:[%s0] sm:$0xff]
  %v16 = vld [vmem:[%s0 + $0x8] sm:$0xff]
  %v17 = vld [vmem:[%s0 + $0x10] sm:$0xf]
  %v18 = vld [vmem:[%s0 + $0x14] sm:$0xff]
  %v19 = vld [vmem:[%s0 + $0x1c] sm:$0xff]
  %v20 = vld [vmem:[%s0 + $0x24] sm:$0xf]
  %v21 = vld [vmem:[%s0 + $0x28] sm:$0xff]
  %v22 = vld [vmem:[%s0 + $0x30] sm:$0xff]
  %v23 = vld [vmem:[%s0 + $0x38] sm:$0xf]
  %v24 = vld [vmem:[%s0 + $0x3c] sm:$0xff]
  %v25 = vld [vmem:[%s0 + $0x44] sm:$0xff]
  %v26 = vld [vmem:[%s0 + $0x4c] sm:$0xf]
  %v27 = vld [vmem:[%s1] sm:$0xf]
  %v28 = vld [vmem:[%s1 + $0x4] sm:$0xf]
  %v29 = vld [vmem:[%s1 + $0x8] sm:$0xf]
  %v30 = vld [vmem:[%s1 + $0xc] sm:$0xf]
  %v31 = vld [vmem:[%s1 + $0x10] sm:$0xf]
  %v32 = vld [vmem:[%s1 + $0x14] sm:$0xf]
  %v33 = vld [vmem:[%s1 + $0x18] sm:$0xf]
  %v34 = vld [vmem:[%s1 + $0x1c] sm:$0xf]
  %v35 = vld [vmem:[%s1 + $0x20] sm:$0xf]
  %v36 = vld [vmem:[%s1 + $0x24] sm:$0xf]
  %v37 = vld [vmem:[%s1 + $0x28] sm:$0xf]
  %v38 = vld [vmem:[%s1 + $0x2c] sm:$0xf]
  %v39 = vld [vmem:[%s1 + $0x30] sm:$0xf]
  %v40 = vld [vmem:[%s1 + $0x34] sm:$0xf]
  %v41 = vld [vmem:[%s1 + $0x38] sm:$0xf]
  %v42 = vld [vmem:[%s1 + $0x3c] sm:$0xf]
  %v43 = vld [vmem:[%s1 + $0x40] sm:$0xf]
  %v44 = vld [vmem:[%s1 + $0x44] sm:$0xf]
  %v45 = vld [vmem:[%s1 + $0x48] sm:$0xf]
  %v46 = vld [vmem:[%s1 + $0x4c] sm:$0xf]
  %v47 = vld [vmem:[%s1 + $0x50] sm:$0xf]
  %v48 = vld [vmem:[%s1 + $0x54] sm:$0xf]
  %v49 = vld [vmem:[%s1 + $0x58] sm:$0xf]
  %v50 = vld [vmem:[%s1 + $0x5c] sm:$0xf]
  %v51 = vld [vmem:[%s1 + $0x60] sm:$0xf]
  %v52 = vld [vmem:[%s1 + $0x64] sm:$0xf]
  %v53 = vld [vmem:[%s1 + $0x68] sm:$0xf]
  %v54 = vld [vmem:[%s1 + $0x6c] sm:$0xf]
  %v55 = vld [vmem:[%s1 + $0x70] sm:$0xf]
  %v56 = vld [vmem:[%s1 + $0x74] sm:$0xf]
  %v57 = vld [vmem:[%s1 + $0x78] sm:$0xf]
  %v58 = vld [vmem:[%s1 + $0x7c] sm:$0xf]
  %v59 = vld [vmem:[%s1 + $0x80] sm:$0xf]
  %v60 = vld [vmem:[%s1 + $0x84] sm:$0xf]
  %v61 = vld [vmem:[%s1 + $0x88] sm:$0xf]
  %v62 = vld [vmem:[%s1 + $0x8c] sm:$0xf]
  %v63 = vld [vmem:[%s1 + $0x90] sm:$0xf]
  %v64 = vld [vmem:[%s1 + $0x94] sm:$0xf]
  %v65 = vld [vmem:[%s1 + $0x98] sm:$0xf]
  %v66 = vld [vmem:[%s1 + $0x9c] sm:$0xf]
  %v67 = vld [vmem:[%s1 + $0xa0] sm:$0xf]
  %v68 = vld [vmem:[%s1 + $0xa4] sm:$0xf]
  %v69 = vld [vmem:[%s1 + $0xa8] sm:$0xf]
  %v70 = vld [vmem:[%s1 + $0xac] sm:$0xf]
  %v71 = vld [vmem:[%s1 + $0xb0] sm:$0xf]
  %v72 = vld [vmem:[%s1 + $0xb4] sm:$0xf]
  %v73 = vld [vmem:[%s1 + $0xb8] sm:$0xf]
  %v74 = vld [vmem:[%s1 + $0xbc] sm:$0xf]
  %v75 = vld [vmem:[%s1 + $0xc0] sm:$0xf]
  %v76 = vld [vmem:[%s1 + $0xc4] sm:$0xf]
  %v77 = vld [vmem:[%s1 + $0xc8] sm:$0xf]
  %v78 = vld [vmem:[%s1 + $0xcc] sm:$0xf]
  %v79 = vld [vmem:[%s1 + $0xd0] sm:$0xf]
  %v80 = vld [vmem:[%s1 + $0xd4] sm:$0xf]
  %v81 = vld [vmem:[%s1 + $0xd8] sm:$0xf]
  %v82 = vld [vmem:[%s1 + $0xdc] sm:$0xf]
  %v83 = vld [vmem:[%s1 + $0xe0] sm:$0xf]
  %v84 = vld [vmem:[%s1 + $0xe4] sm:$0xf]
  %v85 = vld [vmem:[%s1 + $0xe8] sm:$0xf]
  %v86 = vld [vmem:[%s1 + $0xec] sm:$0xf]
  %v87 = vld [vmem:[%s1 + $0xf0] sm:$0xf]
  %v88 = vld [vmem:[%s1 + $0xf4] sm:$0xf]
  %v89 = vld [vmem:[%s1 + $0xf8] sm:$0xf]
  %v90 = vld [vmem:[%s1 + $0xfc] sm:$0xf]
  %v91 = vld [vmem:[%s1 + $0x100] sm:$0xf]
  %v92 = vld [vmem:[%s1 + $0x104] sm:$0xf]
  %v93 = vld [vmem:[%s1 + $0x108] sm:$0xf]
  %v94 = vld [vmem:[%s1 + $0x10c] sm:$0xf]
  %v95 = vld [vmem:[%s1 + $0x110] sm:$0xf]
  %v96 = vld [vmem:[%s1 + $0x114] sm:$0xf]
  %v97 = vld [vmem:[%s1 + $0x118] sm:$0xf]
  %v98 = vld [vmem:[%s1 + $0x11c] sm:$0xf]
  %v99 = vld [vmem:[%s2] sm:$0xff]
  %v100 = vld [vmem:[%s2 + $0x8] sm:$0xff]
  %v101 = vld [vmem:[%s2 + $0x10] sm:$0xff]
  %v102 = vld [vmem:[%s2 + $0x18] sm:$0xff]
  %104 = vset.pattern.permute.xlu0 0
  %105 = vperm.xlu0 %104, %v99
  %v106 = vpop.permute.xlu0 %105
  %109 = vset.pattern.permute.xlu0 0
  %110 = vperm.xlu0 %109, %v100
  %v111 = vpop.permute.xlu0 %110
  %114 = vset.pattern.permute.xlu0 0
  %115 = vperm.xlu0 %114, %v101
  %v116 = vpop.permute.xlu0 %115
  %119 = vset.pattern.permute.xlu0 0
  %120 = vperm.xlu0 %119, %v102
  %v121 = vpop.permute.xlu0 %120
  %v135 = vunpack.c.l.b16 %v15
  %v136 = vunpack.c.h.b16 %v15
  %v137 = vunpack.c.l.b16 %v16
  %v138 = vunpack.c.h.b16 %v16
  %v139 = vunpack.c.l.b16 %v17
  %v140 = vunpack.c.l.b16 %v18
  %v141 = vunpack.c.h.b16 %v18
  %v142 = vunpack.c.l.b16 %v19
  %v143 = vunpack.c.h.b16 %v19
  %v144 = vunpack.c.l.b16 %v20
  %v145 = vunpack.c.l.b16 %v21
  %v146 = vunpack.c.h.b16 %v21
  %v147 = vunpack.c.l.b16 %v22
  %v148 = vunpack.c.h.b16 %v22
  %v149 = vunpack.c.l.b16 %v23
  %v150 = vunpack.c.l.b16 %v24
  %v151 = vunpack.c.h.b16 %v24
  %v152 = vunpack.c.l.b16 %v25
  %v153 = vunpack.c.h.b16 %v25
  %v154 = vunpack.c.l.b16 %v26
  %v155 = vpack.c.b16 %v140, %v135
  %v156 = vpack.c.b16 %v141, %v136
  %v157 = vpack.c.b16 %v142, %v137
  %v158 = vpack.c.b16 %v143, %v138
  %v159 = vpack.c.b16 %v144, %v139
  %v160 = vpack.c.b16 %v150, %v145
  %v161 = vpack.c.b16 %v151, %v146
  %v162 = vpack.c.b16 %v152, %v147
  %v163 = vpack.c.b16 %v153, %v148
  %v164 = vpack.c.b16 %v154, %v149
  %v245 = vunpack.c.l.b16 %v27
  %v246 = vunpack.c.l.b16 %v28
  %v247 = vunpack.c.l.b16 %v29
  %v248 = vunpack.c.l.b16 %v30
  %v249 = vunpack.c.l.b16 %v31
  %v250 = vunpack.c.l.b16 %v32
  %v251 = vunpack.c.l.b16 %v33
  %v252 = vunpack.c.l.b16 %v34
  %v253 = vunpack.c.l.b16 %v35
  %v254 = vunpack.c.l.b16 %v36
  %v255 = vunpack.c.l.b16 %v37
  %v256 = vunpack.c.l.b16 %v38
  %v257 = vunpack.c.l.b16 %v39
  %v258 = vunpack.c.l.b16 %v40
  %v259 = vunpack.c.l.b16 %v41
  %v260 = vunpack.c.l.b16 %v42
  %v261 = vunpack.c.l.b16 %v43
  %v262 = vunpack.c.l.b16 %v44
  %v263 = vunpack.c.l.b16 %v45
  %v264 = vunpack.c.l.b16 %v46
  %v265 = vunpack.c.l.b16 %v47
  %v266 = vunpack.c.l.b16 %v48
  %v267 = vunpack.c.l.b16 %v49
  %v268 = vunpack.c.l.b16 %v50
  %v269 = vunpack.c.l.b16 %v51
  %v270 = vunpack.c.l.b16 %v52
  %v271 = vunpack.c.l.b16 %v53
  %v272 = vunpack.c.l.b16 %v54
  %v273 = vunpack.c.l.b16 %v55
  %v274 = vunpack.c.l.b16 %v56
  %v275 = vunpack.c.l.b16 %v57
  %v276 = vunpack.c.l.b16 %v58
  %v277 = vunpack.c.l.b16 %v59
  %v278 = vunpack.c.l.b16 %v60
  %v279 = vunpack.c.l.b16 %v61
  %v280 = vunpack.c.l.b16 %v62
  %v281 = vunpack.c.l.b16 %v63
  %v282 = vunpack.c.l.b16 %v64
  %v283 = vunpack.c.l.b16 %v65
  %v284 = vunpack.c.l.b16 %v66
  %v285 = vunpack.c.l.b16 %v67
  %v286 = vunpack.c.l.b16 %v68
  %v287 = vunpack.c.l.b16 %v69
  %v288 = vunpack.c.l.b16 %v70
  %v289 = vunpack.c.l.b16 %v71
  %v290 = vunpack.c.l.b16 %v72
  %v291 = vunpack.c.l.b16 %v73
  %v292 = vunpack.c.l.b16 %v74
  %v293 = vunpack.c.l.b16 %v75
  %v294 = vunpack.c.l.b16 %v76
  %v295 = vunpack.c.l.b16 %v77
  %v296 = vunpack.c.l.b16 %v78
  %v297 = vunpack.c.l.b16 %v79
  %v298 = vunpack.c.l.b16 %v80
  %v299 = vunpack.c.l.b16 %v81
  %v300 = vunpack.c.l.b16 %v82
  %v301 = vunpack.c.l.b16 %v83
  %v302 = vunpack.c.l.b16 %v84
  %v303 = vunpack.c.l.b16 %v85
  %v304 = vunpack.c.l.b16 %v86
  %v305 = vunpack.c.l.b16 %v87
  %v306 = vunpack.c.l.b16 %v88
  %v307 = vunpack.c.l.b16 %v89
  %v308 = vunpack.c.l.b16 %v90
  %v309 = vunpack.c.l.b16 %v91
  %v310 = vunpack.c.l.b16 %v92
  %v311 = vunpack.c.l.b16 %v93
  %v312 = vunpack.c.l.b16 %v94
  %v313 = vunpack.c.l.b16 %v95
  %v314 = vunpack.c.l.b16 %v96
  %v315 = vunpack.c.l.b16 %v97
  %v316 = vunpack.c.l.b16 %v98
  %v317 = vpack.c.b16 %v246, %v245
  %v318 = vpack.c.b16 %v248, %v247
  %v319 = vpack.c.b16 %v250, %v249
  %v320 = vpack.c.b16 %v252, %v251
  %v321 = vpack.c.b16 %v254, %v253
  %v322 = vpack.c.b16 %v256, %v255
  %v323 = vpack.c.b16 %v258, %v257
  %v324 = vpack.c.b16 %v260, %v259
  %v325 = vpack.c.b16 %v262, %v261
  %v326 = vpack.c.b16 %v264, %v263
  %v327 = vpack.c.b16 %v266, %v265
  %v328 = vpack.c.b16 %v268, %v267
  %v329 = vpack.c.b16 %v270, %v269
  %v330 = vpack.c.b16 %v272, %v271
  %v331 = vpack.c.b16 %v274, %v273
  %v332 = vpack.c.b16 %v276, %v275
  %v333 = vpack.c.b16 %v278, %v277
  %v334 = vpack.c.b16 %v280, %v279
  %v335 = vpack.c.b16 %v282, %v281
  %v336 = vpack.c.b16 %v284, %v283
  %v337 = vpack.c.b16 %v286, %v285
  %v338 = vpack.c.b16 %v288, %v287
  %v339 = vpack.c.b16 %v290, %v289
  %v340 = vpack.c.b16 %v292, %v291
  %v341 = vpack.c.b16 %v294, %v293
  %v342 = vpack.c.b16 %v296, %v295
  %v343 = vpack.c.b16 %v298, %v297
  %v344 = vpack.c.b16 %v300, %v299
  %v345 = vpack.c.b16 %v302, %v301
  %v346 = vpack.c.b16 %v304, %v303
  %v347 = vpack.c.b16 %v306, %v305
  %v348 = vpack.c.b16 %v308, %v307
  %v349 = vpack.c.b16 %v310, %v309
  %v350 = vpack.c.b16 %v312, %v311
  %v351 = vpack.c.b16 %v314, %v313
  %v352 = vpack.c.b16 %v316, %v315
  %vm389 = vcmask 523264
  %v391 = vsel %vm389, %v159, 0
  %v394 = vsel %vm389, %v164, 0
  %396 = vmatprep.subr.bf16.mxu0 0
  %397 = vmatpush1.bf16.msra.mxu0 %v317
  %398 = vmatprep.subr.bf16.mxu0 0
  %399 = vmatpush1.bf16.msra.mxu0 %v318
  %400 = vmatprep.subr.bf16.mxu0 0
  %401 = vmatpush1.bf16.msra.mxu0 %v319
  %402 = vmatprep.subr.bf16.mxu0 0
  %403 = vmatpush1.bf16.msra.mxu0 %v320
  %404 = vmatprep.subr.bf16.mxu0 0
  %405 = vmatpush1.bf16.msra.mxu0 %v321
  %406 = vmatprep.subr.bf16.mxu0 0
  %407 = vmatpush1.bf16.msra.mxu0 %v322
  %408 = vmatprep.subr.bf16.mxu0 0
  %409 = vmatpush1.bf16.msra.mxu0 %v323
  %410 = vmatprep.subr.bf16.mxu0 0
  %411 = vmatpush1.bf16.msra.mxu0 %v324
  %412 = vmatprep.subr.bf16.mxu0 0
  %413 = vmatpush1.bf16.msra.mxu0 %v325
  %414 = vmatprep.subr.bf16.mxu0 0
  %415 = vmatpush1.bf16.msra.mxu0 %v326
  %416 = vmatprep.subr.bf16.mxu0 0
  %417 = vmatpush1.bf16.msra.mxu0 %v327
  %418 = vmatprep.subr.bf16.mxu0 0
  %419 = vmatpush1.bf16.msra.mxu0 %v328
  %420 = vmatprep.subr.bf16.mxu0 0
  %421 = vmatpush1.bf16.msra.mxu0 %v329
  %422 = vmatprep.subr.bf16.mxu0 0
  %423 = vmatpush1.bf16.msra.mxu0 %v330
  %424 = vmatprep.subr.bf16.mxu0 0
  %425 = vmatpush1.bf16.msra.mxu0 %v331
  %426 = vmatprep.subr.bf16.mxu0 0
  %427 = vmatpush1.bf16.msra.mxu0 %v332
  %428 = vmatprep.mubr.bf16.mxu0 %v156
  %429 = vmatmul.mubr.bf16.gmra.mrb[0].mxu0 %v155
  %v430 = vpop.f32.mrb[0].mxu0
  %v431 = vadd.f32 %v106, %v430
  %v432 = vpop.f32.mrb[0].mxu0
  %v433 = vpop.f32.mrb[0].mxu0
  %v434 = vadd.f32 %v111, %v433
  %v435 = vpop.f32.mrb[0].mxu0
  %436 = vmatprep.mubr.bf16.mxu0 %v161
  %437 = vmatmul.mubr.bf16.gmra.mrb[0].mxu0 %v160
  %v438 = vpop.f32.mrb[0].mxu0
  %v439 = vadd.f32 %v116, %v438
  %v440 = vpop.f32.mrb[0].mxu0
  %v441 = vpop.f32.mrb[0].mxu0
  %v442 = vadd.f32 %v121, %v441
  %v443 = vpop.f32.mrb[0].mxu0
  %444 = vdwg.mxu0
  %445 = vmatprep.subr.bf16.mxu0 0
  %446 = vmatpush1.bf16.msra.mxu0 %v333
  %447 = vmatprep.subr.bf16.mxu0 0
  %448 = vmatpush1.bf16.msra.mxu0 %v334
  %449 = vmatprep.subr.bf16.mxu0 0
  %450 = vmatpush1.bf16.msra.mxu0 %v335
  %451 = vmatprep.subr.bf16.mxu0 0
  %452 = vmatpush1.bf16.msra.mxu0 %v336
  %453 = vmatprep.subr.bf16.mxu0 0
  %454 = vmatpush1.bf16.msra.mxu0 %v337
  %455 = vmatprep.subr.bf16.mxu0 0
  %456 = vmatpush1.bf16.msra.mxu0 %v338
  %457 = vmatprep.subr.bf16.mxu0 0
  %458 = vmatpush1.bf16.msra.mxu0 %v339
  %459 = vmatprep.subr.bf16.mxu0 0
  %460 = vmatpush1.bf16.msra.mxu0 %v340
  %461 = vmatprep.subr.bf16.mxu0 0
  %462 = vmatpush1.bf16.msra.mxu0 %v341
  %463 = vmatprep.subr.bf16.mxu0 0
  %464 = vmatpush1.bf16.msra.mxu0 %v342
  %465 = vmatprep.subr.bf16.mxu0 0
  %466 = vmatpush1.bf16.msra.mxu0 %v343
  %467 = vmatprep.subr.bf16.mxu0 0
  %468 = vmatpush1.bf16.msra.mxu0 %v344
  %469 = vmatprep.subr.bf16.mxu0 0
  %470 = vmatpush1.bf16.msra.mxu0 %v345
  %471 = vmatprep.subr.bf16.mxu0 0
  %472 = vmatpush1.bf16.msra.mxu0 %v346
  %473 = vmatprep.subr.bf16.mxu0 0
  %474 = vmatpush1.bf16.msra.mxu0 %v347
  %475 = vmatprep.subr.bf16.mxu0 0
  %476 = vmatpush1.bf16.msra.mxu0 %v348
  %477 = vmatprep.mubr.bf16.mxu0 %v158
  %478 = vmatmul.mubr.bf16.gmra.mrb[0].mxu0 %v157
  %v479 = vpop.f32.mrb[0].mxu0
  %v480 = vadd.f32 %v431, %v479
  %v481 = vpop.f32.mrb[0].mxu0
  %v482 = vpop.f32.mrb[0].mxu0
  %v483 = vadd.f32 %v434, %v482
  %v484 = vpop.f32.mrb[0].mxu0
  %485 = vmatprep.mubr.bf16.mxu0 %v163
  %486 = vmatmul.mubr.bf16.gmra.mrb[0].mxu0 %v162
  %v487 = vpop.f32.mrb[0].mxu0
  %v488 = vadd.f32 %v439, %v487
  %v489 = vpop.f32.mrb[0].mxu0
  %v490 = vpop.f32.mrb[0].mxu0
  %v491 = vadd.f32 %v442, %v490
  %v492 = vpop.f32.mrb[0].mxu0
  %493 = vdwg.mxu0
  %494 = vmatprep.subr.bf16.mxu0 0
  %495 = vmatpush1.bf16.msra.mxu0 %v349
  %496 = vmatprep.subr.bf16.mxu0 0
  %497 = vmatpush1.bf16.msra.mxu0 %v350
  %498 = vmatprep.subr.bf16.mxu0 0
  %499 = vmatpush1.bf16.msra.mxu0 %v351
  %500 = vmatprep.subr.bf16.mxu0 0
  %501 = vmatpush1.bf16.msra.mxu0 %v352
  %502 = vmatprep.subr.bf16.mxu0 0
  %503 = vmatpush1.bf16.msra.mxu0 0
  %504 = vmatprep.subr.bf16.mxu0 0
  %505 = vmatpush1.bf16.msra.mxu0 0
  %506 = vmatprep.subr.bf16.mxu0 0
  %507 = vmatpush1.bf16.msra.mxu0 0
  %508 = vmatprep.subr.bf16.mxu0 0
  %509 = vmatpush1.bf16.msra.mxu0 0
  %510 = vmatprep.subr.bf16.mxu0 0
  %511 = vmatpush1.bf16.msra.mxu0 0
  %512 = vmatprep.subr.bf16.mxu0 0
  %513 = vmatpush1.bf16.msra.mxu0 0
  %514 = vmatprep.subr.bf16.mxu0 0
  %515 = vmatpush1.bf16.msra.mxu0 0
  %516 = vmatprep.subr.bf16.mxu0 0
  %517 = vmatpush1.bf16.msra.mxu0 0
  %518 = vmatprep.subr.bf16.mxu0 0
  %519 = vmatpush1.bf16.msra.mxu0 0
  %520 = vmatprep.subr.bf16.mxu0 0
  %521 = vmatpush1.bf16.msra.mxu0 0
  %522 = vmatprep.subr.bf16.mxu0 0
  %523 = vmatpush1.bf16.msra.mxu0 0
  %524 = vmatprep.subr.bf16.mxu0 0
  %525 = vmatpush1.bf16.msra.mxu0 0
  %526 = vmatprep.mubr.bf16.mxu0 0
  %527 = vmatmul.mubr.bf16.gmra.mrb[0].mxu0 %v391
  %v528 = vpop.f32.mrb[0].mxu0
  %v529 = vadd.f32 %v480, %v528
  %v530 = vpop.f32.mrb[0].mxu0
  %v531 = vpop.f32.mrb[0].mxu0
  %v532 = vadd.f32 %v483, %v531
  %v533 = vpop.f32.mrb[0].mxu0
  %534 = vmatprep.mubr.bf16.mxu0 0
  %535 = vmatmul.mubr.bf16.gmra.mrb[0].mxu0 %v394
  %v536 = vpop.f32.mrb[0].mxu0
  %v537 = vadd.f32 %v488, %v536
  %v538 = vpop.f32.mrb[0].mxu0
  %v539 = vpop.f32.mrb[0].mxu0
  %v540 = vadd.f32 %v491, %v539
  %v541 = vpop.f32.mrb[0].mxu0
  %542 = vdwg.mxu0
  %v543 = vmax.f32 %v529, 0.0
  %v544 = vmax.f32 %v532, 0.0
  %v545 = vmax.f32 %v537, 0.0
  %v546 = vmax.f32 %v540, 0.0
  %v547 = vpack.c.bf16 %v544, %v543
  %v548 = vpack.c.bf16 %v546, %v545
  %v551 = vunpack.c.l.b16 %v547
  %v552 = vunpack.c.h.b16 %v547
  %v553 = vunpack.c.l.b16 %v548
  %v554 = vunpack.c.h.b16 %v548
  %v555 = vpack.c.b16 %v551, %v551
  %v556 = vpack.c.b16 %v552, %v552
  %v557 = vpack.c.b16 %v553, %v553
  %v558 = vpack.c.b16 %v554, %v554
  %563 = vst [vmem:[%s3] sm:$0xf] %v555
  %564 = vst [vmem:[%s3 + $0x4] sm:$0xf] %v556
  %565 = vst [vmem:[%s3 + $0x8] sm:$0xf] %v557
  %566 = vst [vmem:[%s3 + $0xc] sm:$0xf] %v558
  // Predicated region
  $region14: #{convolution_network.8} parent=0 // pred_check
    _
  $region15: #{convolution_network.8} parent=0 // pred_check_branch
    %568 = sbr.rel (0) target = $region17
  $region16: #{convolution_network.8} parent=0 // pred_region
    _
  $region17: #{convolution_network.8} parent=0 // pred_fallthru
    _
  // Predicated region
  $region18: #{convolution_network.8} parent=0 // pred_check
    _
  $region19: #{convolution_network.8} parent=0 // pred_check_branch
    %570 = sbr.rel (0) target = $region21
  $region20: #{convolution_network.8} parent=0 // pred_region
    _
  $region21: #{convolution_network.8} parent=0 // pred_fallthru
    _

// kernel: convolution_network.9
$region0: #{convolution_network.9}
  #allocation0 [shape = 'u32[]', space=smem, size = 0x4, offset = 0x4, fixed_abs, tag = 'smem constant byte address 0x4 - core index']
  #allocation1 [shape = 'u32[144,128]{1,0:T(1,128)}', space=vmem, size = 0x12000, scoped, tag = 'internal scratch']
  %s0 = inlined_call_operand.vmem [shape: bf16[10,1568], index: 0, kind: input, shape index: {}]
  %s1 = inlined_call_operand.vmem [shape: bf16[1568,128], index: 1, kind: input, shape index: {}]
  %s2 = inlined_call_operand.vmem [shape: f32[10,1], index: 2, kind: input, shape index: {}]
  %s3 = inlined_call_operand.vmem [shape: f32[10,128], index: 3, kind: output, shape index: {}]
  %s4 = sld [smem:[#allocation0]]
  $region22: #{convolution_network.9} parent=0
    _
  %s6 = ssub.s32 1, %s4
  %s7 = scalar_select 0, %s6, %s4
  // Predicated region
  $region2: #{convolution_network.9} parent=0 // pred_check
    _
  $region3: #{convolution_network.9} parent=0 // pred_check_branch
    %9 = sbr.rel (0) target = $region5
  $region4: #{convolution_network.9} parent=0 // pred_region
    _
  $region5: #{convolution_network.9} parent=0 // pred_fallthru
    _
  // Predicated region
  $region6: #{convolution_network.9} parent=0 // pred_check
    _
  $region7: #{convolution_network.9} parent=0 // pred_check_branch
    %11 = sbr.rel (0) target = $region9
  $region8: #{convolution_network.9} parent=0 // pred_region
    _
  $region9: #{convolution_network.9} parent=0 // pred_fallthru
    _
  // Predicated region
  $region10: #{convolution_network.9} parent=0 // pred_check
    _
  $region11: #{convolution_network.9} parent=0 // pred_check_branch
    %13 = sbr.rel (0) target = $region13
  $region12: #{convolution_network.9} parent=0 // pred_region
    _
  $region13: #{convolution_network.9} parent=0 // pred_fallthru
    _
  %v15 = vld [vmem:[%s0] sm:$0xff]
  %v16 = vld [vmem:[%s0 + $0x8] sm:$0xff]
  %v17 = vld [vmem:[%s0 + $0x10] sm:$0xff]
  %v18 = vld [vmem:[%s0 + $0x18] sm:$0xff]
  %v19 = vld [vmem:[%s0 + $0x20] sm:$0xff]
  %v20 = vld [vmem:[%s0 + $0x28] sm:$0xff]
  %v21 = vld [vmem:[%s0 + $0x30] sm:$0xf]
  %v22 = vld [vmem:[%s0 + $0x34] sm:$0x11]
  %v23 = vld [vmem:[%s0 + $0x3c] sm:$0x11]
  %v24 = vld [vmem:[%s0 + $0x44] sm:$0x11]
  %v25 = vld [vmem:[%s0 + $0x4c] sm:$0x11]
  %v26 = vld [vmem:[%s0 + $0x54] sm:$0x11]
  %v27 = vld [vmem:[%s0 + $0x5c] sm:$0x11]
  %v28 = vld [vmem:[%s0 + $0x64] sm:$0x1]
  %v29 = vld [vmem:[%s1] sm:$0xf]
  %v30 = vld [vmem:[%s1 + $0x4] sm:$0xf]
  %v31 = vld [vmem:[%s1 + $0x8] sm:$0xf]
  %v32 = vld [vmem:[%s1 + $0xc] sm:$0xf]
  %v33 = vld [vmem:[%s1 + $0x10] sm:$0xf]
  %v34 = vld [vmem:[%s1 + $0x14] sm:$0xf]
  %v35 = vld [vmem:[%s1 + $0x18] sm:$0xf]
  %v36 = vld [vmem:[%s1 + $0x1c] sm:$0xf]
  %v37 = vld [vmem:[%s1 + $0x20] sm:$0xf]
  %v38 = vld [vmem:[%s1 + $0x24] sm:$0xf]
  %v39 = vld [vmem:[%s1 + $0x28] sm:$0xf]
  %v40 = vld [vmem:[%s1 + $0x2c] sm:$0xf]
  %v41 = vld [vmem:[%s1 + $0x30] sm:$0xf]
  %v42 = vld [vmem:[%s1 + $0x34] sm:$0xf]
  %v43 = vld [vmem:[%s1 + $0x38] sm:$0xf]
  %v44 = vld [vmem:[%s1 + $0x3c] sm:$0xf]
  %v45 = vld [vmem:[%s1 + $0x40] sm:$0xf]
  %v46 = vld [vmem:[%s1 + $0x44] sm:$0xf]
  %v47 = vld [vmem:[%s1 + $0x48] sm:$0xf]
  %v48 = vld [vmem:[%s1 + $0x4c] sm:$0xf]
  %v49 = vld [vmem:[%s1 + $0x50] sm:$0xf]
  %v50 = vld [vmem:[%s1 + $0x54] sm:$0xf]
  %v51 = vld [vmem:[%s1 + $0x58] sm:$0xf]
  %v52 = vld [vmem:[%s1 + $0x5c] sm:$0xf]
  %v53 = vld [vmem:[%s1 + $0x60] sm:$0xf]
  %v54 = vld [vmem:[%s1 + $0x64] sm:$0xf]
  %v55 = vld [vmem:[%s1 + $0x68] sm:$0xf]
  %v56 = vld [vmem:[%s1 + $0x6c] sm:$0xf]
  %v57 = vld [vmem:[%s1 + $0x70] sm:$0xf]
  %v58 = vld [vmem:[%s1 + $0x74] sm:$0xf]
  %v59 = vld [vmem:[%s1 + $0x78] sm:$0xf]
  %v60 = vld [vmem:[%s1 + $0x7c] sm:$0xf]
  %v61 = vld [vmem:[%s1 + $0x80] sm:$0xf]
  %v62 = vld [vmem:[%s1 + $0x84] sm:$0xf]
  %v63 = vld [vmem:[%s1 + $0x88] sm:$0xf]
  %v64 = vld [vmem:[%s1 + $0x8c] sm:$0xf]
  %v65 = vld [vmem:[%s1 + $0x90] sm:$0xf]
  %v66 = vld [vmem:[%s1 + $0x94] sm:$0xf]
  %v67 = vld [vmem:[%s1 + $0x98] sm:$0xf]
  %v68 = vld [vmem:[%s1 + $0x9c] sm:$0xf]
  %v69 = vld [vmem:[%s1 + $0xa0] sm:$0xf]
  %v70 = vld [vmem:[%s1 + $0xa4] sm:$0xf]
  %v71 = vld [vmem:[%s1 + $0xa8] sm:$0xf]
  %v72 = vld [vmem:[%s1 + $0xac] sm:$0xf]
  %v73 = vld [vmem:[%s1 + $0xb0] sm:$0xf]
  %v74 = vld [vmem:[%s1 + $0xb4] sm:$0xf]
  %v75 = vld [vmem:[%s1 + $0xb8] sm:$0xf]
  %v76 = vld [vmem:[%s1 + $0xbc] sm:$0xf]
  %v77 = vld [vmem:[%s1 + $0xc0] sm:$0xf]
  %v78 = vld [vmem:[%s1 + $0xc4] sm:$0xf]
  %v79 = vld [vmem:[%s1 + $0xc8] sm:$0xf]
  %v80 = vld [vmem:[%s1 + $0xcc] sm:$0xf]
  %v81 = vld [vmem:[%s1 + $0xd0] sm:$0xf]
  %v82 = vld [vmem:[%s1 + $0xd4] sm:$0xf]
  %v83 = vld [vmem:[%s1 + $0xd8] sm:$0xf]
  %v84 = vld [vmem:[%s1 + $0xdc] sm:$0xf]
  %v85 = vld [vmem:[%s1 + $0xe0] sm:$0xf]
  %v86 = vld [vmem:[%s1 + $0xe4] sm:$0xf]
  %v87 = vld [vmem:[%s1 + $0xe8] sm:$0xf]
  %v88 = vld [vmem:[%s1 + $0xec] sm:$0xf]
  %v89 = vld [vmem:[%s1 + $0xf0] sm:$0xf]
  %v90 = vld [vmem:[%s1 + $0xf4] sm:$0xf]
  %v91 = vld [vmem:[%s1 + $0xf8] sm:$0xf]
  %v92 = vld [vmem:[%s1 + $0xfc] sm:$0xf]
  %v93 = vld [vmem:[%s1 + $0x100] sm:$0xf]
  %v94 = vld [vmem:[%s1 + $0x104] sm:$0xf]
  %v95 = vld [vmem:[%s1 + $0x108] sm:$0xf]
  %v96 = vld [vmem:[%s1 + $0x10c] sm:$0xf]
  %v97 = vld [vmem:[%s1 + $0x110] sm:$0xf]
  %v98 = vld [vmem:[%s1 + $0x114] sm:$0xf]
  %v99 = vld [vmem:[%s1 + $0x118] sm:$0xf]
  %v100 = vld [vmem:[%s1 + $0x11c] sm:$0xf]
  %v101 = vld [vmem:[%s1 + $0x120] sm:$0xf]
  %v102 = vld [vmem:[%s1 + $0x124] sm:$0xf]
  %v103 = vld [vmem:[%s1 + $0x128] sm:$0xf]
  %v104 = vld [vmem:[%s1 + $0x12c] sm:$0xf]
  %v105 = vld [vmem:[%s1 + $0x130] sm:$0xf]
  %v106 = vld [vmem:[%s1 + $0x134] sm:$0xf]
  %v107 = vld [vmem:[%s1 + $0x138] sm:$0xf]
  %v108 = vld [vmem:[%s1 + $0x13c] sm:$0xf]
  %v109 = vld [vmem:[%s1 + $0x140] sm:$0xf]
  %v110 = vld [vmem:[%s1 + $0x144] sm:$0xf]
  %v111 = vld [vmem:[%s1 + $0x148] sm:$0xf]
  %v112 = vld [vmem:[%s1 + $0x14c] sm:$0xf]
  %v113 = vld [vmem:[%s1 + $0x150] sm:$0xf]
  %v114 = vld [vmem:[%s1 + $0x154] sm:$0xf]
  %v115 = vld [vmem:[%s1 + $0x158] sm:$0xf]
  %v116 = vld [vmem:[%s1 + $0x15c] sm:$0xf]
  %v117 = vld [vmem:[%s1 + $0x160] sm:$0xf]
  %v118 = vld [vmem:[%s1 + $0x164] sm:$0xf]
  %v119 = vld [vmem:[%s1 + $0x168] sm:$0xf]
  %v120 = vld [vmem:[%s1 + $0x16c] sm:$0xf]
  %v121 = vld [vmem:[%s1 + $0x170] sm:$0xf]
  %v122 = vld [vmem:[%s1 + $0x174] sm:$0xf]
  %v123 = vld [vmem:[%s1 + $0x178] sm:$0xf]
  %v124 = vld [vmem:[%s1 + $0x17c] sm:$0xf]
  %v125 = vld [vmem:[%s1 + $0x180] sm:$0xf]
  %v126 = vld [vmem:[%s1 + $0x184] sm:$0xf]
  %v127 = vld [vmem:[%s1 + $0x188] sm:$0xf]
  %v128 = vld [vmem:[%s1 + $0x18c] sm:$0xf]
  %v129 = vld [vmem:[%s1 + $0x190] sm:$0xf]
  %v130 = vld [vmem:[%s1 + $0x194] sm:$0xf]
  %v131 = vld [vmem:[%s1 + $0x198] sm:$0xf]
  %v132 = vld [vmem:[%s1 + $0x19c] sm:$0xf]
  %v133 = vld [vmem:[%s1 + $0x1a0] sm:$0xf]
  %v134 = vld [vmem:[%s1 + $0x1a4] sm:$0xf]
  %v135 = vld [vmem:[%s1 + $0x1a8] sm:$0xf]
  %v136 = vld [vmem:[%s1 + $0x1ac] sm:$0xf]
  %v137 = vld [vmem:[%s1 + $0x1b0] sm:$0xf]
  %v138 = vld [vmem:[%s1 + $0x1b4] sm:$0xf]
  %v139 = vld [vmem:[%s1 + $0x1b8] sm:$0xf]
  %v140 = vld [vmem:[%s1 + $0x1bc] sm:$0xf]
  %v141 = vld [vmem:[%s1 + $0x1c0] sm:$0xf]
  %v142 = vld [vmem:[%s1 + $0x1c4] sm:$0xf]
  %v143 = vld [vmem:[%s1 + $0x1c8] sm:$0xf]
  %v144 = vld [vmem:[%s1 + $0x1cc] sm:$0xf]
  %v145 = vld [vmem:[%s1 + $0x1d0] sm:$0xf]
  %v146 = vld [vmem:[%s1 + $0x1d4] sm:$0xf]
  %v147 = vld [vmem:[%s1 + $0x1d8] sm:$0xf]
  %v148 = vld [vmem:[%s1 + $0x1dc] sm:$0xf]
  %v149 = vld [vmem:[%s1 + $0x1e0] sm:$0xf]
  %v150 = vld [vmem:[%s1 + $0x1e4] sm:$0xf]
  %v151 = vld [vmem:[%s1 + $0x1e8] sm:$0xf]
  %v152 = vld [vmem:[%s1 + $0x1ec] sm:$0xf]
  %v153 = vld [vmem:[%s1 + $0x1f0] sm:$0xf]
  %v154 = vld [vmem:[%s1 + $0x1f4] sm:$0xf]
  %v155 = vld [vmem:[%s1 + $0x1f8] sm:$0xf]
  %v156 = vld [vmem:[%s1 + $0x1fc] sm:$0xf]
  %v157 = vld [vmem:[%s1 + $0x200] sm:$0xf]
  %v158 = vld [vmem:[%s1 + $0x204] sm:$0xf]
  %v159 = vld [vmem:[%s1 + $0x208] sm:$0xf]
  %v160 = vld [vmem:[%s1 + $0x20c] sm:$0xf]
  %v161 = vld [vmem:[%s1 + $0x210] sm:$0xf]
  %v162 = vld [vmem:[%s1 + $0x214] sm:$0xf]
  %v163 = vld [vmem:[%s1 + $0x218] sm:$0xf]
  %v164 = vld [vmem:[%s1 + $0x21c] sm:$0xf]
  %v165 = vld [vmem:[%s1 + $0x220] sm:$0xf]
  %v166 = vld [vmem:[%s1 + $0x224] sm:$0xf]
  %v167 = vld [vmem:[%s1 + $0x228] sm:$0xf]
  %v168 = vld [vmem:[%s1 + $0x22c] sm:$0xf]
  %v169 = vld [vmem:[%s1 + $0x230] sm:$0xf]
  %v170 = vld [vmem:[%s1 + $0x234] sm:$0xf]
  %v171 = vld [vmem:[%s1 + $0x238] sm:$0xf]
  %v172 = vld [vmem:[%s1 + $0x23c] sm:$0xf]
  %v173 = vld [vmem:[%s1 + $0x240] sm:$0xf]
  %v174 = vld [vmem:[%s1 + $0x244] sm:$0xf]
  %v175 = vld [vmem:[%s1 + $0x248] sm:$0xf]
  %v176 = vld [vmem:[%s1 + $0x24c] sm:$0xf]
  %v177 = vld [vmem:[%s1 + $0x250] sm:$0xf]
  %v178 = vld [vmem:[%s1 + $0x254] sm:$0xf]
  %v179 = vld [vmem:[%s1 + $0x258] sm:$0xf]
  %v180 = vld [vmem:[%s1 + $0x25c] sm:$0xf]
  %v181 = vld [vmem:[%s1 + $0x260] sm:$0xf]
  %v182 = vld [vmem:[%s1 + $0x264] sm:$0xf]
  %v183 = vld [vmem:[%s1 + $0x268] sm:$0xf]
  %v184 = vld [vmem:[%s1 + $0x26c] sm:$0xf]
  %v185 = vld [vmem:[%s1 + $0x270] sm:$0xf]
  %v186 = vld [vmem:[%s1 + $0x274] sm:$0xf]
  %v187 = vld [vmem:[%s1 + $0x278] sm:$0xf]
  %v188 = vld [vmem:[%s1 + $0x27c] sm:$0xf]
  %v189 = vld [vmem:[%s1 + $0x280] sm:$0xf]
  %v190 = vld [vmem:[%s1 + $0x284] sm:$0xf]
  %v191 = vld [vmem:[%s1 + $0x288] sm:$0xf]
  %v192 = vld [vmem:[%s1 + $0x28c] sm:$0xf]
  %v193 = vld [vmem:[%s1 + $0x290] sm:$0xf]
  %v194 = vld [vmem:[%s1 + $0x294] sm:$0xf]
  %v195 = vld [vmem:[%s1 + $0x298] sm:$0xf]
  %v196 = vld [vmem:[%s1 + $0x29c] sm:$0xf]
  %v197 = vld [vmem:[%s1 + $0x2a0] sm:$0xf]
  %v198 = vld [vmem:[%s1 + $0x2a4] sm:$0xf]
  %v199 = vld [vmem:[%s1 + $0x2a8] sm:$0xf]
  %v200 = vld [vmem:[%s1 + $0x2ac] sm:$0xf]
  %v201 = vld [vmem:[%s1 + $0x2b0] sm:$0xf]
  %v202 = vld [vmem:[%s1 + $0x2b4] sm:$0xf]
  %v203 = vld [vmem:[%s1 + $0x2b8] sm:$0xf]
  %v204 = vld [vmem:[%s1 + $0x2bc] sm:$0xf]
  %v205 = vld [vmem:[%s1 + $0x2c0] sm:$0xf]
  %v206 = vld [vmem:[%s1 + $0x2c4] sm:$0xf]
  %v207 = vld [vmem:[%s1 + $0x2c8] sm:$0xf]
  %v208 = vld [vmem:[%s1 + $0x2cc] sm:$0xf]
  %v209 = vld [vmem:[%s1 + $0x2d0] sm:$0xf]
  %v210 = vld [vmem:[%s1 + $0x2d4] sm:$0xf]
  %v211 = vld [vmem:[%s1 + $0x2d8] sm:$0xf]
  %v212 = vld [vmem:[%s1 + $0x2dc] sm:$0xf]
  %v213 = vld [vmem:[%s1 + $0x2e0] sm:$0xf]
  %v214 = vld [vmem:[%s1 + $0x2e4] sm:$0xf]
  %v215 = vld [vmem:[%s1 + $0x2e8] sm:$0xf]
  %v216 = vld [vmem:[%s1 + $0x2ec] sm:$0xf]
  %v217 = vld [vmem:[%s1 + $0x2f0] sm:$0xf]
  %v218 = vld [vmem:[%s1 + $0x2f4] sm:$0xf]
  %v219 = vld [vmem:[%s1 + $0x2f8] sm:$0xf]
  %v220 = vld [vmem:[%s1 + $0x2fc] sm:$0xf]
  %v221 = vld [vmem:[%s1 + $0x300] sm:$0xf]
  %v222 = vld [vmem:[%s1 + $0x304] sm:$0xf]
  %v223 = vld [vmem:[%s1 + $0x308] sm:$0xf]
  %v224 = vld [vmem:[%s1 + $0x30c] sm:$0xf]
  %v225 = vld [vmem:[%s2] sm:$0xff]
  %v226 = vld [vmem:[%s2 + $0x8] sm:$0x3]
  %228 = vset.pattern.permute.xlu0 0
  %229 = vperm.xlu0 %228, %v225
  %v230 = vpop.permute.xlu0 %229
  %233 = vset.pattern.permute.xlu0 0
  %234 = vperm.xlu0 %233, %v226
  %v235 = vpop.permute.xlu0 %234
  %v251 = vunpack.c.l.b16 %v15
  %v252 = vunpack.c.h.b16 %v15
  %v253 = vunpack.c.l.b16 %v16
  %v254 = vunpack.c.h.b16 %v16
  %v255 = vunpack.c.l.b16 %v17
  %v256 = vunpack.c.h.b16 %v17
  %v257 = vunpack.c.l.b16 %v18
  %v258 = vunpack.c.h.b16 %v18
  %v259 = vunpack.c.l.b16 %v19
  %v260 = vunpack.c.h.b16 %v19
  %v261 = vunpack.c.l.b16 %v20
  %v262 = vunpack.c.h.b16 %v20
  %v263 = vunpack.c.l.b16 %v21
  %v264 = vunpack.c.l.b16 %v22
  %v265 = vunpack.c.h.b16 %v22
  %v266 = vunpack.c.l.b16 %v23
  %v267 = vunpack.c.h.b16 %v23
  %v268 = vunpack.c.l.b16 %v24
  %v269 = vunpack.c.h.b16 %v24
  %v270 = vunpack.c.l.b16 %v25
  %v271 = vunpack.c.h.b16 %v25
  %v272 = vunpack.c.l.b16 %v26
  %v273 = vunpack.c.h.b16 %v26
  %v274 = vunpack.c.l.b16 %v27
  %v275 = vunpack.c.h.b16 %v27
  %v276 = vunpack.c.l.b16 %v28
  %v277 = vpack.c.b16 %v264, %v251
  %v278 = vpack.c.b16 %v265, %v252
  %v279 = vpack.c.b16 %v266, %v253
  %v280 = vpack.c.b16 %v267, %v254
  %v281 = vpack.c.b16 %v268, %v255
  %v282 = vpack.c.b16 %v269, %v256
  %v283 = vpack.c.b16 %v270, %v257
  %v284 = vpack.c.b16 %v271, %v258
  %v285 = vpack.c.b16 %v272, %v259
  %v286 = vpack.c.b16 %v273, %v260
  %v287 = vpack.c.b16 %v274, %v261
  %v288 = vpack.c.b16 %v275, %v262
  %v289 = vpack.c.b16 %v276, %v263
  %v498 = vunpack.c.l.b16 %v29
  %v499 = vunpack.c.l.b16 %v30
  %v500 = vunpack.c.l.b16 %v31
  %v501 = vunpack.c.l.b16 %v32
  %v502 = vunpack.c.l.b16 %v33
  %v503 = vunpack.c.l.b16 %v34
  %v504 = vunpack.c.l.b16 %v35
  %v505 = vunpack.c.l.b16 %v36
  %v506 = vunpack.c.l.b16 %v37
  %v507 = vunpack.c.l.b16 %v38
  %v508 = vunpack.c.l.b16 %v39
  %v509 = vunpack.c.l.b16 %v40
  %v510 = vunpack.c.l.b16 %v41
  %v511 = vunpack.c.l.b16 %v42
  %v512 = vunpack.c.l.b16 %v43
  %v513 = vunpack.c.l.b16 %v44
  %v514 = vunpack.c.l.b16 %v45
  %v515 = vunpack.c.l.b16 %v46
  %v516 = vunpack.c.l.b16 %v47
  %v517 = vunpack.c.l.b16 %v48
  %v518 = vunpack.c.l.b16 %v49
  %v519 = vunpack.c.l.b16 %v50
  %v520 = vunpack.c.l.b16 %v51
  %v521 = vunpack.c.l.b16 %v52
  %v522 = vunpack.c.l.b16 %v53
  %v523 = vunpack.c.l.b16 %v54
  %v524 = vunpack.c.l.b16 %v55
  %v525 = vunpack.c.l.b16 %v56
  %v526 = vunpack.c.l.b16 %v57
  %v527 = vunpack.c.l.b16 %v58
  %v528 = vunpack.c.l.b16 %v59
  %v529 = vunpack.c.l.b16 %v60
  %v530 = vunpack.c.l.b16 %v61
  %v531 = vunpack.c.l.b16 %v62
  %v532 = vunpack.c.l.b16 %v63
  %v533 = vunpack.c.l.b16 %v64
  %v534 = vunpack.c.l.b16 %v65
  %v535 = vunpack.c.l.b16 %v66
  %v536 = vunpack.c.l.b16 %v67
  %v537 = vunpack.c.l.b16 %v68
  %v538 = vunpack.c.l.b16 %v69
  %v539 = vunpack.c.l.b16 %v70
  %v540 = vunpack.c.l.b16 %v71
  %v541 = vunpack.c.l.b16 %v72
  %v542 = vunpack.c.l.b16 %v73
  %v543 = vunpack.c.l.b16 %v74
  %v544 = vunpack.c.l.b16 %v75
  %v545 = vunpack.c.l.b16 %v76
  %v546 = vunpack.c.l.b16 %v77
  %v547 = vunpack.c.l.b16 %v78
  %v548 = vunpack.c.l.b16 %v79
  %v549 = vunpack.c.l.b16 %v80
  %v550 = vunpack.c.l.b16 %v81
  %v551 = vunpack.c.l.b16 %v82
  %v552 = vunpack.c.l.b16 %v83
  %v553 = vunpack.c.l.b16 %v84
  %v554 = vunpack.c.l.b16 %v85
  %v555 = vunpack.c.l.b16 %v86
  %v556 = vunpack.c.l.b16 %v87
  %v557 = vunpack.c.l.b16 %v88
  %v558 = vunpack.c.l.b16 %v89
  %v559 = vunpack.c.l.b16 %v90
  %v560 = vunpack.c.l.b16 %v91
  %v561 = vunpack.c.l.b16 %v92
  %v562 = vunpack.c.l.b16 %v93
  %v563 = vunpack.c.l.b16 %v94
  %v564 = vunpack.c.l.b16 %v95
  %v565 = vunpack.c.l.b16 %v96
  %v566 = vunpack.c.l.b16 %v97
  %v567 = vunpack.c.l.b16 %v98
  %v568 = vunpack.c.l.b16 %v99
  %v569 = vunpack.c.l.b16 %v100
  %v570 = vunpack.c.l.b16 %v101
  %v571 = vunpack.c.l.b16 %v102
  %v572 = vunpack.c.l.b16 %v103
  %v573 = vunpack.c.l.b16 %v104
  %v574 = vunpack.c.l.b16 %v105
  %v575 = vunpack.c.l.b16 %v106
  %v576 = vunpack.c.l.b16 %v107
  %v577 = vunpack.c.l.b16 %v108
  %v578 = vunpack.c.l.b16 %v109
  %v579 = vunpack.c.l.b16 %v110
  %v580 = vunpack.c.l.b16 %v111
  %v581 = vunpack.c.l.b16 %v112
  %v582 = vunpack.c.l.b16 %v113
  %v583 = vunpack.c.l.b16 %v114
  %v584 = vunpack.c.l.b16 %v115
  %v585 = vunpack.c.l.b16 %v116
  %v586 = vunpack.c.l.b16 %v117
  %v587 = vunpack.c.l.b16 %v118
  %v588 = vunpack.c.l.b16 %v119
  %v589 = vunpack.c.l.b16 %v120
  %v590 = vunpack.c.l.b16 %v121
  %v591 = vunpack.c.l.b16 %v122
  %v592 = vunpack.c.l.b16 %v123
  %v593 = vunpack.c.l.b16 %v124
  %v594 = vunpack.c.l.b16 %v125
  %v595 = vunpack.c.l.b16 %v126
  %v596 = vunpack.c.l.b16 %v127
  %v597 = vunpack.c.l.b16 %v128
  %v598 = vunpack.c.l.b16 %v129
  %v599 = vunpack.c.l.b16 %v130
  %v600 = vunpack.c.l.b16 %v131
  %v601 = vunpack.c.l.b16 %v132
  %v602 = vunpack.c.l.b16 %v133
  %v603 = vunpack.c.l.b16 %v134
  %v604 = vunpack.c.l.b16 %v135
  %v605 = vunpack.c.l.b16 %v136
  %v606 = vunpack.c.l.b16 %v137
  %v607 = vunpack.c.l.b16 %v138
  %v608 = vunpack.c.l.b16 %v139
  %v609 = vunpack.c.l.b16 %v140
  %v610 = vunpack.c.l.b16 %v141
  %v611 = vunpack.c.l.b16 %v142
  %v612 = vunpack.c.l.b16 %v143
  %v613 = vunpack.c.l.b16 %v144
  %v614 = vunpack.c.l.b16 %v145
  %v615 = vunpack.c.l.b16 %v146
  %v616 = vunpack.c.l.b16 %v147
  %v617 = vunpack.c.l.b16 %v148
  %v618 = vunpack.c.l.b16 %v149
  %v619 = vunpack.c.l.b16 %v150
  %v620 = vunpack.c.l.b16 %v151
  %v621 = vunpack.c.l.b16 %v152
  %v622 = vunpack.c.l.b16 %v153
  %v623 = vunpack.c.l.b16 %v154
  %v624 = vunpack.c.l.b16 %v155
  %v625 = vunpack.c.l.b16 %v156
  %v626 = vunpack.c.l.b16 %v157
  %v627 = vunpack.c.l.b16 %v158
  %v628 = vunpack.c.l.b16 %v159
  %v629 = vunpack.c.l.b16 %v160
  %v630 = vunpack.c.l.b16 %v161
  %v631 = vunpack.c.l.b16 %v162
  %v632 = vunpack.c.l.b16 %v163
  %v633 = vunpack.c.l.b16 %v164
  %v634 = vunpack.c.l.b16 %v165
  %v635 = vunpack.c.l.b16 %v166
  %v636 = vunpack.c.l.b16 %v167
  %v637 = vunpack.c.l.b16 %v168
  %v638 = vunpack.c.l.b16 %v169
  %v639 = vunpack.c.l.b16 %v170
  %v640 = vunpack.c.l.b16 %v171
  %v641 = vunpack.c.l.b16 %v172
  %v642 = vunpack.c.l.b16 %v173
  %v643 = vunpack.c.l.b16 %v174
  %v644 = vunpack.c.l.b16 %v175
  %v645 = vunpack.c.l.b16 %v176
  %v646 = vunpack.c.l.b16 %v177
  %v647 = vunpack.c.l.b16 %v178
  %v648 = vunpack.c.l.b16 %v179
  %v649 = vunpack.c.l.b16 %v180
  %v650 = vunpack.c.l.b16 %v181
  %v651 = vunpack.c.l.b16 %v182
  %v652 = vunpack.c.l.b16 %v183
  %v653 = vunpack.c.l.b16 %v184
  %v654 = vunpack.c.l.b16 %v185
  %v655 = vunpack.c.l.b16 %v186
  %v656 = vunpack.c.l.b16 %v187
  %v657 = vunpack.c.l.b16 %v188
  %v658 = vunpack.c.l.b16 %v189
  %v659 = vunpack.c.l.b16 %v190
  %v660 = vunpack.c.l.b16 %v191
  %v661 = vunpack.c.l.b16 %v192
  %v662 = vunpack.c.l.b16 %v193
  %v663 = vunpack.c.l.b16 %v194
  %v664 = vunpack.c.l.b16 %v195
  %v665 = vunpack.c.l.b16 %v196
  %v666 = vunpack.c.l.b16 %v197
  %v667 = vunpack.c.l.b16 %v198
  %v668 = vunpack.c.l.b16 %v199
  %v669 = vunpack.c.l.b16 %v200
  %v670 = vunpack.c.l.b16 %v201
  %v671 = vunpack.c.l.b16 %v202
  %v672 = vunpack.c.l.b16 %v203
  %v673 = vunpack.c.l.b16 %v204
  %v674 = vunpack.c.l.b16 %v205
  %v675 = vunpack.c.l.b16 %v206
  %v676 = vunpack.c.l.b16 %v207
  %v677 = vunpack.c.l.b16 %v208
  %v678 = vunpack.c.l.b16 %v209
  %v679 = vunpack.c.l.b16 %v210
  %v680 = vunpack.c.l.b16 %v211
  %v681 = vunpack.c.l.b16 %v212
  %v682 = vunpack.c.l.b16 %v213
  %v683 = vunpack.c.l.b16 %v214
  %v684 = vunpack.c.l.b16 %v215
  %v685 = vunpack.c.l.b16 %v216
  %v686 = vunpack.c.l.b16 %v217
  %v687 = vunpack.c.l.b16 %v218
  %v688 = vunpack.c.l.b16 %v219
  %v689 = vunpack.c.l.b16 %v220
  %v690 = vunpack.c.l.b16 %v221
  %v691 = vunpack.c.l.b16 %v222
  %v692 = vunpack.c.l.b16 %v223
  %v693 = vunpack.c.l.b16 %v224
  %v694 = vpack.c.b16 %v499, %v498
  %v695 = vpack.c.b16 %v501, %v500
  %v696 = vpack.c.b16 %v503, %v502
  %v697 = vpack.c.b16 %v505, %v504
  %v698 = vpack.c.b16 %v507, %v506
  %v699 = vpack.c.b16 %v509, %v508
  %v700 = vpack.c.b16 %v511, %v510
  %v701 = vpack.c.b16 %v513, %v512
  %v702 = vpack.c.b16 %v515, %v514
  %v703 = vpack.c.b16 %v517, %v516
  %v704 = vpack.c.b16 %v519, %v518
  %v705 = vpack.c.b16 %v521, %v520
  %v706 = vpack.c.b16 %v523, %v522
  %v707 = vpack.c.b16 %v525, %v524
  %v708 = vpack.c.b16 %v527, %v526
  %v709 = vpack.c.b16 %v529, %v528
  %v710 = vpack.c.b16 %v531, %v530
  %v711 = vpack.c.b16 %v533, %v532
  %v712 = vpack.c.b16 %v535, %v534
  %v713 = vpack.c.b16 %v537, %v536
  %v714 = vpack.c.b16 %v539, %v538
  %v715 = vpack.c.b16 %v541, %v540
  %v716 = vpack.c.b16 %v543, %v542
  %v717 = vpack.c.b16 %v545, %v544
  %v718 = vpack.c.b16 %v547, %v546
  %v719 = vpack.c.b16 %v549, %v548
  %v720 = vpack.c.b16 %v551, %v550
  %v721 = vpack.c.b16 %v553, %v552
  %v722 = vpack.c.b16 %v555, %v554
  %v723 = vpack.c.b16 %v557, %v556
  %v724 = vpack.c.b16 %v559, %v558
  %v725 = vpack.c.b16 %v561, %v560
  %v726 = vpack.c.b16 %v563, %v562
  %v727 = vpack.c.b16 %v565, %v564
  %v728 = vpack.c.b16 %v567, %v566
  %v729 = vpack.c.b16 %v569, %v568
  %v730 = vpack.c.b16 %v571, %v570
  %v731 = vpack.c.b16 %v573, %v572
  %v732 = vpack.c.b16 %v575, %v574
  %v733 = vpack.c.b16 %v577, %v576
  %v734 = vpack.c.b16 %v579, %v578
  %v735 = vpack.c.b16 %v581, %v580
  %v736 = vpack.c.b16 %v583, %v582
  %v737 = vpack.c.b16 %v585, %v584
  %v738 = vpack.c.b16 %v587, %v586
  %v739 = vpack.c.b16 %v589, %v588
  %v740 = vpack.c.b16 %v591, %v590
  %v741 = vpack.c.b16 %v593, %v592
  %v742 = vpack.c.b16 %v595, %v594
  %v743 = vpack.c.b16 %v597, %v596
  %v744 = vpack.c.b16 %v599, %v598
  %v745 = vpack.c.b16 %v601, %v600
  %v746 = vpack.c.b16 %v603, %v602
  %v747 = vpack.c.b16 %v605, %v604
  %v748 = vpack.c.b16 %v607, %v606
  %v749 = vpack.c.b16 %v609, %v608
  %v750 = vpack.c.b16 %v611, %v610
  %v751 = vpack.c.b16 %v613, %v612
  %v752 = vpack.c.b16 %v615, %v614
  %v753 = vpack.c.b16 %v617, %v616
  %v754 = vpack.c.b16 %v619, %v618
  %v755 = vpack.c.b16 %v621, %v620
  %v756 = vpack.c.b16 %v623, %v622
  %v757 = vpack.c.b16 %v625, %v624
  %v758 = vpack.c.b16 %v627, %v626
  %v759 = vpack.c.b16 %v629, %v628
  %v760 = vpack.c.b16 %v631, %v630
  %v761 = vpack.c.b16 %v633, %v632
  %v762 = vpack.c.b16 %v635, %v634
  %v763 = vpack.c.b16 %v637, %v636
  %v764 = vpack.c.b16 %v639, %v638
  %v765 = vpack.c.b16 %v641, %v640
  %v766 = vpack.c.b16 %v643, %v642
  %v767 = vpack.c.b16 %v645, %v644
  %v768 = vpack.c.b16 %v647, %v646
  %v769 = vpack.c.b16 %v649, %v648
  %v770 = vpack.c.b16 %v651, %v650
  %v771 = vpack.c.b16 %v653, %v652
  %v772 = vpack.c.b16 %v655, %v654
  %v773 = vpack.c.b16 %v657, %v656
  %v774 = vpack.c.b16 %v659, %v658
  %v775 = vpack.c.b16 %v661, %v660
  %v776 = vpack.c.b16 %v663, %v662
  %v777 = vpack.c.b16 %v665, %v664
  %v778 = vpack.c.b16 %v667, %v666
  %v779 = vpack.c.b16 %v669, %v668
  %v780 = vpack.c.b16 %v671, %v670
  %v781 = vpack.c.b16 %v673, %v672
  %v782 = vpack.c.b16 %v675, %v674
  %v783 = vpack.c.b16 %v677, %v676
  %v784 = vpack.c.b16 %v679, %v678
  %v785 = vpack.c.b16 %v681, %v680
  %v786 = vpack.c.b16 %v683, %v682
  %v787 = vpack.c.b16 %v685, %v684
  %v788 = vpack.c.b16 %v687, %v686
  %v789 = vpack.c.b16 %v689, %v688
  %v790 = vpack.c.b16 %v691, %v690
  %v791 = vpack.c.b16 %v693, %v692
  %vm890 = vcmask 261120
  %v892 = vsel %vm890, %v289, 0
  %894 = vmatprep.subr.bf16.mxu0 0
  %895 = vmatpush1.bf16.msra.mxu0 %v694
  %896 = vmatprep.subr.bf16.mxu0 0
  %897 = vmatpush1.bf16.msra.mxu0 %v695
  %898 = vmatprep.subr.bf16.mxu0 0
  %899 = vmatpush1.bf16.msra.mxu0 %v696
  %900 = vmatprep.subr.bf16.mxu0 0
  %901 = vmatpush1.bf16.msra.mxu0 %v697
  %902 = vmatprep.subr.bf16.mxu0 0
  %903 = vmatpush1.bf16.msra.mxu0 %v698
  %904 = vmatprep.subr.bf16.mxu0 0
  %905 = vmatpush1.bf16.msra.mxu0 %v699
  %906 = vmatprep.subr.bf16.mxu0 0
  %907 = vmatpush1.bf16.msra.mxu0 %v700
  %908 = vmatprep.subr.bf16.mxu0 0
  %909 = vmatpush1.bf16.msra.mxu0 %v701
  %910 = vmatprep.subr.bf16.mxu0 0
  %911 = vmatpush1.bf16.msra.mxu0 %v702
  %912 = vmatprep.subr.bf16.mxu0 0
  %913 = vmatpush1.bf16.msra.mxu0 %v703
  %914 = vmatprep.subr.bf16.mxu0 0
  %915 = vmatpush1.bf16.msra.mxu0 %v704
  %916 = vmatprep.subr.bf16.mxu0 0
  %917 = vmatpush1.bf16.msra.mxu0 %v705
  %918 = vmatprep.subr.bf16.mxu0 0
  %919 = vmatpush1.bf16.msra.mxu0 %v706
  %920 = vmatprep.subr.bf16.mxu0 0
  %921 = vmatpush1.bf16.msra.mxu0 %v707
  %922 = vmatprep.subr.bf16.mxu0 0
  %923 = vmatpush1.bf16.msra.mxu0 %v708
  %924 = vmatprep.subr.bf16.mxu0 0
  %925 = vmatpush1.bf16.msra.mxu0 %v709
  %926 = vmatprep.mubr.bf16.mxu0 %v278
  %927 = vmatmul.mubr.bf16.gmra.mrb[0].mxu0 %v277
  %v928 = vpop.f32.mrb[0].mxu0
  %v929 = vadd.f32 %v230, %v928
  %v930 = vpop.f32.mrb[0].mxu0
  %v931 = vpop.f32.mrb[0].mxu0
  %v932 = vadd.f32 %v235, %v931
  %v933 = vpop.f32.mrb[0].mxu0
  %934 = vdwg.mxu0
  %935 = vmatprep.subr.bf16.mxu0 0
  %936 = vmatpush1.bf16.msra.mxu0 %v710
  %937 = vmatprep.subr.bf16.mxu0 0
  %938 = vmatpush1.bf16.msra.mxu0 %v711
  %939 = vmatprep.subr.bf16.mxu0 0
  %940 = vmatpush1.bf16.msra.mxu0 %v712
  %941 = vmatprep.subr.bf16.mxu0 0
  %942 = vmatpush1.bf16.msra.mxu0 %v713
  %943 = vmatprep.subr.bf16.mxu0 0
  %944 = vmatpush1.bf16.msra.mxu0 %v714
  %945 = vmatprep.subr.bf16.mxu0 0
  %946 = vmatpush1.bf16.msra.mxu0 %v715
  %947 = vmatprep.subr.bf16.mxu0 0
  %948 = vmatpush1.bf16.msra.mxu0 %v716
  %949 = vmatprep.subr.bf16.mxu0 0
  %950 = vmatpush1.bf16.msra.mxu0 %v717
  %951 = vmatprep.subr.bf16.mxu0 0
  %952 = vmatpush1.bf16.msra.mxu0 %v718
  %953 = vmatprep.subr.bf16.mxu0 0
  %954 = vmatpush1.bf16.msra.mxu0 %v719
  %955 = vmatprep.subr.bf16.mxu0 0
  %956 = vmatpush1.bf16.msra.mxu0 %v720
  %957 = vmatprep.subr.bf16.mxu0 0
  %958 = vmatpush1.bf16.msra.mxu0 %v721
  %959 = vmatprep.subr.bf16.mxu0 0
  %960 = vmatpush1.bf16.msra.mxu0 %v722
  %961 = vmatprep.subr.bf16.mxu0 0
  %962 = vmatpush1.bf16.msra.mxu0 %v723
  %963 = vmatprep.subr.bf16.mxu0 0
  %964 = vmatpush1.bf16.msra.mxu0 %v724
  %965 = vmatprep.subr.bf16.mxu0 0
  %966 = vmatpush1.bf16.msra.mxu0 %v725
  %967 = vmatprep.mubr.bf16.mxu0 %v280
  %968 = vmatmul.mubr.bf16.gmra.mrb[0].mxu0 %v279
  %v969 = vpop.f32.mrb[0].mxu0
  %v970 = vadd.f32 %v929, %v969
  %v971 = vpop.f32.mrb[0].mxu0
  %v972 = vpop.f32.mrb[0].mxu0
  %v973 = vadd.f32 %v932, %v972
  %v974 = vpop.f32.mrb[0].mxu0
  %975 = vdwg.mxu0
  %976 = vmatprep.subr.bf16.mxu0 0
  %977 = vmatpush1.bf16.msra.mxu0 %v726
  %978 = vmatprep.subr.bf16.mxu0 0
  %979 = vmatpush1.bf16.msra.mxu0 %v727
  %980 = vmatprep.subr.bf16.mxu0 0
  %981 = vmatpush1.bf16.msra.mxu0 %v728
  %982 = vmatprep.subr.bf16.mxu0 0
  %983 = vmatpush1.bf16.msra.mxu0 %v729
  %984 = vmatprep.subr.bf16.mxu0 0
  %985 = vmatpush1.bf16.msra.mxu0 %v730
  %986 = vmatprep.subr.bf16.mxu0 0
  %987 = vmatpush1.bf16.msra.mxu0 %v731
  %988 = vmatprep.subr.bf16.mxu0 0
  %989 = vmatpush1.bf16.msra.mxu0 %v732
  %990 = vmatprep.subr.bf16.mxu0 0
  %991 = vmatpush1.bf16.msra.mxu0 %v733
  %992 = vmatprep.subr.bf16.mxu0 0
  %993 = vmatpush1.bf16.msra.mxu0 %v734
  %994 = vmatprep.subr.bf16.mxu0 0
  %995 = vmatpush1.bf16.msra.mxu0 %v735
  %996 = vmatprep.subr.bf16.mxu0 0
  %997 = vmatpush1.bf16.msra.mxu0 %v736
  %998 = vmatprep.subr.bf16.mxu0 0
  %999 = vmatpush1.bf16.msra.mxu0 %v737
  %1000 = vmatprep.subr.bf16.mxu0 0
  %1001 = vmatpush1.bf16.msra.mxu0 %v738
  %1002 = vmatprep.subr.bf16.mxu0 0
  %1003 = vmatpush1.bf16.msra.mxu0 %v739
  %1004 = vmatprep.subr.bf16.mxu0 0
  %1005 = vmatpush1.bf16.msra.mxu0 %v740
  %1006 = vmatprep.subr.bf16.mxu0 0
  %1007 = vmatpush1.bf16.msra.mxu0 %v741
  %1008 = vmatprep.mubr.bf16.mxu0 %v282
  %1009 = vmatmul.mubr.bf16.gmra.mrb[0].mxu0 %v281
  %v1010 = vpop.f32.mrb[0].mxu0
  %v1011 = vadd.f32 %v970, %v1010
  %v1012 = vpop.f32.mrb[0].mxu0
  %v1013 = vpop.f32.mrb[0].mxu0
  %v1014 = vadd.f32 %v973, %v1013
  %v1015 = vpop.f32.mrb[0].mxu0
  %1016 = vdwg.mxu0
  %1017 = vmatprep.subr.bf16.mxu0 0
  %1018 = vmatpush1.bf16.msra.mxu0 %v742
  %1019 = vmatprep.subr.bf16.mxu0 0
  %1020 = vmatpush1.bf16.msra.mxu0 %v743
  %1021 = vmatprep.subr.bf16.mxu0 0
  %1022 = vmatpush1.bf16.msra.mxu0 %v744
  %1023 = vmatprep.subr.bf16.mxu0 0
  %1024 = vmatpush1.bf16.msra.mxu0 %v745
  %1025 = vmatprep.subr.bf16.mxu0 0
  %1026 = vmatpush1.bf16.msra.mxu0 %v746
  %1027 = vmatprep.subr.bf16.mxu0 0
  %1028 = vmatpush1.bf16.msra.mxu0 %v747
  %1029 = vmatprep.subr.bf16.mxu0 0
  %1030 = vmatpush1.bf16.msra.mxu0 %v748
  %1031 = vmatprep.subr.bf16.mxu0 0
  %1032 = vmatpush1.bf16.msra.mxu0 %v749
  %1033 = vmatprep.subr.bf16.mxu0 0
  %1034 = vmatpush1.bf16.msra.mxu0 %v750
  %1035 = vmatprep.subr.bf16.mxu0 0
  %1036 = vmatpush1.bf16.msra.mxu0 %v751
  %1037 = vmatprep.subr.bf16.mxu0 0
  %1038 = vmatpush1.bf16.msra.mxu0 %v752
  %1039 = vmatprep.subr.bf16.mxu0 0
  %1040 = vmatpush1.bf16.msra.mxu0 %v753
  %1041 = vmatprep.subr.bf16.mxu0 0
  %1042 = vmatpush1.bf16.msra.mxu0 %v754
  %1043 = vmatprep.subr.bf16.mxu0 0
  %1044 = vmatpush1.bf16.msra.mxu0 %v755
  %1045 = vmatprep.subr.bf16.mxu0 0
  %1046 = vmatpush1.bf16.msra.mxu0 %v756
  %1047 = vmatprep.subr.bf16.mxu0 0
  %1048 = vmatpush1.bf16.msra.mxu0 %v757
  %1049 = vmatprep.mubr.bf16.mxu0 %v284
  %1050 = vmatmul.mubr.bf16.gmra.mrb[0].mxu0 %v283
  %v1051 = vpop.f32.mrb[0].mxu0
  %v1052 = vadd.f32 %v1011, %v1051
  %v1053 = vpop.f32.mrb[0].mxu0
  %v1054 = vpop.f32.mrb[0].mxu0
  %v1055 = vadd.f32 %v1014, %v1054
  %v1056 = vpop.f32.mrb[0].mxu0
  %1057 = vdwg.mxu0
  %1058 = vmatprep.subr.bf16.mxu0 0
  %1059 = vmatpush1.bf16.msra.mxu0 %v758
  %1060 = vmatprep.subr.bf16.mxu0 0
  %1061 = vmatpush1.bf16.msra.mxu0 %v759
  %1062 = vmatprep.subr.bf16.mxu0 0
  %1063 = vmatpush1.bf16.msra.mxu0 %v760
  %1064 = vmatprep.subr.bf16.mxu0 0
  %1065 = vmatpush1.bf16.msra.mxu0 %v761
  %1066 = vmatprep.subr.bf16.mxu0 0
  %1067 = vmatpush1.bf16.msra.mxu0 %v762
  %1068 = vmatprep.subr.bf16.mxu0 0
  %1069 = vmatpush1.bf16.msra.mxu0 %v763
  %1070 = vmatprep.subr.bf16.mxu0 0
  %1071 = vmatpush1.bf16.msra.mxu0 %v764
  %1072 = vmatprep.subr.bf16.mxu0 0
  %1073 = vmatpush1.bf16.msra.mxu0 %v765
  %1074 = vmatprep.subr.bf16.mxu0 0
  %1075 = vmatpush1.bf16.msra.mxu0 %v766
  %1076 = vmatprep.subr.bf16.mxu0 0
  %1077 = vmatpush1.bf16.msra.mxu0 %v767
  %1078 = vmatprep.subr.bf16.mxu0 0
  %1079 = vmatpush1.bf16.msra.mxu0 %v768
  %1080 = vmatprep.subr.bf16.mxu0 0
  %1081 = vmatpush1.bf16.msra.mxu0 %v769
  %1082 = vmatprep.subr.bf16.mxu0 0
  %1083 = vmatpush1.bf16.msra.mxu0 %v770
  %1084 = vmatprep.subr.bf16.mxu0 0
  %1085 = vmatpush1.bf16.msra.mxu0 %v771
  %1086 = vmatprep.subr.bf16.mxu0 0
  %1087 = vmatpush1.bf16.msra.mxu0 %v772
  %1088 = vmatprep.subr.bf16.mxu0 0
  %1089 = vmatpush1.bf16.msra.mxu0 %v773
  %1090 = vmatprep.mubr.bf16.mxu0 %v286
  %1091 = vmatmul.mubr.bf16.gmra.mrb[0].mxu0 %v285
  %v1092 = vpop.f32.mrb[0].mxu0
  %v1093 = vadd.f32 %v1052, %v1092
  %v1094 = vpop.f32.mrb[0].mxu0
  %v1095 = vpop.f32.mrb[0].mxu0
  %v1096 = vadd.f32 %v1055, %v1095
  %v1097 = vpop.f32.mrb[0].mxu0
  %1098 = vdwg.mxu0
  %1099 = vmatprep.subr.bf16.mxu0 0
  %1100 = vmatpush1.bf16.msra.mxu0 %v774
  %1101 = vmatprep.subr.bf16.mxu0 0
  %1102 = vmatpush1.bf16.msra.mxu0 %v775
  %1103 = vmatprep.subr.bf16.mxu0 0
  %1104 = vmatpush1.bf16.msra.mxu0 %v776
  %1105 = vmatprep.subr.bf16.mxu0 0
  %1106 = vmatpush1.bf16.msra.mxu0 %v777
  %1107 = vmatprep.subr.bf16.mxu0 0
  %1108 = vmatpush1.bf16.msra.mxu0 %v778
  %1109 = vmatprep.subr.bf16.mxu0 0
  %1110 = vmatpush1.bf16.msra.mxu0 %v779
  %1111 = vmatprep.subr.bf16.mxu0 0
  %1112 = vmatpush1.bf16.msra.mxu0 %v780
  %1113 = vmatprep.subr.bf16.mxu0 0
  %1114 = vmatpush1.bf16.msra.mxu0 %v781
  %1115 = vmatprep.subr.bf16.mxu0 0
  %1116 = vmatpush1.bf16.msra.mxu0 %v782
  %1117 = vmatprep.subr.bf16.mxu0 0
  %1118 = vmatpush1.bf16.msra.mxu0 %v783
  %1119 = vmatprep.subr.bf16.mxu0 0
  %1120 = vmatpush1.bf16.msra.mxu0 %v784
  %1121 = vmatprep.subr.bf16.mxu0 0
  %1122 = vmatpush1.bf16.msra.mxu0 %v785
  %1123 = vmatprep.subr.bf16.mxu0 0
  %1124 = vmatpush1.bf16.msra.mxu0 %v786
  %1125 = vmatprep.subr.bf16.mxu0 0
  %1126 = vmatpush1.bf16.msra.mxu0 %v787
  %1127 = vmatprep.subr.bf16.mxu0 0
  %1128 = vmatpush1.bf16.msra.mxu0 %v788
  %1129 = vmatprep.subr.bf16.mxu0 0
  %1130 = vmatpush1.bf16.msra.mxu0 %v789
  %1131 = vmatprep.mubr.bf16.mxu0 %v288
  %1132 = vmatmul.mubr.bf16.gmra.mrb[0].mxu0 %v287
  %v1133 = vpop.f32.mrb[0].mxu0
  %v1134 = vadd.f32 %v1093, %v1133
  %v1135 = vpop.f32.mrb[0].mxu0
  %v1136 = vpop.f32.mrb[0].mxu0
  %v1137 = vadd.f32 %v1096, %v1136
  %v1138 = vpop.f32.mrb[0].mxu0
  %1139 = vdwg.mxu0
  %1140 = vmatprep.subr.bf16.mxu0 0
  %1141 = vmatpush1.bf16.msra.mxu0 %v790
  %1142 = vmatprep.subr.bf16.mxu0 0
  %1143 = vmatpush1.bf16.msra.mxu0 %v791
  %1144 = vmatprep.subr.bf16.mxu0 0
  %1145 = vmatpush1.bf16.msra.mxu0 0
  %1146 = vmatprep.subr.bf16.mxu0 0
  %1147 = vmatpush1.bf16.msra.mxu0 0
  %1148 = vmatprep.subr.bf16.mxu0 0
  %1149 = vmatpush1.bf16.msra.mxu0 0
  %1150 = vmatprep.subr.bf16.mxu0 0
  %1151 = vmatpush1.bf16.msra.mxu0 0
  %1152 = vmatprep.subr.bf16.mxu0 0
  %1153 = vmatpush1.bf16.msra.mxu0 0
  %1154 = vmatprep.subr.bf16.mxu0 0
  %1155 = vmatpush1.bf16.msra.mxu0 0
  %1156 = vmatprep.subr.bf16.mxu0 0
  %1157 = vmatpush1.bf16.msra.mxu0 0
  %1158 = vmatprep.subr.bf16.mxu0 0
  %1159 = vmatpush1.bf16.msra.mxu0 0
  %1160 = vmatprep.subr.bf16.mxu0 0
  %1161 = vmatpush1.bf16.msra.mxu0 0
  %1162 = vmatprep.subr.bf16.mxu0 0
  %1163 = vmatpush1.bf16.msra.mxu0 0
  %1164 = vmatprep.subr.bf16.mxu0 0
  %1165 = vmatpush1.bf16.msra.mxu0 0
  %1166 = vmatprep.subr.bf16.mxu0 0
  %1167 = vmatpush1.bf16.msra.mxu0 0
  %1168 = vmatprep.subr.bf16.mxu0 0
  %1169 = vmatpush1.bf16.msra.mxu0 0
  %1170 = vmatprep.subr.bf16.mxu0 0
  %1171 = vmatpush1.bf16.msra.mxu0 0
  %1172 = vmatprep.mubr.bf16.mxu0 0
  %1173 = vmatmul.mubr.bf16.gmra.mrb[0].mxu0 %v892
  %v1174 = vpop.f32.mrb[0].mxu0
  %v1175 = vadd.f32 %v1134, %v1174
  %v1176 = vpop.f32.mrb[0].mxu0
  %v1177 = vpop.f32.mrb[0].mxu0
  %v1178 = vadd.f32 %v1137, %v1177
  %v1179 = vpop.f32.mrb[0].mxu0
  %1180 = vdwg.mxu0
  %1181 = vst [vmem:[%s3] sm:$0xff] %v1175
  %1182 = vst [vmem:[%s3 + $0x8] sm:$0x3] %v1178
  // Predicated region
  $region14: #{convolution_network.9} parent=0 // pred_check
    _
  $region15: #{convolution_network.9} parent=0 // pred_check_branch
    %1184 = sbr.rel (0) target = $region17
  $region16: #{convolution_network.9} parent=0 // pred_region
    _
  $region17: #{convolution_network.9} parent=0 // pred_fallthru
    _
  // Predicated region
  $region18: #{convolution_network.9} parent=0 // pred_check
    _
  $region19: #{convolution_network.9} parent=0 // pred_check_branch
    %1186 = sbr.rel (0) target = $region21
  $region20: #{convolution_network.9} parent=0 // pred_region
    _
  $region21: #{convolution_network.9} parent=0 // pred_fallthru
    _

</llo_original>
